<compile_context>
chip_gen: v7x
topology: tpu7x:2x2x1
jax: 0.10.0
libtpu: 0.0.40
codegen_flags: <defaults>
</compile_context>

<pallas_src>
import functools
import math

import jax
import jax.numpy as jnp
from jax.experimental import pallas as pl
from jax.experimental.pallas import tpu as pltpu

COMPUTE_DTYPE = jnp.bfloat16   # MXU path; f32 accumulation everywhere


# ----------------------------------------------------------------------------
# helpers
# ----------------------------------------------------------------------------
def _pick_tile(dim, target, align):
    """Full extent if small; else the largest `align`-multiple <= target that
    divides `dim`; fall back to the full extent (always legal)."""
    if dim <= target:
        return dim
    t = (target // align) * align
    while t >= align:
        if dim % t == 0:
            return t
        t -= align
    return dim


def _bytes(shape, dtype):
    return math.prod(shape) * jnp.dtype(dtype).itemsize


def _mosaic_params(semantics, block_bytes, scratch_bytes=0):
    # computed VMEM bound with headroom (in/out blocks are double-buffered);
    # clamped so it stays well inside v7x's 64 MiB per-core VMEM.
    limit = int(min(max(4 * block_bytes + scratch_bytes + (4 << 20), 16 << 20),
                    48 << 20))
    return pltpu.CompilerParams(dimension_semantics=semantics,
                                vmem_limit_bytes=limit)


# ----------------------------------------------------------------------------
# Generic fused, tiled matmul: out = [residual +] [gelu]( [LN](x) @ w + b )
# ----------------------------------------------------------------------------
def _fmm_kernel(x_ref, w_ref, b_ref, *rest, has_ln, has_res, activation, eps,
                single_k):
    idx = 0
    if has_ln:
        g_ref, beta_ref = rest[idx], rest[idx + 1]
        idx += 2
    if has_res:
        r_ref = rest[idx]
        idx += 1
    o_ref = rest[idx]
    acc_ref = None if single_k else rest[idx + 1]

    x = x_ref[...]
    if has_ln:
        # LN statistics in f32 (v5e has no bf16 VPU/EUP); cast back for MXU.
        xf = x.astype(jnp.float32)
        mu = jnp.mean(xf, axis=-1, keepdims=True)
        xc = xf - mu
        var = jnp.mean(xc * xc, axis=-1, keepdims=True)
        xf = xc * jax.lax.rsqrt(var + eps)
        xf = xf * g_ref[...].astype(jnp.float32) + beta_ref[...].astype(jnp.float32)
        x = xf.astype(x_ref.dtype)

    part = jnp.dot(x, w_ref[...], preferred_element_type=jnp.float32)

    def epilogue(acc):
        y = acc + b_ref[...].astype(jnp.float32)
        if activation == "gelu":
            # exact (erf) GELU, matching timm ViT
            y = 0.5 * y * (1.0 + jax.lax.erf(y * (1.0 / math.sqrt(2.0))))
        if has_res:
            y = y + r_ref[...].astype(jnp.float32)
        o_ref[...] = y.astype(o_ref.dtype)

    if single_k:
        epilogue(part)                  # gk==1: no scratch, no init/finalize
    else:
        k = pl.program_id(2)

        @pl.when(k == 0)
        def _init():
            acc_ref[...] = jnp.zeros_like(acc_ref)

        acc_ref[...] += part

        @pl.when(k == pl.num_programs(2) - 1)
        def _finish():
            epilogue(acc_ref[...])


def fused_matmul(x, w, b, *, ln_gamma=None, ln_beta=None, residual=None,
                 activation=None, out_dtype=None, eps=1e-6,
                 tm_target=512, tn_target=1024, tk_target=512):
    """Tiled (M,K)@(K,N)+b with optional fused LN prologue / GELU / residual."""
    M, K = x.shape
    K2, N = w.shape
    assert K == K2
    out_dtype = x.dtype if out_dtype is None else out_dtype
    has_ln = ln_gamma is not None
    has_res = residual is not None

    tm = _pick_tile(M, tm_target, 16)          # bf16 packs 16 rows per vreg
    tn = _pick_tile(N, tn_target, 128)         # lane-dense, MXU-aligned
    tk = K if has_ln else _pick_tile(K, tk_target, 256)   # LN needs full rows
    gm, gn, gk = M // tm, N // tn, K // tk
    single_k = gk == 1

    if single_k:
        grid = (gm, gn)
        x_map = lambda i, j: (i, 0)
        w_map = lambda i, j: (0, j)
        n_map = lambda i, j: (0, j)
        o_map = lambda i, j: (i, j)
        k_map = lambda i, j: (0, 0)
        semantics = ("parallel", "parallel")
        scratch = []
        scratch_bytes = 0
    else:
        grid = (gm, gn, gk)
        x_map = lambda i, j, k: (i, k)
        w_map = lambda i, j, k: (k, j)
        n_map = lambda i, j, k: (0, j)
        o_map = lambda i, j, k: (i, j)
        k_map = lambda i, j, k: (0, k)
        semantics = ("parallel", "parallel", "arbitrary")
        scratch = [pltpu.VMEM((tm, tn), jnp.float32)]
        scratch_bytes = _bytes((tm, tn), jnp.float32)

    in_specs = [pl.BlockSpec((tm, tk), x_map),
                pl.BlockSpec((tk, tn), w_map),
                pl.BlockSpec((1, tn), n_map)]
    args = [x, w, b.reshape(1, N)]
    block_bytes = (_bytes((tm, tk), x.dtype) + _bytes((tk, tn), w.dtype)
                   + _bytes((1, tn), jnp.float32) + _bytes((tm, tn), out_dtype))
    if has_ln:
        # TODO(synk): if the LN prologue is VALU-bound on v5e, cache LN(x) in a
        # (tm, K) scratch behind pl.when(j == 0) and mark j "arbitrary".
        in_specs += [pl.BlockSpec((1, tk), k_map), pl.BlockSpec((1, tk), k_map)]
        args += [ln_gamma.reshape(1, K), ln_beta.reshape(1, K)]
        block_bytes += 2 * _bytes((1, tk), jnp.float32)
    if has_res:
        in_specs.append(pl.BlockSpec((tm, tn), o_map))
        args.append(residual)
        block_bytes += _bytes((tm, tn), residual.dtype)

    cost = pl.CostEstimate(
        flops=2 * M * N * K,
        transcendentals=M * N if activation == "gelu" else 0,
        bytes_accessed=2 * (M * K + K * N + M * N + (M * N if has_res else 0)))

    return pl.pallas_call(
        functools.partial(_fmm_kernel, has_ln=has_ln, has_res=has_res,
                          activation=activation, eps=eps, single_k=single_k),
        grid=grid,
        in_specs=in_specs,
        out_specs=pl.BlockSpec((tm, tn), o_map),
        out_shape=jax.ShapeDtypeStruct((M, N), out_dtype),
        scratch_shapes=scratch,
        compiler_params=_mosaic_params(semantics, block_bytes, scratch_bytes),
        cost_estimate=cost,
    )(*args)


# ----------------------------------------------------------------------------
# QKV projection: out[3*heads, M, Dh] = LN(x) @ Wqkv(head-major) + b
# LN(x) is computed once per row-tile (c == 0) and cached in a VMEM scratch.
# ----------------------------------------------------------------------------
def _qkv_kernel(x_ref, g_ref, beta_ref, w_ref, b_ref, o_ref, xln_ref, *, eps):
    c = pl.program_id(1)

    @pl.when(c == 0)
    def _ln():
        xf = x_ref[...].astype(jnp.float32)
        mu = jnp.mean(xf, axis=-1, keepdims=True)
        xc = xf - mu
        var = jnp.mean(xc * xc, axis=-1, keepdims=True)
        xf = xc * jax.lax.rsqrt(var + eps)
        xf = xf * g_ref[...].astype(jnp.float32) + beta_ref[...].astype(jnp.float32)
        xln_ref[...] = xf.astype(xln_ref.dtype)

    y = jnp.dot(xln_ref[...], w_ref[0], preferred_element_type=jnp.float32)
    o_ref[0] = (y + b_ref[0].astype(jnp.float32)).astype(o_ref.dtype)


def qkv_projection(x, gamma, beta, w_hm, b_hm, *, eps=1e-6, tm_target=512):
    M, K = x.shape
    C, K2, dh = w_hm.shape       # C = 3*heads
    assert K == K2
    tm = _pick_tile(M, tm_target, 16)
    gm = M // tm

    block_bytes = (_bytes((tm, K), x.dtype) + 2 * _bytes((1, K), jnp.float32)
                   + _bytes((1, K, dh), w_hm.dtype)
                   + _bytes((1, 1, dh), jnp.float32)
                   + _bytes((1, tm, dh), x.dtype))
    cost = pl.CostEstimate(flops=2 * M * K * C * dh, transcendentals=0,
                           bytes_accessed=2 * (M * K + C * K * dh + C * M * dh))

    return pl.pallas_call(
        functools.partial(_qkv_kernel, eps=eps),
        grid=(gm, C),
        in_specs=[
            pl.BlockSpec((tm, K), lambda i, c: (i, 0)),
            pl.BlockSpec((1, K), lambda i, c: (0, 0)),
            pl.BlockSpec((1, K), lambda i, c: (0, 0)),
            pl.BlockSpec((1, K, dh), lambda i, c: (c, 0, 0)),
            pl.BlockSpec((1, 1, dh), lambda i, c: (c, 0, 0)),
        ],
        out_specs=pl.BlockSpec((1, tm, dh), lambda i, c: (c, i, 0)),
        out_shape=jax.ShapeDtypeStruct((C, M, dh), x.dtype),
        scratch_shapes=[pltpu.VMEM((tm, K), x.dtype)],
        compiler_params=_mosaic_params(("parallel", "arbitrary"), block_bytes,
                                       _bytes((tm, K), x.dtype)),
        cost_estimate=cost,
    )(x, gamma.reshape(1, K), beta.reshape(1, K), w_hm, b_hm)


# ----------------------------------------------------------------------------
# Attention: grid = (batch, heads), one head per step, per-head (8,128)-legal
# blocks thanks to the head-major qkv layout; scale is pre-folded into q.
# ----------------------------------------------------------------------------
def _attn_kernel(q_ref, k_ref, v_ref, o_ref, *, s_valid):
    q = q_ref[0]                               # (S_pad, Dh), bf16
    k = k_ref[0]
    v = v_ref[0]
    s_pad = q.shape[0]
    # q @ k^T via dot_general (contract on Dh) -> no materialized transpose
    s = jax.lax.dot_general(q, k, (((1,), (1,)), ((), ())),
                            preferred_element_type=jnp.float32)
    kmask = jax.lax.broadcasted_iota(jnp.int32, (1, s_pad), 1) < s_valid
    s = jnp.where(kmask, s, -1e30)
    m = jnp.max(s, axis=-1, keepdims=True)
    p = jnp.exp(s - m)
    denom = jnp.sum(p, axis=-1, keepdims=True)
    p = p * pl.reciprocal(denom, approx=True)  # EUP, ~free
    o = jnp.dot(p.astype(v.dtype), v, preferred_element_type=jnp.float32)
    o_ref[0] = o.astype(o_ref.dtype)           # direct store, no concatenate


def attention(qkv_hm, *, batch, heads, s_pad, s_valid):
    C, M, dh = qkv_hm.shape
    assert C == 3 * heads and M == batch * s_pad
    q_spec = pl.BlockSpec((1, s_pad, dh), lambda b, h: (h, b, 0))
    k_spec = pl.BlockSpec((1, s_pad, dh), lambda b, h: (heads + h, b, 0))
    v_spec = pl.BlockSpec((1, s_pad, dh), lambda b, h: (2 * heads + h, b, 0))
    elems = batch * heads * s_pad * dh
    return pl.pallas_call(
        functools.partial(_attn_kernel, s_valid=s_valid),
        grid=(batch, heads),
        in_specs=[q_spec, k_spec, v_spec],
        out_specs=pl.BlockSpec((1, s_pad, dh), lambda b, h: (h, b, 0)),
        out_shape=jax.ShapeDtypeStruct((heads, M, dh), qkv_hm.dtype),
        compiler_params=_mosaic_params(
            ("parallel", "parallel"),
            4 * _bytes((1, s_pad, dh), qkv_hm.dtype)),
        cost_estimate=pl.CostEstimate(
            flops=4 * batch * heads * s_pad * s_pad * dh,
            transcendentals=batch * heads * s_pad * s_pad,
            bytes_accessed=8 * elems),
    )(qkv_hm, qkv_hm, qkv_hm)


# ----------------------------------------------------------------------------
# Output projection with head reduction: out = concat_h(a[h]) @ W + b + res,
# heads as the innermost ("arbitrary") grid axis -> no host-side transpose.
# ----------------------------------------------------------------------------
def _headmerge_kernel(a_ref, w_ref, b_ref, r_ref, o_ref, acc_ref):
    h = pl.program_id(2)

    @pl.when(h == 0)
    def _init():
        acc_ref[...] = jnp.zeros_like(acc_ref)

    acc_ref[...] += jnp.dot(a_ref[0], w_ref[0], preferred_element_type=jnp.float32)

    @pl.when(h == pl.num_programs(2) - 1)
    def _finish():
        y = (acc_ref[...] + b_ref[...].astype(jnp.float32)
             + r_ref[...].astype(jnp.float32))
        o_ref[...] = y.astype(o_ref.dtype)


def headmerge_matmul(a, w_hm, b, residual, *, out_dtype=None,
                     tm_target=512, tn_target=1024):
    H, M, dh = a.shape
    H2, dh2, N = w_hm.shape
    assert H == H2 and dh == dh2
    out_dtype = residual.dtype if out_dtype is None else out_dtype
    tm = _pick_tile(M, tm_target, 16)
    tn = _pick_tile(N, tn_target, 128)
    grid = (M // tm, N // tn, H)

    block_bytes = (_bytes((1, tm, dh), a.dtype) + _bytes((1, dh, tn), w_hm.dtype)
                   + _bytes((1, tn), jnp.float32)
                   + _bytes((tm, tn), residual.dtype)
                   + _bytes((tm, tn), out_dtype))
    cost = pl.CostEstimate(flops=2 * M * N * H * dh, transcendentals=0,
                           bytes_accessed=2 * (H * M * dh + H * dh * N + 2 * M * N))

    return pl.pallas_call(
        _headmerge_kernel,
        grid=grid,
        in_specs=[
            pl.BlockSpec((1, tm, dh), lambda i, j, h: (h, i, 0)),
            pl.BlockSpec((1, dh, tn), lambda i, j, h: (h, 0, j)),
            pl.BlockSpec((1, tn), lambda i, j, h: (0, j)),
            pl.BlockSpec((tm, tn), lambda i, j, h: (i, j)),
        ],
        out_specs=pl.BlockSpec((tm, tn), lambda i, j, h: (i, j)),
        out_shape=jax.ShapeDtypeStruct((M, N), out_dtype),
        scratch_shapes=[pltpu.VMEM((tm, tn), jnp.float32)],
        compiler_params=_mosaic_params(("parallel", "parallel", "arbitrary"),
                                       block_bytes,
                                       _bytes((tm, tn), jnp.float32)),
        cost_estimate=cost,
    )(a, w_hm, b.reshape(1, N), residual)


# ----------------------------------------------------------------------------
# Standalone LayerNorm (only used on the B cls rows at the end)
# ----------------------------------------------------------------------------
def _layernorm_kernel(x_ref, g_ref, b_ref, o_ref, *, eps):
    x = x_ref[...].astype(jnp.float32)
    mu = jnp.mean(x, axis=-1, keepdims=True)
    xc = x - mu
    var = jnp.mean(xc * xc, axis=-1, keepdims=True)
    y = xc * jax.lax.rsqrt(var + eps)
    o_ref[...] = (y * g_ref[...] + b_ref[...]).astype(o_ref.dtype)


def layernorm(x, gamma, beta, eps=1e-6, out_dtype=jnp.float32):
    M, D = x.shape
    return pl.pallas_call(
        functools.partial(_layernorm_kernel, eps=eps),
        out_shape=jax.ShapeDtypeStruct((M, D), out_dtype),
    )(x, gamma.reshape(1, D), beta.reshape(1, D))


# ----------------------------------------------------------------------------
# Parameters (deterministic synthetic init — no checkpoint loading)
# ----------------------------------------------------------------------------
def init_params(key, *, img_size, patch, in_chans, dim, depth, heads,
                mlp_ratio, num_classes):
    n_patches = (img_size // patch) ** 2
    hidden = dim * mlp_ratio
    dh = dim // heads
    scale = dh ** -0.5
    keys = iter(jax.random.split(key, 8 + depth * 6))

    def nrm(k, shape, dtype=COMPUTE_DTYPE):
        return (0.02 * jax.random.normal(k, shape)).astype(dtype)

    params = {
        "patch_w": nrm(next(keys), (in_chans * patch * patch, dim)),
        "patch_b": jnp.zeros((dim,), jnp.float32),
        "cls_token": nrm(next(keys), (1, 1, dim), jnp.float32),
        "pos_embed": nrm(next(keys), (1, n_patches + 1, dim), jnp.float32),
        "norm_g": jnp.ones((dim,), jnp.float32),
        "norm_b": jnp.zeros((dim,), jnp.float32),
        "head_w": nrm(next(keys), (dim, num_classes)),
        "head_b": jnp.zeros((num_classes,), jnp.float32),
        "blocks": [],
    }
    for _ in range(depth):
        qkv_w = nrm(next(keys), (dim, 3 * dim), jnp.float32)
        qkv_b = jnp.zeros((3 * dim,), jnp.float32)
        proj_w = nrm(next(keys), (dim, dim))
        # ----- parameter prep (one-time, free at runtime) --------------------
        # head-major qkv layout (3*heads, dim, Dh) with the attention scale
        # folded into the q component (exact: Dh is a power of two).
        w4 = qkv_w.reshape(dim, 3, heads, dh).at[:, 0].multiply(scale)
        b4 = qkv_b.reshape(3, heads, dh).at[0].multiply(scale)
        qkv_w_hm = jnp.transpose(w4, (1, 2, 0, 3)).reshape(3 * heads, dim, dh)
        qkv_b_hm = b4.reshape(3 * heads, 1, dh)
        blk = {
            "ln1_g": jnp.ones((dim,), jnp.float32),
            "ln1_b": jnp.zeros((dim,), jnp.float32),
            "qkv_w_hm": qkv_w_hm.astype(COMPUTE_DTYPE),
            "qkv_b_hm": qkv_b_hm.astype(jnp.float32),
            "proj_w_hm": proj_w.reshape(heads, dh, dim),   # rows grouped by head
            "proj_b": jnp.zeros((dim,), jnp.float32),
            "ln2_g": jnp.ones((dim,), jnp.float32),
            "ln2_b": jnp.zeros((dim,), jnp.float32),
            "fc1_w": nrm(next(keys), (dim, hidden)),
            "fc1_b": jnp.zeros((hidden,), jnp.float32),
            "fc2_w": nrm(next(keys), (hidden, dim)),
            "fc2_b": jnp.zeros((dim,), jnp.float32),
        }
        params["blocks"].append(blk)
    return params


# ----------------------------------------------------------------------------
# ViT forward (PyTorch ViT.forward -> (pred, out))
# ----------------------------------------------------------------------------
def vit_forward(params, x, *, patch, dim, heads):
    B, C, H, W = x.shape
    nh, nw = H // patch, W // patch
    N = nh * nw
    S = N + 1
    S_pad = ((S + 15) // 16) * 16          # bf16-friendly sequence padding
    Dh = dim // heads
    cdt = COMPUTE_DTYPE

    # --- patch embedding: Conv2d(k=stride=patch) == im2col + tiled matmul -----
    # TODO(synk): im2col is host-side XLA glue; it could be generated per-tile
    # inside the matmul kernel via an index_map to avoid materializing it.
    patches = (
        x.reshape(B, C, nh, patch, nw, patch)
        .transpose(0, 2, 4, 1, 3, 5)
        .reshape(B * N, C * patch * patch)
    ).astype(cdt)
    tok = fused_matmul(patches, params["patch_w"], params["patch_b"],
                       out_dtype=cdt).reshape(B, N, dim)          # (B, N, D)

    # --- cls token + pos embed (XLA fuses the broadcast-add into the pad write)
    cls = jnp.broadcast_to(params["cls_token"].astype(cdt), (B, 1, dim))
    xtok = jnp.concatenate([cls, tok], axis=1) + params["pos_embed"].astype(cdt)
    xtok = jnp.pad(xtok, ((0, 0), (0, S_pad - S), (0, 0)))        # (B, Sp, D)
    xf = xtok.reshape(B * S_pad, dim)

    # --- transformer blocks (pre-LN; LN / bias / GELU / residual fused) -------
    for blk in params["blocks"]:
        # attention branch: LN1 fused into the head-major QKV projection
        qkv = qkv_projection(xf, blk["ln1_g"], blk["ln1_b"],
                             blk["qkv_w_hm"], blk["qkv_b_hm"])    # (3H, B*Sp, Dh)
        a = attention(qkv, batch=B, heads=heads, s_pad=S_pad,
                      s_valid=S)                                  # (H, B*Sp, Dh)
        # proj matmul = reduction over heads, residual fused into the epilogue
        xf = headmerge_matmul(a, blk["proj_w_hm"], blk["proj_b"],
                              residual=xf, out_dtype=cdt)         # (B*Sp, D)

        # MLP branch: LN2 + exact GELU fused into FC1; residual fused into FC2
        h = fused_matmul(xf, blk["fc1_w"], blk["fc1_b"],
                         ln_gamma=blk["ln2_g"], ln_beta=blk["ln2_b"],
                         activation="gelu", out_dtype=cdt)
        xf = fused_matmul(h, blk["fc2_w"], blk["fc2_b"],
                          residual=xf, out_dtype=cdt)

    # --- final norm on cls rows only (LN is per-token), then head -------------
    cls_tok = xf.reshape(B, S_pad, dim)[:, 0]                     # (B, D)
    pred = layernorm(cls_tok, params["norm_g"], params["norm_b"],
                     out_dtype=jnp.float32)                       # (B, D)

    nc = params["head_w"].shape[1]
    nc_pad = ((nc + 127) // 128) * 128                            # lane-dense
    hw = jnp.pad(params["head_w"], ((0, 0), (0, nc_pad - nc)))
    hb = jnp.pad(params["head_b"], (0, nc_pad - nc))
    out = fused_matmul(pred.astype(cdt), hw, hb,
                       out_dtype=jnp.float32)[:, :nc]             # (B, nc)
    return pred, out


# ----------------------------------------------------------------------------
if __name__ == "__main__":
    # Small config consistent with the module's forward (ViT-style):
    # image 3x32x32, patch 16 -> 4 patches (+1 cls), dim 64, 4 heads, depth 2,
    # mlp_ratio 4, 100 classes (CIFAR-100 head).
    cfg = dict(img_size=32, patch=16, in_chans=3, dim=64, depth=2,
               heads=4, mlp_ratio=4, num_classes=100)

    key = jax.random.PRNGKey(0)
    k_param, k_x = jax.random.split(key)
    params = init_params(k_param, **cfg)
    x = jax.random.normal(k_x, (2, cfg["in_chans"], cfg["img_size"],
                                cfg["img_size"]), dtype=jnp.float32)

    fwd = jax.jit(functools.partial(vit_forward, patch=cfg["patch"],
                                    dim=cfg["dim"], heads=cfg["heads"]))
    pred, out = fwd(params, x)
    jax.block_until_ready((pred, out))
    assert pred.shape == (2, cfg["dim"])
    assert out.shape == (2, cfg["num_classes"])
    assert bool(jnp.all(jnp.isfinite(pred))) and bool(jnp.all(jnp.isfinite(out)))
    print("KERNEL_OK")
</pallas_src>

<mosaic_0001>
module attributes {stable_mosaic.version = 11 : i64} {
  func.func @_fmm_kernel(%arg0: i32, %arg1: i32, %arg2: i32, %arg3: memref<8x256xbf16, #tpu.memory_space<vmem>>, %arg4: memref<256x64xbf16, #tpu.memory_space<vmem>>, %arg5: memref<1x64xf32, #tpu.memory_space<vmem>>, %arg6: memref<8x64xbf16, #tpu.memory_space<vmem>>, %arg7: memref<8x64xf32, #tpu.memory_space<vmem>>) attributes {dimension_semantics = [#tpu.dimension_semantics<parallel>, #tpu.dimension_semantics<parallel>, #tpu.dimension_semantics<arbitrary>], iteration_bounds = array<i64: 1, 1, 3>, scalar_prefetch = 0 : i64, scratch_operands = 1 : i64, tpu.core_type = #tpu.core_type<tc>, window_params = [{transform_indices = @transform_0, window_bounds = array<i64: 8, 256>}, {transform_indices = @transform_1, window_bounds = array<i64: 256, 64>}, {transform_indices = @transform_2, window_bounds = array<i64: 1, 64>}, {transform_indices = @transform_3, window_bounds = array<i64: 8, 64>}]} {
    %c0 = arith.constant 0 : index
    %c0_0 = arith.constant 0 : index
    %0 = vector.load %arg3[%c0, %c0_0] : memref<8x256xbf16, #tpu.memory_space<vmem>>, vector<8x256xbf16>
    %c0_1 = arith.constant 0 : index
    %c0_2 = arith.constant 0 : index
    %1 = vector.load %arg4[%c0_1, %c0_2] : memref<256x64xbf16, #tpu.memory_space<vmem>>, vector<256x64xbf16>
    %cst = arith.constant dense<0.000000e+00> : vector<8x64xf32>
    %2 = tpu.matmul %0, %1, %cst {dimension_numbers = #tpu.dot_dimension_numbers<[1], [0], [0], [1], [0, 0, 1, 1], [], []>} : vector<8x256xbf16>, vector<256x64xbf16>, vector<8x64xf32> -> vector<8x64xf32>
    %c0_i32 = arith.constant 0 : i32
    %3 = arith.cmpi eq, %arg2, %c0_i32 : i32
    %4 = arith.extui %3 : i1 to i32
    %c0_i32_3 = arith.constant 0 : i32
    %5 = arith.cmpi ne, %4, %c0_i32_3 : i32
    scf.if %5 {
      %cst_9 = arith.constant 0.000000e+00 : f32
      %12 = vector.broadcast %cst_9 : f32 to vector<8x64xf32>
      %c0_10 = arith.constant 0 : index
      %c0_11 = arith.constant 0 : index
      %13 = vector.load %arg7[%c0_10, %c0_11] : memref<8x64xf32, #tpu.memory_space<vmem>>, vector<8x64xf32>
      tpu.vector_store %arg7[%c0_10, %c0_11], %12 {strides = array<i32>} : memref<8x64xf32, #tpu.memory_space<vmem>>, vector<8x64xf32>,
    } else {
    }
    %c0_4 = arith.constant 0 : index
    %c0_5 = arith.constant 0 : index
    %6 = vector.load %arg7[%c0_4, %c0_5] : memref<8x64xf32, #tpu.memory_space<vmem>>, vector<8x64xf32>
    %7 = arith.addf %6, %2 : vector<8x64xf32>
    %c0_6 = arith.constant 0 : index
    %c0_7 = arith.constant 0 : index
    %8 = vector.load %arg7[%c0_6, %c0_7] : memref<8x64xf32, #tpu.memory_space<vmem>>, vector<8x64xf32>
    tpu.vector_store %arg7[%c0_6, %c0_7], %7 {strides = array<i32>} : memref<8x64xf32, #tpu.memory_space<vmem>>, vector<8x64xf32>,
    %c2_i32 = arith.constant 2 : i32
    %9 = arith.cmpi eq, %arg2, %c2_i32 : i32
    %10 = arith.extui %9 : i1 to i32
    %c0_i32_8 = arith.constant 0 : i32
    %11 = arith.cmpi ne, %10, %c0_i32_8 : i32
    scf.if %11 {
      %c0_9 = arith.constant 0 : index
      %c0_10 = arith.constant 0 : index
      %12 = vector.load %arg7[%c0_9, %c0_10] : memref<8x64xf32, #tpu.memory_space<vmem>>, vector<8x64xf32>
      %c0_11 = arith.constant 0 : index
      %c0_12 = arith.constant 0 : index
      %13 = vector.load %arg5[%c0_11, %c0_12] : memref<1x64xf32, #tpu.memory_space<vmem>>, vector<1x64xf32>
      %14 = vector.broadcast %13 : vector<1x64xf32> to vector<8x64xf32>
      %15 = arith.addf %12, %14 : vector<8x64xf32>
      %16 = arith.truncf %15 : vector<8x64xf32> to vector<8x64xbf16>
      %c0_13 = arith.constant 0 : index
      %c0_14 = arith.constant 0 : index
      %17 = vector.load %arg6[%c0_13, %c0_14] : memref<8x64xbf16, #tpu.memory_space<vmem>>, vector<8x64xbf16>
      tpu.vector_store %arg6[%c0_13, %c0_14], %16 {strides = array<i32>} : memref<8x64xbf16, #tpu.memory_space<vmem>>, vector<8x64xbf16>,
    } else {
    }
    return
  }
  func.func @transform_0(%arg0: i32, %arg1: i32, %arg2: i32) -> (i32, i32) {
    %c0_i32 = arith.constant 0 : i32
    return %arg0, %arg2 : i32, i32
  }
  func.func @transform_1(%arg0: i32, %arg1: i32, %arg2: i32) -> (i32, i32) {
    %c0_i32 = arith.constant 0 : i32
    return %arg2, %arg1 : i32, i32
  }
  func.func @transform_2(%arg0: i32, %arg1: i32, %arg2: i32) -> (i32, i32) {
    %c0_i32 = arith.constant 0 : i32
    %c0_i32_0 = arith.constant 0 : i32
    return %c0_i32, %arg1 : i32, i32
  }
  func.func @transform_3(%arg0: i32, %arg1: i32, %arg2: i32) -> (i32, i32) {
    %c0_i32 = arith.constant 0 : i32
    return %arg0, %arg1 : i32, i32
  }
}

module attributes {stable_mosaic.version = 11 : i64} {
  func.func @_qkv_kernel(%arg0: i32, %arg1: i32, %arg2: memref<32x64xbf16, #tpu.memory_space<vmem>>, %arg3: memref<1x64xf32, #tpu.memory_space<vmem>>, %arg4: memref<1x64xf32, #tpu.memory_space<vmem>>, %arg5: memref<1x64x16xbf16, #tpu.memory_space<vmem>>, %arg6: memref<1x1x16xf32, #tpu.memory_space<vmem>>, %arg7: memref<1x32x16xbf16, #tpu.memory_space<vmem>>, %arg8: memref<32x64xbf16, #tpu.memory_space<vmem>>) attributes {dimension_semantics = [#tpu.dimension_semantics<parallel>, #tpu.dimension_semantics<arbitrary>], iteration_bounds = array<i64: 1, 12>, scalar_prefetch = 0 : i64, scratch_operands = 1 : i64, tpu.core_type = #tpu.core_type<tc>, window_params = [{transform_indices = @transform_0, window_bounds = array<i64: 32, 64>}, {pipeline_mode = #tpu.pipeline_mode<synchronous>, transform_indices = @transform_1, window_bounds = array<i64: 1, 64>}, {pipeline_mode = #tpu.pipeline_mode<synchronous>, transform_indices = @transform_2, window_bounds = array<i64: 1, 64>}, {transform_indices = @transform_3, window_bounds = array<i64: 1, 64, 16>}, {transform_indices = @transform_4, window_bounds = array<i64: 1, 1, 16>}, {transform_indices = @transform_5, window_bounds = array<i64: 1, 32, 16>}]} {
    %c0_i32 = arith.constant 0 : i32
    %0 = arith.cmpi eq, %arg1, %c0_i32 : i32
    %1 = arith.extui %0 : i1 to i32
    %c0_i32_0 = arith.constant 0 : i32
    %2 = arith.cmpi ne, %1, %c0_i32_0 : i32
    scf.if %2 {
      %c0_11 = arith.constant 0 : index
      %c0_12 = arith.constant 0 : index
      %15 = vector.load %arg2[%c0_11, %c0_12] : memref<32x64xbf16, #tpu.memory_space<vmem>>, vector<32x64xbf16>
      %16 = arith.extf %15 : vector<32x64xbf16> to vector<32x64xf32>
      %cst_13 = arith.constant dense<0.000000e+00> : vector<32xf32>
      %17 = vector.multi_reduction <add>, %16, %cst_13 [1] : vector<32x64xf32> to vector<32xf32>
      %18 = vector.shape_cast %17 : vector<32xf32> to vector<32x1xf32>
      %cst_14 = arith.constant 6.400000e+01 : f32
      %19 = vector.broadcast %cst_14 : f32 to vector<32x1xf32>
      %20 = arith.divf %18, %19 : vector<32x1xf32>
      %21 = vector.broadcast %20 : vector<32x1xf32> to vector<32x64xf32>
      %22 = arith.subf %16, %21 : vector<32x64xf32>
      %23 = arith.mulf %22, %22 : vector<32x64xf32>
      %cst_15 = arith.constant dense<0.000000e+00> : vector<32xf32>
      %24 = vector.multi_reduction <add>, %23, %cst_15 [1] : vector<32x64xf32> to vector<32xf32>
      %25 = vector.shape_cast %24 : vector<32xf32> to vector<32x1xf32>
      %cst_16 = arith.constant 6.400000e+01 : f32
      %26 = vector.broadcast %cst_16 : f32 to vector<32x1xf32>
      %27 = arith.divf %25, %26 : vector<32x1xf32>
      %cst_17 = arith.constant 9.99999997E-7 : f32
      %28 = vector.broadcast %cst_17 : f32 to vector<32x1xf32>
      %29 = arith.addf %27, %28 : vector<32x1xf32>
      %30 = math.rsqrt %29 : vector<32x1xf32>
      %31 = vector.broadcast %30 : vector<32x1xf32> to vector<32x64xf32>
      %32 = arith.mulf %22, %31 : vector<32x64xf32>
      %c0_18 = arith.constant 0 : index
      %c0_19 = arith.constant 0 : index
      %33 = vector.load %arg3[%c0_18, %c0_19] : memref<1x64xf32, #tpu.memory_space<vmem>>, vector<1x64xf32>
      %34 = vector.broadcast %33 : vector<1x64xf32> to vector<32x64xf32>
      %35 = arith.mulf %32, %34 : vector<32x64xf32>
      %c0_20 = arith.constant 0 : index
      %c0_21 = arith.constant 0 : index
      %36 = vector.load %arg4[%c0_20, %c0_21] : memref<1x64xf32, #tpu.memory_space<vmem>>, vector<1x64xf32>
      %37 = vector.broadcast %36 : vector<1x64xf32> to vector<32x64xf32>
      %38 = arith.addf %35, %37 : vector<32x64xf32>
      %39 = arith.truncf %38 : vector<32x64xf32> to vector<32x64xbf16>
      %c0_22 = arith.constant 0 : index
      %c0_23 = arith.constant 0 : index
      %40 = vector.load %arg8[%c0_22, %c0_23] : memref<32x64xbf16, #tpu.memory_space<vmem>>, vector<32x64xbf16>
      tpu.vector_store %arg8[%c0_22, %c0_23], %39 {strides = array<i32>} : memref<32x64xbf16, #tpu.memory_space<vmem>>, vector<32x64xbf16>,
    } else {
    }
    %c0 = arith.constant 0 : index
    %c0_1 = arith.constant 0 : index
    %3 = vector.load %arg8[%c0, %c0_1] : memref<32x64xbf16, #tpu.memory_space<vmem>>, vector<32x64xbf16>
    %c0_2 = arith.constant 0 : index
    %c0_3 = arith.constant 0 : index
    %c0_4 = arith.constant 0 : index
    %4 = vector.load %arg5[%c0_2, %c0_3, %c0_4] : memref<1x64x16xbf16, #tpu.memory_space<vmem>>, vector<1x64x16xbf16>
    %5 = vector.shape_cast %4 : vector<1x64x16xbf16> to vector<64x16xbf16>
    %cst = arith.constant dense<0.000000e+00> : vector<32x16xf32>
    %6 = tpu.matmul %3, %5, %cst {dimension_numbers = #tpu.dot_dimension_numbers<[1], [0], [0], [1], [0, 0, 1, 1], [], []>} : vector<32x64xbf16>, vector<64x16xbf16>, vector<32x16xf32> -> vector<32x16xf32>
    %c0_5 = arith.constant 0 : index
    %c0_6 = arith.constant 0 : index
    %c0_7 = arith.constant 0 : index
    %7 = vector.load %arg6[%c0_5, %c0_6, %c0_7] : memref<1x1x16xf32, #tpu.memory_space<vmem>>, vector<1x1x16xf32>
    %8 = vector.shape_cast %7 : vector<1x1x16xf32> to vector<1x16xf32>
    %9 = vector.broadcast %8 : vector<1x16xf32> to vector<32x16xf32>
    %10 = arith.addf %6, %9 : vector<32x16xf32>
    %11 = arith.truncf %10 : vector<32x16xf32> to vector<32x16xbf16>
    %c0_8 = arith.constant 0 : index
    %c0_9 = arith.constant 0 : index
    %c0_10 = arith.constant 0 : index
    %12 = vector.load %arg7[%c0_8, %c0_9, %c0_10] : memref<1x32x16xbf16, #tpu.memory_space<vmem>>, vector<1x32x16xbf16>
    %13 = vector.shape_cast %12 : vector<1x32x16xbf16> to vector<32x16xbf16>
    %14 = vector.shape_cast %11 : vector<32x16xbf16> to vector<1x32x16xbf16>
    tpu.vector_store %arg7[%c0_8, %c0_9, %c0_10], %14 {strides = array<i32>} : memref<1x32x16xbf16, #tpu.memory_space<vmem>>, vector<1x32x16xbf16>,
    return
  }
  func.func @transform_0(%arg0: i32, %arg1: i32) -> (i32, i32) {
    %c0_i32 = arith.constant 0 : i32
    %c0_i32_0 = arith.constant 0 : i32
    return %arg0, %c0_i32 : i32, i32
  }
  func.func @transform_1(%arg0: i32, %arg1: i32) -> (i32, i32) {
    %c0_i32 = arith.constant 0 : i32
    %c0_i32_0 = arith.constant 0 : i32
    %c0_i32_1 = arith.constant 0 : i32
    return %c0_i32, %c0_i32_0 : i32, i32
  }
  func.func @transform_2(%arg0: i32, %arg1: i32) -> (i32, i32) {
    %c0_i32 = arith.constant 0 : i32
    %c0_i32_0 = arith.constant 0 : i32
    %c0_i32_1 = arith.constant 0 : i32
    return %c0_i32, %c0_i32_0 : i32, i32
  }
  func.func @transform_3(%arg0: i32, %arg1: i32) -> (i32, i32, i32) {
    %c0_i32 = arith.constant 0 : i32
    %c0_i32_0 = arith.constant 0 : i32
    %c0_i32_1 = arith.constant 0 : i32
    return %arg1, %c0_i32, %c0_i32_0 : i32, i32, i32
  }
  func.func @transform_4(%arg0: i32, %arg1: i32) -> (i32, i32, i32) {
    %c0_i32 = arith.constant 0 : i32
    %c0_i32_0 = arith.constant 0 : i32
    %c0_i32_1 = arith.constant 0 : i32
    return %arg1, %c0_i32, %c0_i32_0 : i32, i32, i32
  }
  func.func @transform_5(%arg0: i32, %arg1: i32) -> (i32, i32, i32) {
    %c0_i32 = arith.constant 0 : i32
    %c0_i32_0 = arith.constant 0 : i32
    return %arg1, %arg0, %c0_i32 : i32, i32, i32
  }
}

module attributes {stable_mosaic.version = 11 : i64} {
  func.func @_attn_kernel(%arg0: i32, %arg1: i32, %arg2: memref<1x16x16xbf16, #tpu.memory_space<vmem>>, %arg3: memref<1x16x16xbf16, #tpu.memory_space<vmem>>, %arg4: memref<1x16x16xbf16, #tpu.memory_space<vmem>>, %arg5: memref<1x16x16xbf16, #tpu.memory_space<vmem>>) attributes {dimension_semantics = [#tpu.dimension_semantics<parallel>, #tpu.dimension_semantics<parallel>], iteration_bounds = array<i64: 2, 4>, scalar_prefetch = 0 : i64, scratch_operands = 0 : i64, tpu.core_type = #tpu.core_type<tc>, window_params = [{transform_indices = @transform_0, window_bounds = array<i64: 1, 16, 16>}, {transform_indices = @transform_1, window_bounds = array<i64: 1, 16, 16>}, {transform_indices = @transform_2, window_bounds = array<i64: 1, 16, 16>}, {transform_indices = @transform_3, window_bounds = array<i64: 1, 16, 16>}]} {
    %c0 = arith.constant 0 : index
    %c0_0 = arith.constant 0 : index
    %c0_1 = arith.constant 0 : index
    %0 = vector.load %arg2[%c0, %c0_0, %c0_1] : memref<1x16x16xbf16, #tpu.memory_space<vmem>>, vector<1x16x16xbf16>
    %1 = vector.shape_cast %0 : vector<1x16x16xbf16> to vector<16x16xbf16>
    %c0_2 = arith.constant 0 : index
    %c0_3 = arith.constant 0 : index
    %c0_4 = arith.constant 0 : index
    %2 = vector.load %arg3[%c0_2, %c0_3, %c0_4] : memref<1x16x16xbf16, #tpu.memory_space<vmem>>, vector<1x16x16xbf16>
    %3 = vector.shape_cast %2 : vector<1x16x16xbf16> to vector<16x16xbf16>
    %c0_5 = arith.constant 0 : index
    %c0_6 = arith.constant 0 : index
    %c0_7 = arith.constant 0 : index
    %4 = vector.load %arg4[%c0_5, %c0_6, %c0_7] : memref<1x16x16xbf16, #tpu.memory_space<vmem>>, vector<1x16x16xbf16>
    %5 = vector.shape_cast %4 : vector<1x16x16xbf16> to vector<16x16xbf16>
    %cst = arith.constant dense<0.000000e+00> : vector<16x16xf32>
    %6 = tpu.matmul %1, %3, %cst {dimension_numbers = #tpu.dot_dimension_numbers<[1], [1], [0], [0], [0, 0, 1, 0], [], []>} : vector<16x16xbf16>, vector<16x16xbf16>, vector<16x16xf32> -> vector<16x16xf32>
    %7 = tpu.iota {dimensions = array<i32: 1>} : vector<1x16xi32>
    %c5_i32 = arith.constant 5 : i32
    %8 = vector.broadcast %c5_i32 : i32 to vector<1x16xi32>
    %9 = arith.cmpi slt, %7, %8 : vector<1x16xi32>
    %cst_8 = arith.constant -1.000000e+30 : f32
    %10 = vector.shape_cast %9 : vector<1x16xi1> to vector<1x16xi1>
    %11 = vector.broadcast %10 : vector<1x16xi1> to vector<16x16xi1>
    %12 = vector.broadcast %cst_8 : f32 to vector<16x16xf32>
    %13 = arith.select %11, %6, %12 : vector<16x16xi1>, vector<16x16xf32>
    %cst_9 = arith.constant dense<0xFF800000> : vector<16xf32>
    %14 = vector.multi_reduction <maximumf>, %13, %cst_9 [1] : vector<16x16xf32> to vector<16xf32>
    %15 = vector.shape_cast %14 : vector<16xf32> to vector<16x1xf32>
    %16 = vector.broadcast %15 : vector<16x1xf32> to vector<16x16xf32>
    %17 = arith.subf %13, %16 : vector<16x16xf32>
    %18 = math.exp %17 : vector<16x16xf32>
    %cst_10 = arith.constant dense<0.000000e+00> : vector<16xf32>
    %19 = vector.multi_reduction <add>, %18, %cst_10 [1] : vector<16x16xf32> to vector<16xf32>
    %20 = vector.shape_cast %19 : vector<16xf32> to vector<16x1xf32>
    %21 = tpu.reciprocal %20 {approx = true} : vector<16x1xf32> -> vector<16x1xf32>
    %22 = vector.broadcast %21 : vector<16x1xf32> to vector<16x16xf32>
    %23 = arith.mulf %18, %22 : vector<16x16xf32>
    %24 = arith.truncf %23 : vector<16x16xf32> to vector<16x16xbf16>
    %cst_11 = arith.constant dense<0.000000e+00> : vector<16x16xf32>
    %25 = tpu.matmul %24, %5, %cst_11 {dimension_numbers = #tpu.dot_dimension_numbers<[1], [0], [0], [1], [0, 0, 1, 1], [], []>} : vector<16x16xbf16>, vector<16x16xbf16>, vector<16x16xf32> -> vector<16x16xf32>
    %26 = arith.truncf %25 : vector<16x16xf32> to vector<16x16xbf16>
    %c0_12 = arith.constant 0 : index
    %c0_13 = arith.constant 0 : index
    %c0_14 = arith.constant 0 : index
    %27 = vector.load %arg5[%c0_12, %c0_13, %c0_14] : memref<1x16x16xbf16, #tpu.memory_space<vmem>>, vector<1x16x16xbf16>
    %28 = vector.shape_cast %27 : vector<1x16x16xbf16> to vector<16x16xbf16>
    %29 = vector.shape_cast %26 : vector<16x16xbf16> to vector<1x16x16xbf16>
    tpu.vector_store %arg5[%c0_12, %c0_13, %c0_14], %29 {strides = array<i32>} : memref<1x16x16xbf16, #tpu.memory_space<vmem>>, vector<1x16x16xbf16>,
    return
  }
  func.func @transform_0(%arg0: i32, %arg1: i32) -> (i32, i32, i32) {
    %c0_i32 = arith.constant 0 : i32
    %c0_i32_0 = arith.constant 0 : i32
    return %arg1, %arg0, %c0_i32 : i32, i32, i32
  }
  func.func @transform_1(%arg0: i32, %arg1: i32) -> (i32, i32, i32) {
    %c4_i32 = arith.constant 4 : i32
    %0 = arith.addi %c4_i32, %arg1 : i32
    %c0_i32 = arith.constant 0 : i32
    %c0_i32_0 = arith.constant 0 : i32
    return %0, %arg0, %c0_i32 : i32, i32, i32
  }
  func.func @transform_2(%arg0: i32, %arg1: i32) -> (i32, i32, i32) {
    %c8_i32 = arith.constant 8 : i32
    %0 = arith.addi %c8_i32, %arg1 : i32
    %c0_i32 = arith.constant 0 : i32
    %c0_i32_0 = arith.constant 0 : i32
    return %0, %arg0, %c0_i32 : i32, i32, i32
  }
  func.func @transform_3(%arg0: i32, %arg1: i32) -> (i32, i32, i32) {
    %c0_i32 = arith.constant 0 : i32
    %c0_i32_0 = arith.constant 0 : i32
    return %arg1, %arg0, %c0_i32 : i32, i32, i32
  }
}

module attributes {stable_mosaic.version = 11 : i64} {
  func.func @_headmerge_kernel(%arg0: i32, %arg1: i32, %arg2: i32, %arg3: memref<1x32x16xbf16, #tpu.memory_space<vmem>>, %arg4: memref<1x16x64xbf16, #tpu.memory_space<vmem>>, %arg5: memref<1x64xf32, #tpu.memory_space<vmem>>, %arg6: memref<32x64xbf16, #tpu.memory_space<vmem>>, %arg7: memref<32x64xbf16, #tpu.memory_space<vmem>>, %arg8: memref<32x64xf32, #tpu.memory_space<vmem>>) attributes {dimension_semantics = [#tpu.dimension_semantics<parallel>, #tpu.dimension_semantics<parallel>, #tpu.dimension_semantics<arbitrary>], iteration_bounds = array<i64: 1, 1, 4>, scalar_prefetch = 0 : i64, scratch_operands = 1 : i64, tpu.core_type = #tpu.core_type<tc>, window_params = [{transform_indices = @transform_0, window_bounds = array<i64: 1, 32, 16>}, {transform_indices = @transform_1, window_bounds = array<i64: 1, 16, 64>}, {transform_indices = @transform_2, window_bounds = array<i64: 1, 64>}, {transform_indices = @transform_3, window_bounds = array<i64: 32, 64>}, {transform_indices = @transform_4, window_bounds = array<i64: 32, 64>}]} {
    %c0_i32 = arith.constant 0 : i32
    %0 = arith.cmpi eq, %arg2, %c0_i32 : i32
    %1 = arith.extui %0 : i1 to i32
    %c0_i32_0 = arith.constant 0 : i32
    %2 = arith.cmpi ne, %1, %c0_i32_0 : i32
    scf.if %2 {
      %cst_11 = arith.constant 0.000000e+00 : f32
      %14 = vector.broadcast %cst_11 : f32 to vector<32x64xf32>
      %c0_12 = arith.constant 0 : index
      %c0_13 = arith.constant 0 : index
      %15 = vector.load %arg8[%c0_12, %c0_13] : memref<32x64xf32, #tpu.memory_space<vmem>>, vector<32x64xf32>
      tpu.vector_store %arg8[%c0_12, %c0_13], %14 {strides = array<i32>} : memref<32x64xf32, #tpu.memory_space<vmem>>, vector<32x64xf32>,
    } else {
    }
    %c0 = arith.constant 0 : index
    %c0_1 = arith.constant 0 : index
    %3 = vector.load %arg8[%c0, %c0_1] : memref<32x64xf32, #tpu.memory_space<vmem>>, vector<32x64xf32>
    %c0_2 = arith.constant 0 : index
    %c0_3 = arith.constant 0 : index
    %c0_4 = arith.constant 0 : index
    %4 = vector.load %arg3[%c0_2, %c0_3, %c0_4] : memref<1x32x16xbf16, #tpu.memory_space<vmem>>, vector<1x32x16xbf16>
    %5 = vector.shape_cast %4 : vector<1x32x16xbf16> to vector<32x16xbf16>
    %c0_5 = arith.constant 0 : index
    %c0_6 = arith.constant 0 : index
    %c0_7 = arith.constant 0 : index
    %6 = vector.load %arg4[%c0_5, %c0_6, %c0_7] : memref<1x16x64xbf16, #tpu.memory_space<vmem>>, vector<1x16x64xbf16>
    %7 = vector.shape_cast %6 : vector<1x16x64xbf16> to vector<16x64xbf16>
    %cst = arith.constant dense<0.000000e+00> : vector<32x64xf32>
    %8 = tpu.matmul %5, %7, %cst {dimension_numbers = #tpu.dot_dimension_numbers<[1], [0], [0], [1], [0, 0, 1, 1], [], []>} : vector<32x16xbf16>, vector<16x64xbf16>, vector<32x64xf32> -> vector<32x64xf32>
    %9 = arith.addf %3, %8 : vector<32x64xf32>
    %c0_8 = arith.constant 0 : index
    %c0_9 = arith.constant 0 : index
    %10 = vector.load %arg8[%c0_8, %c0_9] : memref<32x64xf32, #tpu.memory_space<vmem>>, vector<32x64xf32>
    tpu.vector_store %arg8[%c0_8, %c0_9], %9 {strides = array<i32>} : memref<32x64xf32, #tpu.memory_space<vmem>>, vector<32x64xf32>,
    %c3_i32 = arith.constant 3 : i32
    %11 = arith.cmpi eq, %arg2, %c3_i32 : i32
    %12 = arith.extui %11 : i1 to i32
    %c0_i32_10 = arith.constant 0 : i32
    %13 = arith.cmpi ne, %12, %c0_i32_10 : i32
    scf.if %13 {
      %c0_11 = arith.constant 0 : index
      %c0_12 = arith.constant 0 : index
      %14 = vector.load %arg8[%c0_11, %c0_12] : memref<32x64xf32, #tpu.memory_space<vmem>>, vector<32x64xf32>
      %c0_13 = arith.constant 0 : index
      %c0_14 = arith.constant 0 : index
      %15 = vector.load %arg5[%c0_13, %c0_14] : memref<1x64xf32, #tpu.memory_space<vmem>>, vector<1x64xf32>
      %16 = vector.broadcast %15 : vector<1x64xf32> to vector<32x64xf32>
      %17 = arith.addf %14, %16 : vector<32x64xf32>
      %c0_15 = arith.constant 0 : index
      %c0_16 = arith.constant 0 : index
      %18 = vector.load %arg6[%c0_15, %c0_16] : memref<32x64xbf16, #tpu.memory_space<vmem>>, vector<32x64xbf16>
      %19 = arith.extf %18 : vector<32x64xbf16> to vector<32x64xf32>
      %20 = arith.addf %17, %19 : vector<32x64xf32>
      %21 = arith.truncf %20 : vector<32x64xf32> to vector<32x64xbf16>
      %c0_17 = arith.constant 0 : index
      %c0_18 = arith.constant 0 : index
      %22 = vector.load %arg7[%c0_17, %c0_18] : memref<32x64xbf16, #tpu.memory_space<vmem>>, vector<32x64xbf16>
      tpu.vector_store %arg7[%c0_17, %c0_18], %21 {strides = array<i32>} : memref<32x64xbf16, #tpu.memory_space<vmem>>, vector<32x64xbf16>,
    } else {
    }
    return
  }
  func.func @transform_0(%arg0: i32, %arg1: i32, %arg2: i32) -> (i32, i32, i32) {
    %c0_i32 = arith.constant 0 : i32
    %c0_i32_0 = arith.constant 0 : i32
    return %arg2, %arg0, %c0_i32 : i32, i32, i32
  }
  func.func @transform_1(%arg0: i32, %arg1: i32, %arg2: i32) -> (i32, i32, i32) {
    %c0_i32 = arith.constant 0 : i32
    %c0_i32_0 = arith.constant 0 : i32
    return %arg2, %c0_i32, %arg1 : i32, i32, i32
  }
  func.func @transform_2(%arg0: i32, %arg1: i32, %arg2: i32) -> (i32, i32) {
    %c0_i32 = arith.constant 0 : i32
    %c0_i32_0 = arith.constant 0 : i32
    return %c0_i32, %arg1 : i32, i32
  }
  func.func @transform_3(%arg0: i32, %arg1: i32, %arg2: i32) -> (i32, i32) {
    %c0_i32 = arith.constant 0 : i32
    return %arg0, %arg1 : i32, i32
  }
  func.func @transform_4(%arg0: i32, %arg1: i32, %arg2: i32) -> (i32, i32) {
    %c0_i32 = arith.constant 0 : i32
    return %arg0, %arg1 : i32, i32
  }
}

module attributes {stable_mosaic.version = 11 : i64} {
  func.func @_fmm_kernel(%arg0: i32, %arg1: i32, %arg2: memref<32x256xbf16, #tpu.memory_space<vmem>>, %arg3: memref<256x64xbf16, #tpu.memory_space<vmem>>, %arg4: memref<1x64xf32, #tpu.memory_space<vmem>>, %arg5: memref<32x64xbf16, #tpu.memory_space<vmem>>, %arg6: memref<32x64xbf16, #tpu.memory_space<vmem>>) attributes {dimension_semantics = [#tpu.dimension_semantics<parallel>, #tpu.dimension_semantics<parallel>], iteration_bounds = array<i64: 1, 1>, scalar_prefetch = 0 : i64, scratch_operands = 0 : i64, tpu.core_type = #tpu.core_type<tc>, window_params = [{transform_indices = @transform_0, window_bounds = array<i64: 32, 256>}, {transform_indices = @transform_1, window_bounds = array<i64: 256, 64>}, {transform_indices = @transform_2, window_bounds = array<i64: 1, 64>}, {transform_indices = @transform_3, window_bounds = array<i64: 32, 64>}, {transform_indices = @transform_4, window_bounds = array<i64: 32, 64>}]} {
    %c0 = arith.constant 0 : index
    %c0_0 = arith.constant 0 : index
    %0 = vector.load %arg2[%c0, %c0_0] : memref<32x256xbf16, #tpu.memory_space<vmem>>, vector<32x256xbf16>
    %c0_1 = arith.constant 0 : index
    %c0_2 = arith.constant 0 : index
    %1 = vector.load %arg3[%c0_1, %c0_2] : memref<256x64xbf16, #tpu.memory_space<vmem>>, vector<256x64xbf16>
    %cst = arith.constant dense<0.000000e+00> : vector<32x64xf32>
    %2 = tpu.matmul %0, %1, %cst {dimension_numbers = #tpu.dot_dimension_numbers<[1], [0], [0], [1], [0, 0, 1, 1], [], []>} : vector<32x256xbf16>, vector<256x64xbf16>, vector<32x64xf32> -> vector<32x64xf32>
    %c0_3 = arith.constant 0 : index
    %c0_4 = arith.constant 0 : index
    %3 = vector.load %arg4[%c0_3, %c0_4] : memref<1x64xf32, #tpu.memory_space<vmem>>, vector<1x64xf32>
    %4 = vector.broadcast %3 : vector<1x64xf32> to vector<32x64xf32>
    %5 = arith.addf %2, %4 : vector<32x64xf32>
    %c0_5 = arith.constant 0 : index
    %c0_6 = arith.constant 0 : index
    %6 = vector.load %arg5[%c0_5, %c0_6] : memref<32x64xbf16, #tpu.memory_space<vmem>>, vector<32x64xbf16>
    %7 = arith.extf %6 : vector<32x64xbf16> to vector<32x64xf32>
    %8 = arith.addf %5, %7 : vector<32x64xf32>
    %9 = arith.truncf %8 : vector<32x64xf32> to vector<32x64xbf16>
    %c0_7 = arith.constant 0 : index
    %c0_8 = arith.constant 0 : index
    %10 = vector.load %arg6[%c0_7, %c0_8] : memref<32x64xbf16, #tpu.memory_space<vmem>>, vector<32x64xbf16>
    tpu.vector_store %arg6[%c0_7, %c0_8], %9 {strides = array<i32>} : memref<32x64xbf16, #tpu.memory_space<vmem>>, vector<32x64xbf16>,
    return
  }
  func.func @transform_0(%arg0: i32, %arg1: i32) -> (i32, i32) {
    %c0_i32 = arith.constant 0 : i32
    %c0_i32_0 = arith.constant 0 : i32
    return %arg0, %c0_i32 : i32, i32
  }
  func.func @transform_1(%arg0: i32, %arg1: i32) -> (i32, i32) {
    %c0_i32 = arith.constant 0 : i32
    %c0_i32_0 = arith.constant 0 : i32
    return %c0_i32, %arg1 : i32, i32
  }
  func.func @transform_2(%arg0: i32, %arg1: i32) -> (i32, i32) {
    %c0_i32 = arith.constant 0 : i32
    %c0_i32_0 = arith.constant 0 : i32
    return %c0_i32, %arg1 : i32, i32
  }
  func.func @transform_3(%arg0: i32, %arg1: i32) -> (i32, i32) {
    %c0_i32 = arith.constant 0 : i32
    return %arg0, %arg1 : i32, i32
  }
  func.func @transform_4(%arg0: i32, %arg1: i32) -> (i32, i32) {
    %c0_i32 = arith.constant 0 : i32
    return %arg0, %arg1 : i32, i32
  }
}

module attributes {stable_mosaic.version = 11 : i64} {
  func.func @_fmm_kernel(%arg0: i32, %arg1: i32, %arg2: memref<32x64xbf16, #tpu.memory_space<vmem>>, %arg3: memref<64x256xbf16, #tpu.memory_space<vmem>>, %arg4: memref<1x256xf32, #tpu.memory_space<vmem>>, %arg5: memref<1x64xf32, #tpu.memory_space<vmem>>, %arg6: memref<1x64xf32, #tpu.memory_space<vmem>>, %arg7: memref<32x256xbf16, #tpu.memory_space<vmem>>) attributes {dimension_semantics = [#tpu.dimension_semantics<parallel>, #tpu.dimension_semantics<parallel>], iteration_bounds = array<i64: 1, 1>, scalar_prefetch = 0 : i64, scratch_operands = 0 : i64, tpu.core_type = #tpu.core_type<tc>, window_params = [{transform_indices = @transform_0, window_bounds = array<i64: 32, 64>}, {transform_indices = @transform_1, window_bounds = array<i64: 64, 256>}, {transform_indices = @transform_2, window_bounds = array<i64: 1, 256>}, {pipeline_mode = #tpu.pipeline_mode<synchronous>, transform_indices = @transform_3, window_bounds = array<i64: 1, 64>}, {pipeline_mode = #tpu.pipeline_mode<synchronous>, transform_indices = @transform_4, window_bounds = array<i64: 1, 64>}, {transform_indices = @transform_5, window_bounds = array<i64: 32, 256>}]} {
    %c0 = arith.constant 0 : index
    %c0_0 = arith.constant 0 : index
    %0 = vector.load %arg2[%c0, %c0_0] : memref<32x64xbf16, #tpu.memory_space<vmem>>, vector<32x64xbf16>
    %1 = arith.extf %0 : vector<32x64xbf16> to vector<32x64xf32>
    %cst = arith.constant dense<0.000000e+00> : vector<32xf32>
    %2 = vector.multi_reduction <add>, %1, %cst [1] : vector<32x64xf32> to vector<32xf32>
    %3 = vector.shape_cast %2 : vector<32xf32> to vector<32x1xf32>
    %cst_1 = arith.constant 6.400000e+01 : f32
    %4 = vector.broadcast %cst_1 : f32 to vector<32x1xf32>
    %5 = arith.divf %3, %4 : vector<32x1xf32>
    %6 = vector.broadcast %5 : vector<32x1xf32> to vector<32x64xf32>
    %7 = arith.subf %1, %6 : vector<32x64xf32>
    %8 = arith.mulf %7, %7 : vector<32x64xf32>
    %cst_2 = arith.constant dense<0.000000e+00> : vector<32xf32>
    %9 = vector.multi_reduction <add>, %8, %cst_2 [1] : vector<32x64xf32> to vector<32xf32>
    %10 = vector.shape_cast %9 : vector<32xf32> to vector<32x1xf32>
    %cst_3 = arith.constant 6.400000e+01 : f32
    %11 = vector.broadcast %cst_3 : f32 to vector<32x1xf32>
    %12 = arith.divf %10, %11 : vector<32x1xf32>
    %cst_4 = arith.constant 9.99999997E-7 : f32
    %13 = vector.broadcast %cst_4 : f32 to vector<32x1xf32>
    %14 = arith.addf %12, %13 : vector<32x1xf32>
    %15 = math.rsqrt %14 : vector<32x1xf32>
    %16 = vector.broadcast %15 : vector<32x1xf32> to vector<32x64xf32>
    %17 = arith.mulf %7, %16 : vector<32x64xf32>
    %c0_5 = arith.constant 0 : index
    %c0_6 = arith.constant 0 : index
    %18 = vector.load %arg5[%c0_5, %c0_6] : memref<1x64xf32, #tpu.memory_space<vmem>>, vector<1x64xf32>
    %19 = vector.broadcast %18 : vector<1x64xf32> to vector<32x64xf32>
    %20 = arith.mulf %17, %19 : vector<32x64xf32>
    %c0_7 = arith.constant 0 : index
    %c0_8 = arith.constant 0 : index
    %21 = vector.load %arg6[%c0_7, %c0_8] : memref<1x64xf32, #tpu.memory_space<vmem>>, vector<1x64xf32>
    %22 = vector.broadcast %21 : vector<1x64xf32> to vector<32x64xf32>
    %23 = arith.addf %20, %22 : vector<32x64xf32>
    %24 = arith.truncf %23 : vector<32x64xf32> to vector<32x64xbf16>
    %c0_9 = arith.constant 0 : index
    %c0_10 = arith.constant 0 : index
    %25 = vector.load %arg3[%c0_9, %c0_10] : memref<64x256xbf16, #tpu.memory_space<vmem>>, vector<64x256xbf16>
    %cst_11 = arith.constant dense<0.000000e+00> : vector<32x256xf32>
    %26 = tpu.matmul %24, %25, %cst_11 {dimension_numbers = #tpu.dot_dimension_numbers<[1], [0], [0], [1], [0, 0, 1, 1], [], []>} : vector<32x64xbf16>, vector<64x256xbf16>, vector<32x256xf32> -> vector<32x256xf32>
    %c0_12 = arith.constant 0 : index
    %c0_13 = arith.constant 0 : index
    %27 = vector.load %arg4[%c0_12, %c0_13] : memref<1x256xf32, #tpu.memory_space<vmem>>, vector<1x256xf32>
    %28 = vector.broadcast %27 : vector<1x256xf32> to vector<32x256xf32>
    %29 = arith.addf %26, %28 : vector<32x256xf32>
    %cst_14 = arith.constant 5.000000e-01 : f32
    %30 = vector.broadcast %cst_14 : f32 to vector<32x256xf32>
    %31 = arith.mulf %30, %29 : vector<32x256xf32>
    %cst_15 = arith.constant 0.707106769 : f32
    %32 = vector.broadcast %cst_15 : f32 to vector<32x256xf32>
    %33 = arith.mulf %29, %32 : vector<32x256xf32>
    %34 = math.erf %33 : vector<32x256xf32>
    %cst_16 = arith.constant 1.000000e+00 : f32
    %35 = vector.broadcast %cst_16 : f32 to vector<32x256xf32>
    %36 = arith.addf %35, %34 : vector<32x256xf32>
    %37 = arith.mulf %31, %36 : vector<32x256xf32>
    %38 = arith.truncf %37 : vector<32x256xf32> to vector<32x256xbf16>
    %c0_17 = arith.constant 0 : index
    %c0_18 = arith.constant 0 : index
    %39 = vector.load %arg7[%c0_17, %c0_18] : memref<32x256xbf16, #tpu.memory_space<vmem>>, vector<32x256xbf16>
    tpu.vector_store %arg7[%c0_17, %c0_18], %38 {strides = array<i32>} : memref<32x256xbf16, #tpu.memory_space<vmem>>, vector<32x256xbf16>,
    return
  }
  func.func @transform_0(%arg0: i32, %arg1: i32) -> (i32, i32) {
    %c0_i32 = arith.constant 0 : i32
    %c0_i32_0 = arith.constant 0 : i32
    return %arg0, %c0_i32 : i32, i32
  }
  func.func @transform_1(%arg0: i32, %arg1: i32) -> (i32, i32) {
    %c0_i32 = arith.constant 0 : i32
    %c0_i32_0 = arith.constant 0 : i32
    return %c0_i32, %arg1 : i32, i32
  }
  func.func @transform_2(%arg0: i32, %arg1: i32) -> (i32, i32) {
    %c0_i32 = arith.constant 0 : i32
    %c0_i32_0 = arith.constant 0 : i32
    return %c0_i32, %arg1 : i32, i32
  }
  func.func @transform_3(%arg0: i32, %arg1: i32) -> (i32, i32) {
    %c0_i32 = arith.constant 0 : i32
    %c0_i32_0 = arith.constant 0 : i32
    %c0_i32_1 = arith.constant 0 : i32
    return %c0_i32, %c0_i32_0 : i32, i32
  }
  func.func @transform_4(%arg0: i32, %arg1: i32) -> (i32, i32) {
    %c0_i32 = arith.constant 0 : i32
    %c0_i32_0 = arith.constant 0 : i32
    %c0_i32_1 = arith.constant 0 : i32
    return %c0_i32, %c0_i32_0 : i32, i32
  }
  func.func @transform_5(%arg0: i32, %arg1: i32) -> (i32, i32) {
    %c0_i32 = arith.constant 0 : i32
    return %arg0, %arg1 : i32, i32
  }
}

module attributes {stable_mosaic.version = 11 : i64} {
  func.func @_layernorm_kernel(%arg0: memref<2x64xbf16, #tpu.memory_space<vmem>>, %arg1: memref<1x64xf32, #tpu.memory_space<vmem>>, %arg2: memref<1x64xf32, #tpu.memory_space<vmem>>, %arg3: memref<2x64xf32, #tpu.memory_space<vmem>>) attributes {dimension_semantics = [], scalar_prefetch = 0 : i64, scratch_operands = 0 : i64, tpu.core_type = #tpu.core_type<tc>} {
    %c0 = arith.constant 0 : index
    %c0_0 = arith.constant 0 : index
    %0 = vector.load %arg0[%c0, %c0_0] : memref<2x64xbf16, #tpu.memory_space<vmem>>, vector<2x64xbf16>
    %1 = arith.extf %0 : vector<2x64xbf16> to vector<2x64xf32>
    %cst = arith.constant dense<0.000000e+00> : vector<2xf32>
    %2 = vector.multi_reduction <add>, %1, %cst [1] : vector<2x64xf32> to vector<2xf32>
    %3 = vector.shape_cast %2 : vector<2xf32> to vector<2x1xf32>
    %cst_1 = arith.constant 6.400000e+01 : f32
    %4 = vector.broadcast %cst_1 : f32 to vector<2x1xf32>
    %5 = arith.divf %3, %4 : vector<2x1xf32>
    %6 = vector.broadcast %5 : vector<2x1xf32> to vector<2x64xf32>
    %7 = arith.subf %1, %6 : vector<2x64xf32>
    %8 = arith.mulf %7, %7 : vector<2x64xf32>
    %cst_2 = arith.constant dense<0.000000e+00> : vector<2xf32>
    %9 = vector.multi_reduction <add>, %8, %cst_2 [1] : vector<2x64xf32> to vector<2xf32>
    %10 = vector.shape_cast %9 : vector<2xf32> to vector<2x1xf32>
    %cst_3 = arith.constant 6.400000e+01 : f32
    %11 = vector.broadcast %cst_3 : f32 to vector<2x1xf32>
    %12 = arith.divf %10, %11 : vector<2x1xf32>
    %cst_4 = arith.constant 9.99999997E-7 : f32
    %13 = vector.broadcast %cst_4 : f32 to vector<2x1xf32>
    %14 = arith.addf %12, %13 : vector<2x1xf32>
    %15 = math.rsqrt %14 : vector<2x1xf32>
    %16 = vector.broadcast %15 : vector<2x1xf32> to vector<2x64xf32>
    %17 = arith.mulf %7, %16 : vector<2x64xf32>
    %c0_5 = arith.constant 0 : index
    %c0_6 = arith.constant 0 : index
    %18 = vector.load %arg1[%c0_5, %c0_6] : memref<1x64xf32, #tpu.memory_space<vmem>>, vector<1x64xf32>
    %19 = vector.broadcast %18 : vector<1x64xf32> to vector<2x64xf32>
    %20 = arith.mulf %17, %19 : vector<2x64xf32>
    %c0_7 = arith.constant 0 : index
    %c0_8 = arith.constant 0 : index
    %21 = vector.load %arg2[%c0_7, %c0_8] : memref<1x64xf32, #tpu.memory_space<vmem>>, vector<1x64xf32>
    %22 = vector.broadcast %21 : vector<1x64xf32> to vector<2x64xf32>
    %23 = arith.addf %20, %22 : vector<2x64xf32>
    %c0_9 = arith.constant 0 : index
    %c0_10 = arith.constant 0 : index
    %24 = vector.load %arg3[%c0_9, %c0_10] : memref<2x64xf32, #tpu.memory_space<vmem>>, vector<2x64xf32>
    tpu.vector_store %arg3[%c0_9, %c0_10], %23 {strides = array<i32>} : memref<2x64xf32, #tpu.memory_space<vmem>>, vector<2x64xf32>,
    return
  }
}

module attributes {stable_mosaic.version = 11 : i64} {
  func.func @_fmm_kernel(%arg0: i32, %arg1: i32, %arg2: memref<2x64xbf16, #tpu.memory_space<vmem>>, %arg3: memref<64x128xbf16, #tpu.memory_space<vmem>>, %arg4: memref<1x128xf32, #tpu.memory_space<vmem>>, %arg5: memref<2x128xf32, #tpu.memory_space<vmem>>) attributes {dimension_semantics = [#tpu.dimension_semantics<parallel>, #tpu.dimension_semantics<parallel>], iteration_bounds = array<i64: 1, 1>, scalar_prefetch = 0 : i64, scratch_operands = 0 : i64, tpu.core_type = #tpu.core_type<tc>, window_params = [{transform_indices = @transform_0, window_bounds = array<i64: 2, 64>}, {transform_indices = @transform_1, window_bounds = array<i64: 64, 128>}, {transform_indices = @transform_2, window_bounds = array<i64: 1, 128>}, {transform_indices = @transform_3, window_bounds = array<i64: 2, 128>}]} {
    %c0 = arith.constant 0 : index
    %c0_0 = arith.constant 0 : index
    %0 = vector.load %arg2[%c0, %c0_0] : memref<2x64xbf16, #tpu.memory_space<vmem>>, vector<2x64xbf16>
    %c0_1 = arith.constant 0 : index
    %c0_2 = arith.constant 0 : index
    %1 = vector.load %arg3[%c0_1, %c0_2] : memref<64x128xbf16, #tpu.memory_space<vmem>>, vector<64x128xbf16>
    %cst = arith.constant dense<0.000000e+00> : vector<2x128xf32>
    %2 = tpu.matmul %0, %1, %cst {dimension_numbers = #tpu.dot_dimension_numbers<[1], [0], [0], [1], [0, 0, 1, 1], [], []>} : vector<2x64xbf16>, vector<64x128xbf16>, vector<2x128xf32> -> vector<2x128xf32>
    %c0_3 = arith.constant 0 : index
    %c0_4 = arith.constant 0 : index
    %3 = vector.load %arg4[%c0_3, %c0_4] : memref<1x128xf32, #tpu.memory_space<vmem>>, vector<1x128xf32>
    %4 = vector.broadcast %3 : vector<1x128xf32> to vector<2x128xf32>
    %5 = arith.addf %2, %4 : vector<2x128xf32>
    %c0_5 = arith.constant 0 : index
    %c0_6 = arith.constant 0 : index
    %6 = vector.load %arg5[%c0_5, %c0_6] : memref<2x128xf32, #tpu.memory_space<vmem>>, vector<2x128xf32>
    tpu.vector_store %arg5[%c0_5, %c0_6], %5 {strides = array<i32>} : memref<2x128xf32, #tpu.memory_space<vmem>>, vector<2x128xf32>,
    return
  }
  func.func @transform_0(%arg0: i32, %arg1: i32) -> (i32, i32) {
    %c0_i32 = arith.constant 0 : i32
    %c0_i32_0 = arith.constant 0 : i32
    return %arg0, %c0_i32 : i32, i32
  }
  func.func @transform_1(%arg0: i32, %arg1: i32) -> (i32, i32) {
    %c0_i32 = arith.constant 0 : i32
    %c0_i32_0 = arith.constant 0 : i32
    return %c0_i32, %arg1 : i32, i32
  }
  func.func @transform_2(%arg0: i32, %arg1: i32) -> (i32, i32) {
    %c0_i32 = arith.constant 0 : i32
    %c0_i32_0 = arith.constant 0 : i32
    return %c0_i32, %arg1 : i32, i32
  }
  func.func @transform_3(%arg0: i32, %arg1: i32) -> (i32, i32) {
    %c0_i32 = arith.constant 0 : i32
    return %arg0, %arg1 : i32, i32
  }
}

</mosaic_0001>

<llo_original>
// kernel: vit_forward.13
$region0: #{vit_forward.13}
  #allocation0 [shape = 'u32[]', space=smem, size = 0x4, offset = 0x4, fixed_abs, tag = 'smem constant byte address 0x4 - core index']
  #allocation1 [shape = 'u32[144,128]{1,0:T(1,128)}', space=vmem, size = 0x12000, scoped, tag = 'internal scratch']
  #allocation2 [shape = 'f32[8,64]{1,0:T(8,128)}', space=vmem, size = 0x1000, scoped, tag = 'scratch operand']
  %s0 = inlined_call_operand.vmem [shape: bf16[8,768], index: 0, kind: input, shape index: {}]
  %s1 = inlined_call_operand.vmem [shape: bf16[768,64], index: 1, kind: input, shape index: {}]
  %s2 = inlined_call_operand.vmem [shape: f32[1,64], index: 2, kind: input, shape index: {}]
  %s3 = inlined_call_operand.vmem [shape: bf16[8,64], index: 3, kind: output, shape index: {}]
  %s4 = sld [smem:[#allocation0]]
  $region53: #{vit_forward.13} parent=0
    _
  %s6 = ssub.s32 1, %s4
  %s7 = scalar_select 0, %s6, %s4
  loop: start=0, step=1, limit=5
  $region2: #{vit_forward.13} parent=0 // loop_pre_header
    _
  $region3: #{vit_forward.13} parent=0 // loop_header
    %s9 = sphi 0, %s13
    %p10 = scmp.ge.s32.totalorder %s9, 5
    %s16 = sphi 0, %s35
    %s17 = sphi 0, %s31
    %s18 = sphi 0, %s27
    %s19 = sphi 0, %s16
    %s20 = sphi 0, %s17
    %s21 = sphi 0, %s18
    %s22 = sphi 0, %s19
    %s23 = sphi 0, %s20
    %s24 = sphi 0, %s21
    %s40 = sphi 0, %s42
    %s43 = sphi 0, %s40
    %s44 = sphi 0, %s43
    %s60 = sphi 0, %s44
    %s68 = sphi 0, %s70
    %s71 = sphi 0, %s68
    %s72 = sphi 0, %s71
    %s88 = sphi 0, %s72
    %s94 = sphi 0, %s96
    %s97 = sphi 0, %s94
    %s98 = sphi 0, %s97
    %s114 = sphi 0, %s98
    %s122 = sphi 0, %s124
    %s125 = sphi 0, %s122
    %s126 = sphi 0, %s125
    %s142 = sphi 0, %s126
  $region4: #{vit_forward.13} parent=0 // loop_header_branch
    %12 = sbr.rel (%p10) target = $region8
  $region5: #{vit_forward.13} parent=0 // loop_body
    %s14 = ssub.s32 %s9, 1
    %s15 = ssub.s32 %s9, 2
    %s25 = sadd.s32 1, %s18
    %p26 = scmp.ge.s32.totalorder %s25, 3
    %s27 = scalar_select %p26, 0, %s25
    %s28 = sadd.s32 1, %s17
    %s29 = scalar_select %p26, %s28, %s17
    %p30 = scmp.ge.s32.totalorder %s29, 1
    %s31 = scalar_select %p30, 0, %s29
    %s32 = sadd.s32 1, %s16
    %s33 = scalar_select %p30, %s32, %s16
    %p34 = scmp.ge.s32.totalorder %s33, 1
    %s35 = scalar_select %p34, 0, %s33
    %s36 = ssub.s32 %s16, %s35
    %s37 = ssub.s32 %s18, %s27
    %s38 = sor.u32 %s36, %s37
    %p39 = scmp.eq.s32.totalorder %s38, 0
    %s41 = sadd.s32 %s40, 1
    %s42 = scalar_select %p39, %s40, %s41
    %p45 = pneg %p39
    %p46 = scmp.eq.s32.totalorder %s9, 2
    %p47 = por %p45, %p46
    %p48 = scmp.ne.s32.totalorder %s40, %s43
    %p49 = scmp.eq.s32.totalorder %s9, 0
    %p50 = por %p48, %p49
    %p51 = scmp.ne.s32.totalorder %s40, %s43
    %p52 = scmp.eq.s32.totalorder %s14, 2
    %p53 = por %p51, %p52
    %p54 = scmp.ne.s32.totalorder %s43, %s44
    %p55 = scmp.eq.s32.totalorder %s14, 0
    %p56 = por %p54, %p55
    %p57 = scmp.ne.s32.totalorder %s43, %s44
    %p58 = scmp.eq.s32.totalorder %s15, 2
    %p59 = por %p57, %p58
    %p61 = scmp.ne.s32.totalorder %s44, %s60
    %p62 = scmp.eq.s32.totalorder %s15, 0
    %p63 = por %p61, %p62
    %s64 = ssub.s32 %s18, %s27
    %s65 = ssub.s32 %s17, %s31
    %s66 = sor.u32 %s64, %s65
    %p67 = scmp.eq.s32.totalorder %s66, 0
    %s69 = sadd.s32 %s68, 1
    %s70 = scalar_select %p67, %s68, %s69
    %p73 = pneg %p67
    %p74 = scmp.eq.s32.totalorder %s9, 2
    %p75 = por %p73, %p74
    %p76 = scmp.ne.s32.totalorder %s68, %s71
    %p77 = scmp.eq.s32.totalorder %s9, 0
    %p78 = por %p76, %p77
    %p79 = scmp.ne.s32.totalorder %s68, %s71
    %p80 = scmp.eq.s32.totalorder %s14, 2
    %p81 = por %p79, %p80
    %p82 = scmp.ne.s32.totalorder %s71, %s72
    %p83 = scmp.eq.s32.totalorder %s14, 0
    %p84 = por %p82, %p83
    %p85 = scmp.ne.s32.totalorder %s71, %s72
    %p86 = scmp.eq.s32.totalorder %s15, 2
    %p87 = por %p85, %p86
    %p89 = scmp.ne.s32.totalorder %s72, %s88
    %p90 = scmp.eq.s32.totalorder %s15, 0
    %p91 = por %p89, %p90
    %s92 = ssub.s32 %s17, %s31
    %p93 = scmp.eq.s32.totalorder %s92, 0
    %s95 = sadd.s32 %s94, 1
    %s96 = scalar_select %p93, %s94, %s95
    %p99 = pneg %p93
    %p100 = scmp.eq.s32.totalorder %s9, 2
    %p101 = por %p99, %p100
    %p102 = scmp.ne.s32.totalorder %s94, %s97
    %p103 = scmp.eq.s32.totalorder %s9, 0
    %p104 = por %p102, %p103
    %p105 = scmp.ne.s32.totalorder %s94, %s97
    %p106 = scmp.eq.s32.totalorder %s14, 2
    %p107 = por %p105, %p106
    %p108 = scmp.ne.s32.totalorder %s97, %s98
    %p109 = scmp.eq.s32.totalorder %s14, 0
    %p110 = por %p108, %p109
    %p111 = scmp.ne.s32.totalorder %s97, %s98
    %p112 = scmp.eq.s32.totalorder %s15, 2
    %p113 = por %p111, %p112
    %p115 = scmp.ne.s32.totalorder %s98, %s114
    %p116 = scmp.eq.s32.totalorder %s15, 0
    %p117 = por %p115, %p116
    %s118 = ssub.s32 %s16, %s35
    %s119 = ssub.s32 %s17, %s31
    %s120 = sor.u32 %s118, %s119
    %p121 = scmp.eq.s32.totalorder %s120, 0
    %s123 = sadd.s32 %s122, 1
    %s124 = scalar_select %p121, %s122, %s123
    %p127 = pneg %p121
    %p128 = scmp.eq.s32.totalorder %s9, 2
    %p129 = por %p127, %p128
    %p130 = scmp.ne.s32.totalorder %s122, %s125
    %p131 = scmp.eq.s32.totalorder %s9, 0
    %p132 = por %p130, %p131
    %p133 = scmp.ne.s32.totalorder %s122, %s125
    %p134 = scmp.eq.s32.totalorder %s14, 2
    %p135 = por %p133, %p134
    %p136 = scmp.ne.s32.totalorder %s125, %s126
    %p137 = scmp.eq.s32.totalorder %s14, 0
    %p138 = por %p136, %p137
    %p139 = scmp.ne.s32.totalorder %s125, %s126
    %p140 = scmp.eq.s32.totalorder %s15, 2
    %p141 = por %p139, %p140
    %p143 = scmp.ne.s32.totalorder %s126, %s142
    %p144 = scmp.eq.s32.totalorder %s15, 0
    %p145 = por %p143, %p144
    %p146 = scmp.le.s32.totalorder 1, %s9
    %p147 = scmp.lt.s32.totalorder %s9, 4
    %p148 = pnand %p146, %p147
    %p149 = pneg %p148
    // Predicated region
    $region9: #{vit_forward.13} parent=5 // pred_check
      _
    $region10: #{vit_forward.13} parent=5 // pred_check_branch
      %151 = sbr.rel (%p148) target = $region12
    $region11: #{vit_forward.13} parent=5 // pred_region
      %s152 = ssub.s32 %s9, 1
      // Predicated region
      $region13: #{vit_forward.13} parent=11 // pred_check
        %p153 = pneg %p110
      $region14: #{vit_forward.13} parent=11 // pred_check_branch
        %155 = sbr.rel (%p153) target = $region16
      $region15: #{vit_forward.13} parent=11 // pred_region
        %p156 = scmp.lt.s32.totalorder %s20, 0
        %s157 = scalar_select %p156, %s20, 0
        %s158 = scalar_lea.vmem %s2, %s157
      $region16: #{vit_forward.13} parent=11 // pred_fallthru
        _
    $region12: #{vit_forward.13} parent=5 // pred_fallthru
      _
    %p159 = scmp.lt.s32.totalorder %s9, 3
    // Predicated region
    $region17: #{vit_forward.13} parent=5 // pred_check
      %p160 = pneg %p159
    $region18: #{vit_forward.13} parent=5 // pred_check_branch
      %162 = sbr.rel (%p160) target = $region20
    $region19: #{vit_forward.13} parent=5 // pred_region
      // Predicated region
      $region21: #{vit_forward.13} parent=19 // pred_check
        %p163 = pneg %p50
      $region22: #{vit_forward.13} parent=19 // pred_check_branch
        %165 = sbr.rel (%p163) target = $region24
      $region23: #{vit_forward.13} parent=19 // pred_region
        %s166 = smul.u32 2, %s18
        %p167 = scmp.lt.s32.totalorder %s16, 0
        %s168 = scalar_select %p167, %s16, 0
        %p169 = scmp.lt.s32.totalorder %s166, 5
        %s170 = scalar_select %p169, %s166, 5
        %s171 = smul.addr %s168, 6
        %s172 = sadd.s32 %s170, %s171
        %s173 = smul.addr %s172, 4
        %s174 = scalar_lea.vmem %s0, %s173
        %s175 = smul.u32 2, %s18
      $region24: #{vit_forward.13} parent=19 // pred_fallthru
        _
      // Predicated region
      $region25: #{vit_forward.13} parent=19 // pred_check
        %p176 = pneg %p78
      $region26: #{vit_forward.13} parent=19 // pred_check_branch
        %178 = sbr.rel (%p176) target = $region28
      $region27: #{vit_forward.13} parent=19 // pred_region
        %s179 = smul.u32 32, %s18
        %p180 = scmp.lt.s32.totalorder %s179, 95
        %s181 = scalar_select %p180, %s179, 95
        %p182 = scmp.lt.s32.totalorder %s17, 0
        %s183 = scalar_select %p182, %s17, 0
        %s184 = sadd.s32 %s183, %s181
        %s185 = smul.addr %s184, 4
        %s186 = scalar_lea.vmem %s1, %s185
        %s187 = smul.u32 32, %s18
      $region28: #{vit_forward.13} parent=19 // pred_fallthru
        _
    $region20: #{vit_forward.13} parent=5 // pred_fallthru
      _
    %p188 = scmp.le.s32.totalorder 1, %s9
    %p189 = scmp.lt.s32.totalorder %s9, 4
    %p190 = pnand %p188, %p189
    %p191 = pneg %p190
    // Predicated region
    $region29: #{vit_forward.13} parent=5 // pred_check
      _
    $region30: #{vit_forward.13} parent=5 // pred_check_branch
      %193 = sbr.rel (%p190) target = $region32
    $region31: #{vit_forward.13} parent=5 // pred_region
      %s194 = ssub.s32 %s9, 1
      %s195 = smul.u32 2, %s21
      %p196 = scmp.lt.s32.totalorder %s19, 0
      %s197 = scalar_select %p196, %s19, 0
      %p198 = scmp.lt.s32.totalorder %s195, 5
      %s199 = scalar_select %p198, %s195, 5
      %s200 = smul.addr %s197, 6
      %s201 = sadd.s32 %s199, %s200
      %s202 = smul.addr %s201, 4
      %s203 = scalar_lea.vmem %s0, %s202
      %p204 = pneg %p56
      %p205 = pneg %p53
      %s206 = smul.u32 32, %s21
      %p207 = scmp.lt.s32.totalorder %s206, 95
      %s208 = scalar_select %p207, %s206, 95
      %p209 = scmp.lt.s32.totalorder %s20, 0
      %s210 = scalar_select %p209, %s20, 0
      %s211 = sadd.s32 %s210, %s208
      %s212 = smul.addr %s211, 4
      %s213 = scalar_lea.vmem %s1, %s212
      %p214 = pneg %p84
      %p215 = pneg %p81
      %p216 = scmp.lt.s32.totalorder %s20, 0
      %s217 = scalar_select %p216, %s20, 0
      %s218 = scalar_lea.vmem %s2, %s217
      %p219 = pneg %p110
      %p220 = pneg %p107
      %p221 = pneg %p138
      %p222 = pneg %p135
      %p223 = scmp.lt.s32.totalorder %s19, 0
      %s224 = scalar_select %p223, %s19, 0
      %p225 = scmp.lt.s32.totalorder %s20, 0
      %s226 = scalar_select %p225, %s20, 0
      %s227 = sadd.s32 %s226, %s224
      %s228 = smul.addr %s227, 4
      %s229 = scalar_lea.vmem %s3, %s228
      %s230 = smul.u32 2, %s21
      %p231 = scmp.lt.s32.totalorder %s19, 0
      %s232 = scalar_select %p231, %s19, 0
      %p233 = scmp.lt.s32.totalorder %s230, 5
      %s234 = scalar_select %p233, %s230, 5
      %s235 = smul.addr %s232, 6
      %s236 = sadd.s32 %s234, %s235
      %s237 = smul.addr %s236, 4
      %s238 = scalar_lea.vmem %s0, %s237
      %s239 = smul.u32 2, %s21
      %s240 = smul.u32 32, %s21
      %p241 = scmp.lt.s32.totalorder %s240, 95
      %s242 = scalar_select %p241, %s240, 95
      %p243 = scmp.lt.s32.totalorder %s20, 0
      %s244 = scalar_select %p243, %s20, 0
      %s245 = sadd.s32 %s244, %s242
      %s246 = smul.addr %s245, 4
      %s247 = scalar_lea.vmem %s1, %s246
      %s248 = smul.u32 32, %s21
      %p249 = scmp.lt.s32.totalorder %s20, 0
      %s250 = scalar_select %p249, %s20, 0
      %s251 = scalar_lea.vmem %s2, %s250
      %p252 = scmp.lt.s32.totalorder %s19, 0
      %s253 = scalar_select %p252, %s19, 0
      %p254 = scmp.lt.s32.totalorder %s20, 0
      %s255 = scalar_select %p254, %s20, 0
      %s256 = sadd.s32 %s255, %s253
      %s257 = smul.addr %s256, 4
      %s258 = scalar_lea.vmem %s3, %s257
      %v260 = vld [vmem:[%s238] sm:$0xff]
      %v261 = vld [vmem:[%s247] sm:$0xf]
      %v262 = vld [vmem:[%s247 + $0x4] sm:$0xf]
      %v263 = vld [vmem:[%s247 + $0x8] sm:$0xf]
      %v264 = vld [vmem:[%s247 + $0xc] sm:$0xf]
      %v265 = vld [vmem:[%s247 + $0x10] sm:$0xf]
      %v266 = vld [vmem:[%s247 + $0x14] sm:$0xf]
      %v267 = vld [vmem:[%s247 + $0x18] sm:$0xf]
      %v268 = vld [vmem:[%s247 + $0x1c] sm:$0xf]
      %v269 = vld [vmem:[%s247 + $0x20] sm:$0xf]
      %v270 = vld [vmem:[%s247 + $0x24] sm:$0xf]
      %v271 = vld [vmem:[%s247 + $0x28] sm:$0xf]
      %v272 = vld [vmem:[%s247 + $0x2c] sm:$0xf]
      %v273 = vld [vmem:[%s247 + $0x30] sm:$0xf]
      %v274 = vld [vmem:[%s247 + $0x34] sm:$0xf]
      %v275 = vld [vmem:[%s247 + $0x38] sm:$0xf]
      %v276 = vld [vmem:[%s247 + $0x3c] sm:$0xf]
      %v277 = vld [vmem:[%s247 + $0x40] sm:$0xf]
      %v278 = vld [vmem:[%s247 + $0x44] sm:$0xf]
      %v279 = vld [vmem:[%s247 + $0x48] sm:$0xf]
      %v280 = vld [vmem:[%s247 + $0x4c] sm:$0xf]
      %v281 = vld [vmem:[%s247 + $0x50] sm:$0xf]
      %v282 = vld [vmem:[%s247 + $0x54] sm:$0xf]
      %v283 = vld [vmem:[%s247 + $0x58] sm:$0xf]
      %v284 = vld [vmem:[%s247 + $0x5c] sm:$0xf]
      %v285 = vld [vmem:[%s247 + $0x60] sm:$0xf]
      %v286 = vld [vmem:[%s247 + $0x64] sm:$0xf]
      %v287 = vld [vmem:[%s247 + $0x68] sm:$0xf]
      %v288 = vld [vmem:[%s247 + $0x6c] sm:$0xf]
      %v289 = vld [vmem:[%s247 + $0x70] sm:$0xf]
      %v290 = vld [vmem:[%s247 + $0x74] sm:$0xf]
      %v291 = vld [vmem:[%s247 + $0x78] sm:$0xf]
      %v292 = vld [vmem:[%s247 + $0x7c] sm:$0xf]
      %v294 = vunpack.c.l.b16 %v260
      %v295 = vunpack.c.h.b16 %v260
      %v296 = vpack.c.b16 %v294, %v294
      %v297 = vpack.c.b16 %v295, %v295
      %v332 = vunpack.c.l.b16 %v261
      %v333 = vunpack.c.l.b16 %v262
      %v334 = vunpack.c.l.b16 %v263
      %v335 = vunpack.c.l.b16 %v264
      %v336 = vunpack.c.l.b16 %v265
      %v337 = vunpack.c.l.b16 %v266
      %v338 = vunpack.c.l.b16 %v267
      %v339 = vunpack.c.l.b16 %v268
      %v340 = vunpack.c.l.b16 %v269
      %v341 = vunpack.c.l.b16 %v270
      %v342 = vunpack.c.l.b16 %v271
      %v343 = vunpack.c.l.b16 %v272
      %v344 = vunpack.c.l.b16 %v273
      %v345 = vunpack.c.l.b16 %v274
      %v346 = vunpack.c.l.b16 %v275
      %v347 = vunpack.c.l.b16 %v276
      %v348 = vunpack.c.l.b16 %v277
      %v349 = vunpack.c.l.b16 %v278
      %v350 = vunpack.c.l.b16 %v279
      %v351 = vunpack.c.l.b16 %v280
      %v352 = vunpack.c.l.b16 %v281
      %v353 = vunpack.c.l.b16 %v282
      %v354 = vunpack.c.l.b16 %v283
      %v355 = vunpack.c.l.b16 %v284
      %v356 = vunpack.c.l.b16 %v285
      %v357 = vunpack.c.l.b16 %v286
      %v358 = vunpack.c.l.b16 %v287
      %v359 = vunpack.c.l.b16 %v288
      %v360 = vunpack.c.l.b16 %v289
      %v361 = vunpack.c.l.b16 %v290
      %v362 = vunpack.c.l.b16 %v291
      %v363 = vunpack.c.l.b16 %v292
      %v364 = vpack.c.b16 %v333, %v332
      %v365 = vpack.c.b16 %v335, %v334
      %v366 = vpack.c.b16 %v337, %v336
      %v367 = vpack.c.b16 %v339, %v338
      %v368 = vpack.c.b16 %v341, %v340
      %v369 = vpack.c.b16 %v343, %v342
      %v370 = vpack.c.b16 %v345, %v344
      %v371 = vpack.c.b16 %v347, %v346
      %v372 = vpack.c.b16 %v349, %v348
      %v373 = vpack.c.b16 %v351, %v350
      %v374 = vpack.c.b16 %v353, %v352
      %v375 = vpack.c.b16 %v355, %v354
      %v376 = vpack.c.b16 %v357, %v356
      %v377 = vpack.c.b16 %v359, %v358
      %v378 = vpack.c.b16 %v361, %v360
      %v379 = vpack.c.b16 %v363, %v362
      %396 = vmatprep.subr.bf16.mxu0 0
      %397 = vmatpush1.bf16.msra.mxu0 %v364
      %398 = vmatprep.subr.bf16.mxu0 0
      %399 = vmatpush1.bf16.msra.mxu0 %v365
      %400 = vmatprep.subr.bf16.mxu0 0
      %401 = vmatpush1.bf16.msra.mxu0 %v366
      %402 = vmatprep.subr.bf16.mxu0 0
      %403 = vmatpush1.bf16.msra.mxu0 %v367
      %404 = vmatprep.subr.bf16.mxu0 0
      %405 = vmatpush1.bf16.msra.mxu0 %v368
      %406 = vmatprep.subr.bf16.mxu0 0
      %407 = vmatpush1.bf16.msra.mxu0 %v369
      %408 = vmatprep.subr.bf16.mxu0 0
      %409 = vmatpush1.bf16.msra.mxu0 %v370
      %410 = vmatprep.subr.bf16.mxu0 0
      %411 = vmatpush1.bf16.msra.mxu0 %v371
      %412 = vmatprep.subr.bf16.mxu0 0
      %413 = vmatpush1.bf16.msra.mxu0 %v372
      %414 = vmatprep.subr.bf16.mxu0 0
      %415 = vmatpush1.bf16.msra.mxu0 %v373
      %416 = vmatprep.subr.bf16.mxu0 0
      %417 = vmatpush1.bf16.msra.mxu0 %v374
      %418 = vmatprep.subr.bf16.mxu0 0
      %419 = vmatpush1.bf16.msra.mxu0 %v375
      %420 = vmatprep.subr.bf16.mxu0 0
      %421 = vmatpush1.bf16.msra.mxu0 %v376
      %422 = vmatprep.subr.bf16.mxu0 0
      %423 = vmatpush1.bf16.msra.mxu0 %v377
      %424 = vmatprep.subr.bf16.mxu0 0
      %425 = vmatpush1.bf16.msra.mxu0 %v378
      %426 = vmatprep.subr.bf16.mxu0 0
      %427 = vmatpush1.bf16.msra.mxu0 %v379
      %428 = vmatprep.mubr.bf16.mxu0 %v297
      %429 = vmatmul.mubr.bf16.gmra.mrb[0].mxu0 %v296
      %v430 = vpop.f32.mrb[0].mxu0
      %v431 = vadd.f32 0.0, %v430
      %v432 = vpop.f32.mrb[0].mxu0
      %v433 = vpop.f32.mrb[0].mxu0
      %v434 = vpop.f32.mrb[0].mxu0
      %435 = vdwg.mxu0
      %p436 = scmp.eq.s32.totalorder %s21, 0
      // Predicated region
      $region33: #{vit_forward.13} parent=31 // pred_check
        %p437 = pneg %p436
      $region34: #{vit_forward.13} parent=31 // pred_check_branch
        %439 = sbr.rel (%p437) target = $region36
      $region35: #{vit_forward.13} parent=31 // pred_region
        %vm440 = vcmask 523264
        %441 = vst.msk [vmem:[#allocation2] sm:$0xff] %vm440, 0.0
      $region36: #{vit_forward.13} parent=31 // pred_fallthru
        _
      %v442 = vld [vmem:[#allocation2] sm:$0xff]
      %v443 = vadd.f32 %v442, %v431
      %vm444 = vcmask 523264
      %445 = vst.msk [vmem:[#allocation2] sm:$0xff] %vm444, %v443
      %p446 = scmp.eq.s32.totalorder %s21, 2
      // Predicated region
      $region37: #{vit_forward.13} parent=31 // pred_check
        %p447 = pneg %p446
      $region38: #{vit_forward.13} parent=31 // pred_check_branch
        %449 = sbr.rel (%p447) target = $region40
      $region39: #{vit_forward.13} parent=31 // pred_region
        %v450 = vld [vmem:[#allocation2] sm:$0xff]
        %v451 = vld [vmem:[%s251] sm:$0x1]
        %v453 = vlaneseq
        %v454 = vshrl.u32 %v453, 7
        %v455 = vsub.s32 0, %v454
        %v456 = vrot.slane %v451, %v455
        %v458 = vadd.f32 %v450, %v456
        %v459 = vpack.c.bf16 %v458, %v458
        %vm460 = vcmask 519168
        %461 = vst.msk [vmem:[%s258] sm:$0xf] %vm460, %v459
      $region40: #{vit_forward.13} parent=31 // pred_fallthru
        _
      %p462 = scmp.lt.s32.totalorder %s19, 0
      %s463 = scalar_select %p462, %s19, 0
      %p464 = scmp.lt.s32.totalorder %s20, 0
      %s465 = scalar_select %p464, %s20, 0
      %s466 = sadd.s32 %s465, %s463
      %s467 = smul.addr %s466, 4
      %s468 = scalar_lea.vmem %s3, %s467
      // Predicated region
      $region41: #{vit_forward.13} parent=31 // pred_check
        %p469 = pneg %p135
      $region42: #{vit_forward.13} parent=31 // pred_check_branch
        %471 = sbr.rel (%p469) target = $region44
      $region43: #{vit_forward.13} parent=31 // pred_region
        _
      $region44: #{vit_forward.13} parent=31 // pred_fallthru
        _
      // Predicated region
      $region45: #{vit_forward.13} parent=31 // pred_check
        %p472 = pneg %p135
      $region46: #{vit_forward.13} parent=31 // pred_check_branch
        %474 = sbr.rel (%p472) target = $region48
      $region47: #{vit_forward.13} parent=31 // pred_region
        %p475 = scmp.lt.s32.totalorder %s19, 0
        %s476 = scalar_select %p475, %s19, 0
        %p477 = scmp.lt.s32.totalorder %s20, 0
        %s478 = scalar_select %p477, %s20, 0
        %s479 = sadd.s32 %s478, %s476
        %s480 = smul.addr %s479, 4
        %s481 = scalar_lea.vmem %s3, %s480
      $region48: #{vit_forward.13} parent=31 // pred_fallthru
        _
    $region32: #{vit_forward.13} parent=5 // pred_fallthru
      _
    %p482 = scmp.le.s32.totalorder 2, %s9
    // Predicated region
    $region49: #{vit_forward.13} parent=5 // pred_check
      %p483 = pneg %p482
    $region50: #{vit_forward.13} parent=5 // pred_check_branch
      %485 = sbr.rel (%p483) target = $region52
    $region51: #{vit_forward.13} parent=5 // pred_region
      %s486 = ssub.s32 %s9, 2
    $region52: #{vit_forward.13} parent=5 // pred_fallthru
      _
  $region6: #{vit_forward.13} parent=0 // loop_footer
    %s13 = sadd.s32 1, %s9
  $region7: #{vit_forward.13} parent=0 // loop_footer_branch
    %8 = sbr.rel target = $region3
  $region8: #{vit_forward.13} parent=0 // loop_exit
    _

// kernel: vit_forward.15
$region0: #{vit_forward.15}
  #allocation0 [shape = 'u32[]', space=smem, size = 0x4, offset = 0x4, fixed_abs, tag = 'smem constant byte address 0x4 - core index']
  #allocation1 [shape = 'u32[144,128]{1,0:T(1,128)}', space=vmem, size = 0x12000, scoped, tag = 'internal scratch']
  %s0 = inlined_call_operand.vmem [shape: bf16[12,32,16], index: 0, kind: input, shape index: {}, may-alias: {0,1,2}]
  %s1 = inlined_call_operand.vmem [shape: bf16[12,32,16], index: 1, kind: input, shape index: {}, may-alias: {0,1,2}]
  %s2 = inlined_call_operand.vmem [shape: bf16[12,32,16], index: 2, kind: input, shape index: {}, may-alias: {0,1,2}]
  %s3 = inlined_call_operand.vmem [shape: bf16[4,32,16], index: 3, kind: output, shape index: {}]
  %s4 = sld [smem:[#allocation0]]
  $region45: #{vit_forward.15} parent=0
    _
  %s6 = ssub.s32 1, %s4
  %s7 = scalar_select 0, %s6, %s4
  loop: start=0, step=1, limit=10
  $region2: #{vit_forward.15} parent=0 // loop_pre_header
    _
  $region3: #{vit_forward.15} parent=0 // loop_header
    %s9 = sphi 0, %s13
    %p10 = scmp.ge.s32.totalorder %s9, 10
    %s16 = sphi 0, %s28
    %s17 = sphi 0, %s24
    %s18 = sphi 0, %s16
    %s19 = sphi 0, %s17
    %s20 = sphi 0, %s18
    %s21 = sphi 0, %s19
    %s33 = sphi 0, %s35
    %s36 = sphi 0, %s33
    %s37 = sphi 0, %s36
    %s53 = sphi 0, %s37
    %s63 = sphi 0, %s65
    %s66 = sphi 0, %s63
    %s67 = sphi 0, %s66
    %s83 = sphi 0, %s67
    %s93 = sphi 0, %s95
    %s96 = sphi 0, %s93
    %s97 = sphi 0, %s96
    %s113 = sphi 0, %s97
    %s121 = sphi 0, %s123
    %s124 = sphi 0, %s121
    %s125 = sphi 0, %s124
    %s141 = sphi 0, %s125
  $region4: #{vit_forward.15} parent=0 // loop_header_branch
    %12 = sbr.rel (%p10) target = $region8
  $region5: #{vit_forward.15} parent=0 // loop_body
    %s14 = ssub.s32 %s9, 1
    %s15 = ssub.s32 %s9, 2
    %s22 = sadd.s32 1, %s17
    %p23 = scmp.ge.s32.totalorder %s22, 4
    %s24 = scalar_select %p23, 0, %s22
    %s25 = sadd.s32 1, %s16
    %s26 = scalar_select %p23, %s25, %s16
    %p27 = scmp.ge.s32.totalorder %s26, 2
    %s28 = scalar_select %p27, 0, %s26
    %s29 = ssub.s32 %s17, %s24
    %s30 = ssub.s32 %s16, %s28
    %s31 = sor.u32 %s29, %s30
    %p32 = scmp.eq.s32.totalorder %s31, 0
    %s34 = sadd.s32 %s33, 1
    %s35 = scalar_select %p32, %s33, %s34
    %p38 = pneg %p32
    %p39 = scmp.eq.s32.totalorder %s9, 7
    %p40 = por %p38, %p39
    %p41 = scmp.ne.s32.totalorder %s33, %s36
    %p42 = scmp.eq.s32.totalorder %s9, 0
    %p43 = por %p41, %p42
    %p44 = scmp.ne.s32.totalorder %s33, %s36
    %p45 = scmp.eq.s32.totalorder %s14, 7
    %p46 = por %p44, %p45
    %p47 = scmp.ne.s32.totalorder %s36, %s37
    %p48 = scmp.eq.s32.totalorder %s14, 0
    %p49 = por %p47, %p48
    %p50 = scmp.ne.s32.totalorder %s36, %s37
    %p51 = scmp.eq.s32.totalorder %s15, 7
    %p52 = por %p50, %p51
    %p54 = scmp.ne.s32.totalorder %s37, %s53
    %p55 = scmp.eq.s32.totalorder %s15, 0
    %p56 = por %p54, %p55
    %s57 = sadd.s32 %s17, 4
    %s58 = sadd.s32 %s24, 4
    %s59 = ssub.s32 %s57, %s58
    %s60 = ssub.s32 %s16, %s28
    %s61 = sor.u32 %s59, %s60
    %p62 = scmp.eq.s32.totalorder %s61, 0
    %s64 = sadd.s32 %s63, 1
    %s65 = scalar_select %p62, %s63, %s64
    %p68 = pneg %p62
    %p69 = scmp.eq.s32.totalorder %s9, 7
    %p70 = por %p68, %p69
    %p71 = scmp.ne.s32.totalorder %s63, %s66
    %p72 = scmp.eq.s32.totalorder %s9, 0
    %p73 = por %p71, %p72
    %p74 = scmp.ne.s32.totalorder %s63, %s66
    %p75 = scmp.eq.s32.totalorder %s14, 7
    %p76 = por %p74, %p75
    %p77 = scmp.ne.s32.totalorder %s66, %s67
    %p78 = scmp.eq.s32.totalorder %s14, 0
    %p79 = por %p77, %p78
    %p80 = scmp.ne.s32.totalorder %s66, %s67
    %p81 = scmp.eq.s32.totalorder %s15, 7
    %p82 = por %p80, %p81
    %p84 = scmp.ne.s32.totalorder %s67, %s83
    %p85 = scmp.eq.s32.totalorder %s15, 0
    %p86 = por %p84, %p85
    %s87 = sadd.s32 %s17, 8
    %s88 = sadd.s32 %s24, 8
    %s89 = ssub.s32 %s87, %s88
    %s90 = ssub.s32 %s16, %s28
    %s91 = sor.u32 %s89, %s90
    %p92 = scmp.eq.s32.totalorder %s91, 0
    %s94 = sadd.s32 %s93, 1
    %s95 = scalar_select %p92, %s93, %s94
    %p98 = pneg %p92
    %p99 = scmp.eq.s32.totalorder %s9, 7
    %p100 = por %p98, %p99
    %p101 = scmp.ne.s32.totalorder %s93, %s96
    %p102 = scmp.eq.s32.totalorder %s9, 0
    %p103 = por %p101, %p102
    %p104 = scmp.ne.s32.totalorder %s93, %s96
    %p105 = scmp.eq.s32.totalorder %s14, 7
    %p106 = por %p104, %p105
    %p107 = scmp.ne.s32.totalorder %s96, %s97
    %p108 = scmp.eq.s32.totalorder %s14, 0
    %p109 = por %p107, %p108
    %p110 = scmp.ne.s32.totalorder %s96, %s97
    %p111 = scmp.eq.s32.totalorder %s15, 7
    %p112 = por %p110, %p111
    %p114 = scmp.ne.s32.totalorder %s97, %s113
    %p115 = scmp.eq.s32.totalorder %s15, 0
    %p116 = por %p114, %p115
    %s117 = ssub.s32 %s17, %s24
    %s118 = ssub.s32 %s16, %s28
    %s119 = sor.u32 %s117, %s118
    %p120 = scmp.eq.s32.totalorder %s119, 0
    %s122 = sadd.s32 %s121, 1
    %s123 = scalar_select %p120, %s121, %s122
    %p126 = pneg %p120
    %p127 = scmp.eq.s32.totalorder %s9, 7
    %p128 = por %p126, %p127
    %p129 = scmp.ne.s32.totalorder %s121, %s124
    %p130 = scmp.eq.s32.totalorder %s9, 0
    %p131 = por %p129, %p130
    %p132 = scmp.ne.s32.totalorder %s121, %s124
    %p133 = scmp.eq.s32.totalorder %s14, 7
    %p134 = por %p132, %p133
    %p135 = scmp.ne.s32.totalorder %s124, %s125
    %p136 = scmp.eq.s32.totalorder %s14, 0
    %p137 = por %p135, %p136
    %p138 = scmp.ne.s32.totalorder %s124, %s125
    %p139 = scmp.eq.s32.totalorder %s15, 7
    %p140 = por %p138, %p139
    %p142 = scmp.ne.s32.totalorder %s125, %s141
    %p143 = scmp.eq.s32.totalorder %s15, 0
    %p144 = por %p142, %p143
    %p145 = scmp.le.s32.totalorder 1, %s9
    %p146 = scmp.lt.s32.totalorder %s9, 9
    %p147 = pnand %p145, %p146
    %p148 = pneg %p147
    // Predicated region
    $region9: #{vit_forward.15} parent=5 // pred_check
      _
    $region10: #{vit_forward.15} parent=5 // pred_check_branch
      %150 = sbr.rel (%p147) target = $region12
    $region11: #{vit_forward.15} parent=5 // pred_region
      %s151 = ssub.s32 %s9, 1
    $region12: #{vit_forward.15} parent=5 // pred_fallthru
      _
    %p152 = scmp.lt.s32.totalorder %s9, 8
    // Predicated region
    $region13: #{vit_forward.15} parent=5 // pred_check
      %p153 = pneg %p152
    $region14: #{vit_forward.15} parent=5 // pred_check_branch
      %155 = sbr.rel (%p153) target = $region16
    $region15: #{vit_forward.15} parent=5 // pred_region
      // Predicated region
      $region17: #{vit_forward.15} parent=15 // pred_check
        %p156 = pneg %p43
      $region18: #{vit_forward.15} parent=15 // pred_check_branch
        %158 = sbr.rel (%p156) target = $region20
      $region19: #{vit_forward.15} parent=15 // pred_region
        %s159 = smul.u32 2, %s16
        %p160 = scmp.lt.s32.totalorder %s17, 11
        %s161 = scalar_select %p160, %s17, 11
        %p162 = scmp.lt.s32.totalorder %s159, 3
        %s163 = scalar_select %p162, %s159, 3
        %s164 = smul.addr %s161, 4
        %s165 = sadd.s32 %s163, %s164
        %s166 = smul.addr %s165, 4
        %s167 = scalar_lea.vmem %s0, %s166
        %s168 = smul.u32 2, %s16
      $region20: #{vit_forward.15} parent=15 // pred_fallthru
        _
      // Predicated region
      $region21: #{vit_forward.15} parent=15 // pred_check
        %p169 = pneg %p73
      $region22: #{vit_forward.15} parent=15 // pred_check_branch
        %171 = sbr.rel (%p169) target = $region24
      $region23: #{vit_forward.15} parent=15 // pred_region
        %s172 = sadd.s32 %s17, 4
        %s173 = smul.u32 2, %s16
        %p174 = scmp.lt.s32.totalorder %s172, 11
        %s175 = scalar_select %p174, %s172, 11
        %p176 = scmp.lt.s32.totalorder %s173, 3
        %s177 = scalar_select %p176, %s173, 3
        %s178 = smul.addr %s175, 4
        %s179 = sadd.s32 %s177, %s178
        %s180 = smul.addr %s179, 4
        %s181 = scalar_lea.vmem %s1, %s180
        %s182 = sadd.s32 %s17, 4
        %s183 = smul.u32 2, %s16
      $region24: #{vit_forward.15} parent=15 // pred_fallthru
        _
      // Predicated region
      $region25: #{vit_forward.15} parent=15 // pred_check
        %p184 = pneg %p103
      $region26: #{vit_forward.15} parent=15 // pred_check_branch
        %186 = sbr.rel (%p184) target = $region28
      $region27: #{vit_forward.15} parent=15 // pred_region
        %s187 = sadd.s32 %s17, 8
        %s188 = smul.u32 2, %s16
        %p189 = scmp.lt.s32.totalorder %s187, 11
        %s190 = scalar_select %p189, %s187, 11
        %p191 = scmp.lt.s32.totalorder %s188, 3
        %s192 = scalar_select %p191, %s188, 3
        %s193 = smul.addr %s190, 4
        %s194 = sadd.s32 %s192, %s193
        %s195 = smul.addr %s194, 4
        %s196 = scalar_lea.vmem %s2, %s195
        %s197 = sadd.s32 %s17, 8
        %s198 = smul.u32 2, %s16
      $region28: #{vit_forward.15} parent=15 // pred_fallthru
        _
    $region16: #{vit_forward.15} parent=5 // pred_fallthru
      _
    %p199 = scmp.le.s32.totalorder 1, %s9
    %p200 = scmp.lt.s32.totalorder %s9, 9
    %p201 = pnand %p199, %p200
    %p202 = pneg %p201
    // Predicated region
    $region29: #{vit_forward.15} parent=5 // pred_check
      _
    $region30: #{vit_forward.15} parent=5 // pred_check_branch
      %204 = sbr.rel (%p201) target = $region32
    $region31: #{vit_forward.15} parent=5 // pred_region
      %s205 = ssub.s32 %s9, 1
      %s206 = smul.u32 2, %s18
      %p207 = scmp.lt.s32.totalorder %s19, 11
      %s208 = scalar_select %p207, %s19, 11
      %p209 = scmp.lt.s32.totalorder %s206, 3
      %s210 = scalar_select %p209, %s206, 3
      %s211 = smul.addr %s208, 4
      %s212 = sadd.s32 %s210, %s211
      %s213 = smul.addr %s212, 4
      %s214 = scalar_lea.vmem %s0, %s213
      %p215 = pneg %p49
      %p216 = pneg %p46
      %s217 = sadd.s32 %s19, 4
      %s218 = smul.u32 2, %s18
      %p219 = scmp.lt.s32.totalorder %s217, 11
      %s220 = scalar_select %p219, %s217, 11
      %p221 = scmp.lt.s32.totalorder %s218, 3
      %s222 = scalar_select %p221, %s218, 3
      %s223 = smul.addr %s220, 4
      %s224 = sadd.s32 %s222, %s223
      %s225 = smul.addr %s224, 4
      %s226 = scalar_lea.vmem %s1, %s225
      %p227 = pneg %p79
      %p228 = pneg %p76
      %s229 = sadd.s32 %s19, 8
      %s230 = smul.u32 2, %s18
      %p231 = scmp.lt.s32.totalorder %s229, 11
      %s232 = scalar_select %p231, %s229, 11
      %p233 = scmp.lt.s32.totalorder %s230, 3
      %s234 = scalar_select %p233, %s230, 3
      %s235 = smul.addr %s232, 4
      %s236 = sadd.s32 %s234, %s235
      %s237 = smul.addr %s236, 4
      %s238 = scalar_lea.vmem %s2, %s237
      %p239 = pneg %p109
      %p240 = pneg %p106
      %p241 = pneg %p137
      %p242 = pneg %p134
      %s243 = smul.u32 2, %s18
      %p244 = scmp.lt.s32.totalorder %s19, 3
      %s245 = scalar_select %p244, %s19, 3
      %p246 = scmp.lt.s32.totalorder %s243, 3
      %s247 = scalar_select %p246, %s243, 3
      %s248 = smul.addr %s245, 4
      %s249 = sadd.s32 %s247, %s248
      %s250 = smul.addr %s249, 4
      %s251 = scalar_lea.vmem %s3, %s250
      %s252 = smul.u32 2, %s18
      %p253 = scmp.lt.s32.totalorder %s19, 11
      %s254 = scalar_select %p253, %s19, 11
      %p255 = scmp.lt.s32.totalorder %s252, 3
      %s256 = scalar_select %p255, %s252, 3
      %s257 = smul.addr %s254, 4
      %s258 = sadd.s32 %s256, %s257
      %s259 = smul.addr %s258, 4
      %s260 = scalar_lea.vmem %s0, %s259
      %s261 = smul.u32 2, %s18
      %s262 = sadd.s32 %s19, 4
      %s263 = smul.u32 2, %s18
      %p264 = scmp.lt.s32.totalorder %s262, 11
      %s265 = scalar_select %p264, %s262, 11
      %p266 = scmp.lt.s32.totalorder %s263, 3
      %s267 = scalar_select %p266, %s263, 3
      %s268 = smul.addr %s265, 4
      %s269 = sadd.s32 %s267, %s268
      %s270 = smul.addr %s269, 4
      %s271 = scalar_lea.vmem %s1, %s270
      %s272 = sadd.s32 %s19, 4
      %s273 = smul.u32 2, %s18
      %s274 = sadd.s32 %s19, 8
      %s275 = smul.u32 2, %s18
      %p276 = scmp.lt.s32.totalorder %s274, 11
      %s277 = scalar_select %p276, %s274, 11
      %p278 = scmp.lt.s32.totalorder %s275, 3
      %s279 = scalar_select %p278, %s275, 3
      %s280 = smul.addr %s277, 4
      %s281 = sadd.s32 %s279, %s280
      %s282 = smul.addr %s281, 4
      %s283 = scalar_lea.vmem %s2, %s282
      %s284 = sadd.s32 %s19, 8
      %s285 = smul.u32 2, %s18
      %s286 = smul.u32 2, %s18
      %p287 = scmp.lt.s32.totalorder %s19, 3
      %s288 = scalar_select %p287, %s19, 3
      %p289 = scmp.lt.s32.totalorder %s286, 3
      %s290 = scalar_select %p289, %s286, 3
      %s291 = smul.addr %s288, 4
      %s292 = sadd.s32 %s290, %s291
      %s293 = smul.addr %s292, 4
      %s294 = scalar_lea.vmem %s3, %s293
      %s295 = smul.u32 2, %s18
      %v297 = vld [vmem:[%s260] sm:$0xf]
      %v298 = vld [vmem:[%s260 + $0x4] sm:$0xf]
      %v299 = vld [vmem:[%s271] sm:$0xf]
      %v300 = vld [vmem:[%s271 + $0x4] sm:$0xf]
      %v301 = vld [vmem:[%s283] sm:$0xf]
      %v302 = vld [vmem:[%s283 + $0x4] sm:$0xf]
      %v305 = vunpack.c.l.b16 %v297
      %v306 = vunpack.c.l.b16 %v298
      %v307 = vpack.c.b16 %v306, %v305
      %v310 = vunpack.c.l.b16 %v299
      %v311 = vunpack.c.l.b16 %v300
      %v312 = vpack.c.b16 %v311, %v310
      %vm313 = vcmask 130048
      %v315 = vsel %vm313, %v307, 0
      %v318 = vsel %vm313, %v312, 0
      %320 = vmatprep.subr.bf16.mxu0 0
      %321 = vmatpush1.bf16.xpose.msra.mxu0 %v318
      %322 = vmatprep.subr.bf16.mxu0 0
      %323 = vmatpush1.bf16.xpose.msra.mxu0 0
      %324 = vmatprep.subr.bf16.mxu0 0
      %325 = vmatpush1.bf16.xpose.msra.mxu0 0
      %326 = vmatprep.subr.bf16.mxu0 0
      %327 = vmatpush1.bf16.xpose.msra.mxu0 0
      %328 = vmatprep.subr.bf16.mxu0 0
      %329 = vmatpush1.bf16.xpose.msra.mxu0 0
      %330 = vmatprep.subr.bf16.mxu0 0
      %331 = vmatpush1.bf16.xpose.msra.mxu0 0
      %332 = vmatprep.subr.bf16.mxu0 0
      %333 = vmatpush1.bf16.xpose.msra.mxu0 0
      %334 = vmatprep.subr.bf16.mxu0 0
      %335 = vmatpush1.bf16.xpose.msra.mxu0 0
      %336 = vmatprep.subr.bf16.mxu0 0
      %337 = vmatpush1.bf16.xpose.msra.mxu0 0
      %338 = vmatprep.subr.bf16.mxu0 0
      %339 = vmatpush1.bf16.xpose.msra.mxu0 0
      %340 = vmatprep.subr.bf16.mxu0 0
      %341 = vmatpush1.bf16.xpose.msra.mxu0 0
      %342 = vmatprep.subr.bf16.mxu0 0
      %343 = vmatpush1.bf16.xpose.msra.mxu0 0
      %344 = vmatprep.subr.bf16.mxu0 0
      %345 = vmatpush1.bf16.xpose.msra.mxu0 0
      %346 = vmatprep.subr.bf16.mxu0 0
      %347 = vmatpush1.bf16.xpose.msra.mxu0 0
      %348 = vmatprep.subr.bf16.mxu0 0
      %349 = vmatpush1.bf16.xpose.msra.mxu0 0
      %350 = vmatprep.subr.bf16.mxu0 0
      %351 = vmatpush1.bf16.xpose.msra.mxu0 0
      %352 = vmatprep.mubr.bf16.mxu0 0
      %353 = vmatmul.mubr.bf16.gmra.mrb[0].mxu0 %v315
      %v354 = vpop.f32.mrb[0].mxu0
      %v355 = vadd.f32 0.0, %v354
      %v356 = vpop.f32.mrb[0].mxu0
      %v357 = vpop.f32.mrb[0].mxu0
      %v358 = vadd.f32 0.0, %v357
      %v359 = vpop.f32.mrb[0].mxu0
      %360 = vdwg.mxu0
      %v361 = vlaneseq
      %v362 = vand.u32 %v361, 127
      %vm363 = vcmp.lt.s32.totalorder %v362, 5
      %v364 = vsel %vm363, 1, 0
      %vm365 = vcmp.eq.s32.totalorder %v364, 1
      %v366 = vsel %vm365, %v355, -1e+30
      %v367 = vsel %vm365, %v358, -1e+30
      %v368 = vsel %vm313, %v366, -inf
      %369 = vmax.xlane.f32.xlu0 %v368
      %v370 = vpop.xlane.xlu0 %369
      %v371 = vsel %vm313, %v367, -inf
      %372 = vmax.xlane.f32.xlu0 %v371
      %v373 = vpop.xlane.xlu0 %372
      %v374 = vsub.f32 %v366, %v370
      %v375 = vsub.f32 %v367, %v373
      %v376 = vmul.f32 %v374, 1.442695
      %v377 = vpow.pop %v376
      %v378 = vmul.f32 %v375, 1.442695
      %v379 = vpow.pop %v378
      %v380 = vsel %vm313, %v377, 0.0
      %381 = vadd.xlane.f32.xlu0 %v380
      %v382 = vpop.xlane.xlu0 %381
      %v383 = vsel %vm313, %v379, 0.0
      %384 = vadd.xlane.f32.xlu0 %v383
      %v385 = vpop.xlane.xlu0 %384
      %v386 = vrcp.pop %v382
      %v387 = vrcp.pop %v385
      %v388 = vmul.f32 %v377, %v386
      %v389 = vmul.f32 %v379, %v387
      %v390 = vpack.c.bf16 %v389, %v388
      %v393 = vunpack.c.l.b16 %v301
      %v394 = vunpack.c.l.b16 %v302
      %v395 = vpack.c.b16 %v394, %v393
      %v398 = vsel %vm313, %v390, 0
      %400 = vmatprep.subr.bf16.mxu0 0
      %401 = vmatpush1.bf16.msra.mxu0 %v395
      %402 = vmatprep.subr.bf16.mxu0 0
      %403 = vmatpush1.bf16.msra.mxu0 0
      %404 = vmatprep.subr.bf16.mxu0 0
      %405 = vmatpush1.bf16.msra.mxu0 0
      %406 = vmatprep.subr.bf16.mxu0 0
      %407 = vmatpush1.bf16.msra.mxu0 0
      %408 = vmatprep.subr.bf16.mxu0 0
      %409 = vmatpush1.bf16.msra.mxu0 0
      %410 = vmatprep.subr.bf16.mxu0 0
      %411 = vmatpush1.bf16.msra.mxu0 0
      %412 = vmatprep.subr.bf16.mxu0 0
      %413 = vmatpush1.bf16.msra.mxu0 0
      %414 = vmatprep.subr.bf16.mxu0 0
      %415 = vmatpush1.bf16.msra.mxu0 0
      %416 = vmatprep.subr.bf16.mxu0 0
      %417 = vmatpush1.bf16.msra.mxu0 0
      %418 = vmatprep.subr.bf16.mxu0 0
      %419 = vmatpush1.bf16.msra.mxu0 0
      %420 = vmatprep.subr.bf16.mxu0 0
      %421 = vmatpush1.bf16.msra.mxu0 0
      %422 = vmatprep.subr.bf16.mxu0 0
      %423 = vmatpush1.bf16.msra.mxu0 0
      %424 = vmatprep.subr.bf16.mxu0 0
      %425 = vmatpush1.bf16.msra.mxu0 0
      %426 = vmatprep.subr.bf16.mxu0 0
      %427 = vmatpush1.bf16.msra.mxu0 0
      %428 = vmatprep.subr.bf16.mxu0 0
      %429 = vmatpush1.bf16.msra.mxu0 0
      %430 = vmatprep.subr.bf16.mxu0 0
      %431 = vmatpush1.bf16.msra.mxu0 0
      %432 = vmatprep.mubr.bf16.mxu0 0
      %433 = vmatmul.mubr.bf16.gmra.mrb[0].mxu0 %v398
      %v434 = vpop.f32.mrb[0].mxu0
      %v435 = vadd.f32 0.0, %v434
      %v436 = vpop.f32.mrb[0].mxu0
      %v437 = vpop.f32.mrb[0].mxu0
      %v438 = vadd.f32 0.0, %v437
      %v439 = vpop.f32.mrb[0].mxu0
      %440 = vdwg.mxu0
      %v441 = vpack.c.bf16 %v438, %v435
      %v443 = vunpack.c.l.b16 %v441
      %v444 = vunpack.c.h.b16 %v441
      %v445 = vpack.c.b16 %v443, %v443
      %v446 = vpack.c.b16 %v444, %v444
      %vm449 = vcmask 125952
      %450 = vst.msk [vmem:[%s294] sm:$0xf] %vm449, %v445
      %451 = vst.msk [vmem:[%s294 + $0x4] sm:$0xf] %vm449, %v446
      %s452 = smul.u32 2, %s18
      %p453 = scmp.lt.s32.totalorder %s19, 3
      %s454 = scalar_select %p453, %s19, 3
      %p455 = scmp.lt.s32.totalorder %s452, 3
      %s456 = scalar_select %p455, %s452, 3
      %s457 = smul.addr %s454, 4
      %s458 = sadd.s32 %s456, %s457
      %s459 = smul.addr %s458, 4
      %s460 = scalar_lea.vmem %s3, %s459
      // Predicated region
      $region33: #{vit_forward.15} parent=31 // pred_check
        %p461 = pneg %p134
      $region34: #{vit_forward.15} parent=31 // pred_check_branch
        %463 = sbr.rel (%p461) target = $region36
      $region35: #{vit_forward.15} parent=31 // pred_region
        %s464 = smul.u32 2, %s18
      $region36: #{vit_forward.15} parent=31 // pred_fallthru
        _
    $region32: #{vit_forward.15} parent=5 // pred_fallthru
      _
    %p465 = scmp.le.s32.totalorder 2, %s9
    // Predicated region
    $region37: #{vit_forward.15} parent=5 // pred_check
      %p466 = pneg %p465
    $region38: #{vit_forward.15} parent=5 // pred_check_branch
      %468 = sbr.rel (%p466) target = $region40
    $region39: #{vit_forward.15} parent=5 // pred_region
      %s469 = ssub.s32 %s9, 2
      // Predicated region
      $region41: #{vit_forward.15} parent=39 // pred_check
        %p470 = pneg %p140
      $region42: #{vit_forward.15} parent=39 // pred_check_branch
        %472 = sbr.rel (%p470) target = $region44
      $region43: #{vit_forward.15} parent=39 // pred_region
        %s473 = smul.u32 2, %s20
        %p474 = scmp.lt.s32.totalorder %s21, 3
        %s475 = scalar_select %p474, %s21, 3
        %p476 = scmp.lt.s32.totalorder %s473, 3
        %s477 = scalar_select %p476, %s473, 3
        %s478 = smul.addr %s475, 4
        %s479 = sadd.s32 %s477, %s478
        %s480 = smul.addr %s479, 4
        %s481 = scalar_lea.vmem %s3, %s480
      $region44: #{vit_forward.15} parent=39 // pred_fallthru
        _
    $region40: #{vit_forward.15} parent=5 // pred_fallthru
      _
  $region6: #{vit_forward.15} parent=0 // loop_footer
    %s13 = sadd.s32 1, %s9
  $region7: #{vit_forward.15} parent=0 // loop_footer_branch
    %8 = sbr.rel target = $region3
  $region8: #{vit_forward.15} parent=0 // loop_exit
    _

// kernel: vit_forward.14
$region0: #{vit_forward.14}
  #allocation0 [shape = 'u32[]', space=smem, size = 0x4, offset = 0x4, fixed_abs, tag = 'smem constant byte address 0x4 - core index']
  #allocation1 [shape = 'u32[144,128]{1,0:T(1,128)}', space=vmem, size = 0x12000, scoped, tag = 'internal scratch']
  #allocation2 [shape = 'bf16[32,64]{1,0:T(16,128)(2,1)}', space=vmem, size = 0x2000, scoped, tag = 'scratch operand']
  %s0 = inlined_call_operand.vmem [shape: bf16[32,64], index: 0, kind: input, shape index: {}]
  %s1 = inlined_call_operand.vmem [shape: f32[1,64], index: 1, kind: input, shape index: {}]
  %s2 = inlined_call_operand.vmem [shape: f32[1,64], index: 2, kind: input, shape index: {}]
  %s3 = inlined_call_operand.vmem [shape: bf16[12,64,16], index: 3, kind: input, shape index: {}]
  %s4 = inlined_call_operand.vmem [shape: f32[12,1,16], index: 4, kind: input, shape index: {}]
  %s5 = inlined_call_operand.vmem [shape: bf16[12,32,16], index: 5, kind: output, shape index: {}]
  %s6 = sld [smem:[#allocation0]]
  $region57: #{vit_forward.14} parent=0
    _
  %s8 = ssub.s32 1, %s6
  %s9 = scalar_select 0, %s8, %s6
  loop: start=0, step=1, limit=14
  $region2: #{vit_forward.14} parent=0 // loop_pre_header
    _
  $region3: #{vit_forward.14} parent=0 // loop_header
    %s11 = sphi 0, %s15
    %p12 = scmp.ge.s32.totalorder %s11, 14
    %s18 = sphi 0, %s30
    %s19 = sphi 0, %s26
    %s20 = sphi 0, %s18
    %s21 = sphi 0, %s19
    %s22 = sphi 0, %s20
    %s23 = sphi 0, %s21
    %s33 = sphi 0, %s35
    %s36 = sphi 0, %s33
    %s37 = sphi 0, %s36
    %s53 = sphi 0, %s37
    %s57 = sphi 0, %s57
    %s59 = sphi 0, %s57
    %s60 = sphi 0, %s59
    %s74 = sphi 0, %s60
    %s78 = sphi 0, %s78
    %s80 = sphi 0, %s78
    %s81 = sphi 0, %s80
    %s95 = sphi 0, %s81
    %s101 = sphi 0, %s103
    %s104 = sphi 0, %s101
    %s105 = sphi 0, %s104
    %s121 = sphi 0, %s105
    %s127 = sphi 0, %s129
    %s130 = sphi 0, %s127
    %s131 = sphi 0, %s130
    %s147 = sphi 0, %s131
    %s155 = sphi 0, %s157
    %s158 = sphi 0, %s155
    %s159 = sphi 0, %s158
    %s175 = sphi 0, %s159
  $region4: #{vit_forward.14} parent=0 // loop_header_branch
    %14 = sbr.rel (%p12) target = $region8
  $region5: #{vit_forward.14} parent=0 // loop_body
    %s16 = ssub.s32 %s11, 1
    %s17 = ssub.s32 %s11, 2
    %s24 = sadd.s32 1, %s19
    %p25 = scmp.ge.s32.totalorder %s24, 12
    %s26 = scalar_select %p25, 0, %s24
    %s27 = sadd.s32 1, %s18
    %s28 = scalar_select %p25, %s27, %s18
    %p29 = scmp.ge.s32.totalorder %s28, 1
    %s30 = scalar_select %p29, 0, %s28
    %s31 = ssub.s32 %s18, %s30
    %p32 = scmp.eq.s32.totalorder %s31, 0
    %s34 = sadd.s32 %s33, 1
    %s35 = scalar_select %p32, %s33, %s34
    %p38 = pneg %p32
    %p39 = scmp.eq.s32.totalorder %s11, 11
    %p40 = por %p38, %p39
    %p41 = scmp.ne.s32.totalorder %s33, %s36
    %p42 = scmp.eq.s32.totalorder %s11, 0
    %p43 = por %p41, %p42
    %p44 = scmp.ne.s32.totalorder %s33, %s36
    %p45 = scmp.eq.s32.totalorder %s16, 11
    %p46 = por %p44, %p45
    %p47 = scmp.ne.s32.totalorder %s36, %s37
    %p48 = scmp.eq.s32.totalorder %s16, 0
    %p49 = por %p47, %p48
    %p50 = scmp.ne.s32.totalorder %s36, %s37
    %p51 = scmp.eq.s32.totalorder %s17, 11
    %p52 = por %p50, %p51
    %p54 = scmp.ne.s32.totalorder %s37, %s53
    %p55 = scmp.eq.s32.totalorder %s17, 0
    %p56 = por %p54, %p55
    %s58 = sadd.s32 %s57, 1
    %p61 = scmp.eq.s32.totalorder %s11, 11
    %p62 = scmp.ne.s32.totalorder %s57, %s59
    %p63 = scmp.eq.s32.totalorder %s11, 0
    %p64 = por %p62, %p63
    %p65 = scmp.ne.s32.totalorder %s57, %s59
    %p66 = scmp.eq.s32.totalorder %s16, 11
    %p67 = por %p65, %p66
    %p68 = scmp.ne.s32.totalorder %s59, %s60
    %p69 = scmp.eq.s32.totalorder %s16, 0
    %p70 = por %p68, %p69
    %p71 = scmp.ne.s32.totalorder %s59, %s60
    %p72 = scmp.eq.s32.totalorder %s17, 11
    %p73 = por %p71, %p72
    %p75 = scmp.ne.s32.totalorder %s60, %s74
    %p76 = scmp.eq.s32.totalorder %s17, 0
    %p77 = por %p75, %p76
    %s79 = sadd.s32 %s78, 1
    %p82 = scmp.eq.s32.totalorder %s11, 11
    %p83 = scmp.ne.s32.totalorder %s78, %s80
    %p84 = scmp.eq.s32.totalorder %s11, 0
    %p85 = por %p83, %p84
    %p86 = scmp.ne.s32.totalorder %s78, %s80
    %p87 = scmp.eq.s32.totalorder %s16, 11
    %p88 = por %p86, %p87
    %p89 = scmp.ne.s32.totalorder %s80, %s81
    %p90 = scmp.eq.s32.totalorder %s16, 0
    %p91 = por %p89, %p90
    %p92 = scmp.ne.s32.totalorder %s80, %s81
    %p93 = scmp.eq.s32.totalorder %s17, 11
    %p94 = por %p92, %p93
    %p96 = scmp.ne.s32.totalorder %s81, %s95
    %p97 = scmp.eq.s32.totalorder %s17, 0
    %p98 = por %p96, %p97
    %s99 = ssub.s32 %s19, %s26
    %p100 = scmp.eq.s32.totalorder %s99, 0
    %s102 = sadd.s32 %s101, 1
    %s103 = scalar_select %p100, %s101, %s102
    %p106 = pneg %p100
    %p107 = scmp.eq.s32.totalorder %s11, 11
    %p108 = por %p106, %p107
    %p109 = scmp.ne.s32.totalorder %s101, %s104
    %p110 = scmp.eq.s32.totalorder %s11, 0
    %p111 = por %p109, %p110
    %p112 = scmp.ne.s32.totalorder %s101, %s104
    %p113 = scmp.eq.s32.totalorder %s16, 11
    %p114 = por %p112, %p113
    %p115 = scmp.ne.s32.totalorder %s104, %s105
    %p116 = scmp.eq.s32.totalorder %s16, 0
    %p117 = por %p115, %p116
    %p118 = scmp.ne.s32.totalorder %s104, %s105
    %p119 = scmp.eq.s32.totalorder %s17, 11
    %p120 = por %p118, %p119
    %p122 = scmp.ne.s32.totalorder %s105, %s121
    %p123 = scmp.eq.s32.totalorder %s17, 0
    %p124 = por %p122, %p123
    %s125 = ssub.s32 %s19, %s26
    %p126 = scmp.eq.s32.totalorder %s125, 0
    %s128 = sadd.s32 %s127, 1
    %s129 = scalar_select %p126, %s127, %s128
    %p132 = pneg %p126
    %p133 = scmp.eq.s32.totalorder %s11, 11
    %p134 = por %p132, %p133
    %p135 = scmp.ne.s32.totalorder %s127, %s130
    %p136 = scmp.eq.s32.totalorder %s11, 0
    %p137 = por %p135, %p136
    %p138 = scmp.ne.s32.totalorder %s127, %s130
    %p139 = scmp.eq.s32.totalorder %s16, 11
    %p140 = por %p138, %p139
    %p141 = scmp.ne.s32.totalorder %s130, %s131
    %p142 = scmp.eq.s32.totalorder %s16, 0
    %p143 = por %p141, %p142
    %p144 = scmp.ne.s32.totalorder %s130, %s131
    %p145 = scmp.eq.s32.totalorder %s17, 11
    %p146 = por %p144, %p145
    %p148 = scmp.ne.s32.totalorder %s131, %s147
    %p149 = scmp.eq.s32.totalorder %s17, 0
    %p150 = por %p148, %p149
    %s151 = ssub.s32 %s19, %s26
    %s152 = ssub.s32 %s18, %s30
    %s153 = sor.u32 %s151, %s152
    %p154 = scmp.eq.s32.totalorder %s153, 0
    %s156 = sadd.s32 %s155, 1
    %s157 = scalar_select %p154, %s155, %s156
    %p160 = pneg %p154
    %p161 = scmp.eq.s32.totalorder %s11, 11
    %p162 = por %p160, %p161
    %p163 = scmp.ne.s32.totalorder %s155, %s158
    %p164 = scmp.eq.s32.totalorder %s11, 0
    %p165 = por %p163, %p164
    %p166 = scmp.ne.s32.totalorder %s155, %s158
    %p167 = scmp.eq.s32.totalorder %s16, 11
    %p168 = por %p166, %p167
    %p169 = scmp.ne.s32.totalorder %s158, %s159
    %p170 = scmp.eq.s32.totalorder %s16, 0
    %p171 = por %p169, %p170
    %p172 = scmp.ne.s32.totalorder %s158, %s159
    %p173 = scmp.eq.s32.totalorder %s17, 11
    %p174 = por %p172, %p173
    %p176 = scmp.ne.s32.totalorder %s159, %s175
    %p177 = scmp.eq.s32.totalorder %s17, 0
    %p178 = por %p176, %p177
    %p179 = scmp.le.s32.totalorder 1, %s11
    %p180 = scmp.lt.s32.totalorder %s11, 13
    %p181 = pnand %p179, %p180
    %p182 = pneg %p181
    // Predicated region
    $region9: #{vit_forward.14} parent=5 // pred_check
      _
    $region10: #{vit_forward.14} parent=5 // pred_check_branch
      %184 = sbr.rel (%p181) target = $region12
    $region11: #{vit_forward.14} parent=5 // pred_region
      %s185 = ssub.s32 %s11, 1
      // Predicated region
      $region13: #{vit_forward.14} parent=11 // pred_check
        %p186 = pneg %p49
      $region14: #{vit_forward.14} parent=11 // pred_check_branch
        %188 = sbr.rel (%p186) target = $region16
      $region15: #{vit_forward.14} parent=11 // pred_region
        %s189 = smul.u32 4, %s20
        %p190 = scmp.lt.s32.totalorder %s189, 3
        %s191 = scalar_select %p190, %s189, 3
        %s192 = smul.addr %s191, 4
        %s193 = scalar_lea.vmem %s0, %s192
        %s194 = smul.u32 4, %s20
      $region16: #{vit_forward.14} parent=11 // pred_fallthru
        _
      // Predicated region
      $region17: #{vit_forward.14} parent=11 // pred_check
        %p195 = pneg %p70
      $region18: #{vit_forward.14} parent=11 // pred_check_branch
        %197 = sbr.rel (%p195) target = $region20
      $region19: #{vit_forward.14} parent=11 // pred_region
        _
      $region20: #{vit_forward.14} parent=11 // pred_fallthru
        _
      // Predicated region
      $region21: #{vit_forward.14} parent=11 // pred_check
        %p198 = pneg %p91
      $region22: #{vit_forward.14} parent=11 // pred_check_branch
        %200 = sbr.rel (%p198) target = $region24
      $region23: #{vit_forward.14} parent=11 // pred_region
        _
      $region24: #{vit_forward.14} parent=11 // pred_fallthru
        _
    $region12: #{vit_forward.14} parent=5 // pred_fallthru
      _
    %p201 = scmp.lt.s32.totalorder %s11, 12
    // Predicated region
    $region25: #{vit_forward.14} parent=5 // pred_check
      %p202 = pneg %p201
    $region26: #{vit_forward.14} parent=5 // pred_check_branch
      %204 = sbr.rel (%p202) target = $region28
    $region27: #{vit_forward.14} parent=5 // pred_region
      // Predicated region
      $region29: #{vit_forward.14} parent=27 // pred_check
        %p205 = pneg %p111
      $region30: #{vit_forward.14} parent=27 // pred_check_branch
        %207 = sbr.rel (%p205) target = $region32
      $region31: #{vit_forward.14} parent=27 // pred_region
        %p208 = scmp.lt.s32.totalorder %s19, 11
        %s209 = scalar_select %p208, %s19, 11
        %s210 = smul.addr %s209, 8
        %s211 = smul.addr %s210, 4
        %s212 = scalar_lea.vmem %s3, %s211
      $region32: #{vit_forward.14} parent=27 // pred_fallthru
        _
      // Predicated region
      $region33: #{vit_forward.14} parent=27 // pred_check
        %p213 = pneg %p137
      $region34: #{vit_forward.14} parent=27 // pred_check_branch
        %215 = sbr.rel (%p213) target = $region36
      $region35: #{vit_forward.14} parent=27 // pred_region
        %p216 = scmp.lt.s32.totalorder %s19, 11
        %s217 = scalar_select %p216, %s19, 11
        %s218 = scalar_lea.vmem %s4, %s217
      $region36: #{vit_forward.14} parent=27 // pred_fallthru
        _
    $region28: #{vit_forward.14} parent=5 // pred_fallthru
      _
    %p219 = scmp.le.s32.totalorder 1, %s11
    %p220 = scmp.lt.s32.totalorder %s11, 13
    %p221 = pnand %p219, %p220
    %p222 = pneg %p221
    // Predicated region
    $region37: #{vit_forward.14} parent=5 // pred_check
      _
    $region38: #{vit_forward.14} parent=5 // pred_check_branch
      %224 = sbr.rel (%p221) target = $region40
    $region39: #{vit_forward.14} parent=5 // pred_region
      %s225 = ssub.s32 %s11, 1
      %s226 = smul.u32 4, %s20
      %p227 = scmp.lt.s32.totalorder %s226, 3
      %s228 = scalar_select %p227, %s226, 3
      %s229 = smul.addr %s228, 4
      %s230 = scalar_lea.vmem %s0, %s229
      %p231 = pneg %p49
      %p232 = pneg %p46
      %p233 = pneg %p70
      %p234 = pneg %p67
      %p235 = pneg %p91
      %p236 = pneg %p88
      %p237 = scmp.lt.s32.totalorder %s21, 11
      %s238 = scalar_select %p237, %s21, 11
      %s239 = smul.addr %s238, 8
      %s240 = smul.addr %s239, 4
      %s241 = scalar_lea.vmem %s3, %s240
      %p242 = pneg %p117
      %p243 = pneg %p114
      %p244 = scmp.lt.s32.totalorder %s21, 11
      %s245 = scalar_select %p244, %s21, 11
      %s246 = scalar_lea.vmem %s4, %s245
      %p247 = pneg %p143
      %p248 = pneg %p140
      %p249 = pneg %p171
      %p250 = pneg %p168
      %s251 = smul.u32 4, %s20
      %p252 = scmp.lt.s32.totalorder %s21, 11
      %s253 = scalar_select %p252, %s21, 11
      %p254 = scmp.lt.s32.totalorder %s251, 3
      %s255 = scalar_select %p254, %s251, 3
      %s256 = smul.addr %s253, 4
      %s257 = sadd.s32 %s255, %s256
      %s258 = smul.addr %s257, 4
      %s259 = scalar_lea.vmem %s5, %s258
      %s260 = smul.u32 4, %s20
      %p261 = scmp.lt.s32.totalorder %s260, 3
      %s262 = scalar_select %p261, %s260, 3
      %s263 = smul.addr %s262, 4
      %s264 = scalar_lea.vmem %s0, %s263
      %s265 = smul.u32 4, %s20
      %p266 = scmp.lt.s32.totalorder %s21, 11
      %s267 = scalar_select %p266, %s21, 11
      %s268 = smul.addr %s267, 8
      %s269 = smul.addr %s268, 4
      %s270 = scalar_lea.vmem %s3, %s269
      %p271 = scmp.lt.s32.totalorder %s21, 11
      %s272 = scalar_select %p271, %s21, 11
      %s273 = scalar_lea.vmem %s4, %s272
      %s274 = smul.u32 4, %s20
      %p275 = scmp.lt.s32.totalorder %s21, 11
      %s276 = scalar_select %p275, %s21, 11
      %p277 = scmp.lt.s32.totalorder %s274, 3
      %s278 = scalar_select %p277, %s274, 3
      %s279 = smul.addr %s276, 4
      %s280 = sadd.s32 %s278, %s279
      %s281 = smul.addr %s280, 4
      %s282 = scalar_lea.vmem %s5, %s281
      %s283 = smul.u32 4, %s20
      %p285 = scmp.eq.s32.totalorder %s21, 0
      // Predicated region
      $region41: #{vit_forward.14} parent=39 // pred_check
        %p286 = pneg %p285
      $region42: #{vit_forward.14} parent=39 // pred_check_branch
        %288 = sbr.rel (%p286) target = $region44
      $region43: #{vit_forward.14} parent=39 // pred_region
        %v289 = vld [vmem:[%s264] sm:$0xf]
        %v290 = vld [vmem:[%s264 + $0x4] sm:$0xf]
        %v291 = vld [vmem:[%s264 + $0x8] sm:$0xf]
        %v292 = vld [vmem:[%s264 + $0xc] sm:$0xf]
        %v293 = vunpack.c.l.bf16 %v289
        %v294 = vunpack.c.l.bf16 %v290
        %v295 = vunpack.c.l.bf16 %v291
        %v296 = vunpack.c.l.bf16 %v292
        %vm297 = vcmask 523264
        %v298 = vsel %vm297, %v293, 0.0
        %299 = vadd.xlane.f32.xlu0 %v298
        %v300 = vpop.xlane.xlu0 %299
        %v301 = vsel %vm297, %v294, 0.0
        %302 = vadd.xlane.f32.xlu0 %v301
        %v303 = vpop.xlane.xlu0 %302
        %v304 = vsel %vm297, %v295, 0.0
        %305 = vadd.xlane.f32.xlu0 %v304
        %v306 = vpop.xlane.xlu0 %305
        %v307 = vsel %vm297, %v296, 0.0
        %308 = vadd.xlane.f32.xlu0 %v307
        %v309 = vpop.xlane.xlu0 %308
        %v310 = vrcp.pop 64.0
        %v311 = vmul.f32 %v300, %v310
        %v312 = vmul.f32 %v303, %v310
        %v313 = vmul.f32 %v306, %v310
        %v314 = vmul.f32 %v309, %v310
        %v315 = vsub.f32 %v293, %v311
        %v316 = vsub.f32 %v294, %v312
        %v317 = vsub.f32 %v295, %v313
        %v318 = vsub.f32 %v296, %v314
        %v319 = vmul.f32 %v315, %v315
        %v320 = vmul.f32 %v316, %v316
        %v321 = vmul.f32 %v317, %v317
        %v322 = vmul.f32 %v318, %v318
        %v323 = vsel %vm297, %v319, 0.0
        %324 = vadd.xlane.f32.xlu0 %v323
        %v325 = vpop.xlane.xlu0 %324
        %v326 = vsel %vm297, %v320, 0.0
        %327 = vadd.xlane.f32.xlu0 %v326
        %v328 = vpop.xlane.xlu0 %327
        %v329 = vsel %vm297, %v321, 0.0
        %330 = vadd.xlane.f32.xlu0 %v329
        %v331 = vpop.xlane.xlu0 %330
        %v332 = vsel %vm297, %v322, 0.0
        %333 = vadd.xlane.f32.xlu0 %v332
        %v334 = vpop.xlane.xlu0 %333
        %v335 = vmul.f32 %v325, %v310
        %v336 = vmul.f32 %v328, %v310
        %v337 = vmul.f32 %v331, %v310
        %v338 = vmul.f32 %v334, %v310
        %v339 = vadd.f32 %v335, 1e-06
        %v340 = vadd.f32 %v336, 1e-06
        %v341 = vadd.f32 %v337, 1e-06
        %v342 = vadd.f32 %v338, 1e-06
        %v343 = vrsqrt.pop %v339
        %v344 = vrsqrt.pop %v340
        %v345 = vrsqrt.pop %v341
        %v346 = vrsqrt.pop %v342
        %v347 = vmul.f32 %v315, %v343
        %v348 = vmul.f32 %v316, %v344
        %v349 = vmul.f32 %v317, %v345
        %v350 = vmul.f32 %v318, %v346
        %v351 = vld [vmem:[%s1] sm:$0x1]
        %v353 = vlaneseq
        %v354 = vshrl.u32 %v353, 7
        %v355 = vsub.s32 0, %v354
        %v356 = vrot.slane %v351, %v355
        %v358 = vmul.f32 %v347, %v356
        %v359 = vmul.f32 %v348, %v356
        %v360 = vmul.f32 %v349, %v356
        %v361 = vmul.f32 %v350, %v356
        %v362 = vld [vmem:[%s2] sm:$0x1]
        %v364 = vlaneseq
        %v365 = vshrl.u32 %v364, 7
        %v366 = vsub.s32 0, %v365
        %v367 = vrot.slane %v362, %v366
        %v369 = vadd.f32 %v358, %v367
        %v370 = vadd.f32 %v359, %v367
        %v371 = vadd.f32 %v360, %v367
        %v372 = vadd.f32 %v361, %v367
        %v373 = vpack.c.bf16 %v370, %v369
        %v374 = vpack.c.bf16 %v372, %v371
        %375 = vst.msk [vmem:[#allocation2] sm:$0xff] %vm297, %v373
        %376 = vst.msk [vmem:[#allocation2 + $0x8] sm:$0xff] %vm297, %v374
      $region44: #{vit_forward.14} parent=39 // pred_fallthru
        _
      %v377 = vld [vmem:[#allocation2] sm:$0xff]
      %v378 = vld [vmem:[#allocation2 + $0x8] sm:$0xff]
      %v379 = vld [vmem:[%s270] sm:$0xf]
      %v380 = vld [vmem:[%s270 + $0x4] sm:$0xf]
      %v381 = vld [vmem:[%s270 + $0x8] sm:$0xf]
      %v382 = vld [vmem:[%s270 + $0xc] sm:$0xf]
      %v383 = vld [vmem:[%s270 + $0x10] sm:$0xf]
      %v384 = vld [vmem:[%s270 + $0x14] sm:$0xf]
      %v385 = vld [vmem:[%s270 + $0x18] sm:$0xf]
      %v386 = vld [vmem:[%s270 + $0x1c] sm:$0xf]
      %v387 = vld [vmem:[%s273] sm:$0x1]
      %v389 = vlaneseq
      %v390 = vshrl.u32 %v389, 7
      %v391 = vsub.s32 0, %v390
      %v392 = vrot.slane %v387, %v391
      %v402 = vunpack.c.l.b16 %v379
      %v403 = vunpack.c.l.b16 %v380
      %v404 = vunpack.c.l.b16 %v381
      %v405 = vunpack.c.l.b16 %v382
      %v406 = vunpack.c.l.b16 %v383
      %v407 = vunpack.c.l.b16 %v384
      %v408 = vunpack.c.l.b16 %v385
      %v409 = vunpack.c.l.b16 %v386
      %v410 = vpack.c.b16 %v403, %v402
      %v411 = vpack.c.b16 %v405, %v404
      %v412 = vpack.c.b16 %v407, %v406
      %v413 = vpack.c.b16 %v409, %v408
      %vm418 = vcmask 523264
      %v420 = vsel %vm418, %v377, 0
      %v423 = vsel %vm418, %v378, 0
      %425 = vmatprep.subr.bf16.mxu0 0
      %426 = vmatpush1.bf16.msra.mxu0 %v410
      %427 = vmatprep.subr.bf16.mxu0 0
      %428 = vmatpush1.bf16.msra.mxu0 %v411
      %429 = vmatprep.subr.bf16.mxu0 0
      %430 = vmatpush1.bf16.msra.mxu0 %v412
      %431 = vmatprep.subr.bf16.mxu0 0
      %432 = vmatpush1.bf16.msra.mxu0 %v413
      %433 = vmatprep.subr.bf16.mxu0 0
      %434 = vmatpush1.bf16.msra.mxu0 0
      %435 = vmatprep.subr.bf16.mxu0 0
      %436 = vmatpush1.bf16.msra.mxu0 0
      %437 = vmatprep.subr.bf16.mxu0 0
      %438 = vmatpush1.bf16.msra.mxu0 0
      %439 = vmatprep.subr.bf16.mxu0 0
      %440 = vmatpush1.bf16.msra.mxu0 0
      %441 = vmatprep.subr.bf16.mxu0 0
      %442 = vmatpush1.bf16.msra.mxu0 0
      %443 = vmatprep.subr.bf16.mxu0 0
      %444 = vmatpush1.bf16.msra.mxu0 0
      %445 = vmatprep.subr.bf16.mxu0 0
      %446 = vmatpush1.bf16.msra.mxu0 0
      %447 = vmatprep.subr.bf16.mxu0 0
      %448 = vmatpush1.bf16.msra.mxu0 0
      %449 = vmatprep.subr.bf16.mxu0 0
      %450 = vmatpush1.bf16.msra.mxu0 0
      %451 = vmatprep.subr.bf16.mxu0 0
      %452 = vmatpush1.bf16.msra.mxu0 0
      %453 = vmatprep.subr.bf16.mxu0 0
      %454 = vmatpush1.bf16.msra.mxu0 0
      %455 = vmatprep.subr.bf16.mxu0 0
      %456 = vmatpush1.bf16.msra.mxu0 0
      %457 = vmatprep.mubr.bf16.mxu0 0
      %458 = vmatmul.mubr.bf16.gmra.mrb[0].mxu0 %v420
      %v459 = vpop.f32.mrb[0].mxu0
      %v460 = vadd.f32 %v392, %v459
      %v461 = vpop.f32.mrb[0].mxu0
      %v462 = vpop.f32.mrb[0].mxu0
      %v463 = vadd.f32 %v392, %v462
      %v464 = vpop.f32.mrb[0].mxu0
      %465 = vmatprep.mubr.bf16.mxu0 0
      %466 = vmatmul.mubr.bf16.gmra.mrb[0].mxu0 %v423
      %v467 = vpop.f32.mrb[0].mxu0
      %v468 = vadd.f32 %v392, %v467
      %v469 = vpop.f32.mrb[0].mxu0
      %v470 = vpop.f32.mrb[0].mxu0
      %v471 = vadd.f32 %v392, %v470
      %v472 = vpop.f32.mrb[0].mxu0
      %473 = vdwg.mxu0
      %v474 = vpack.c.bf16 %v463, %v460
      %v475 = vpack.c.bf16 %v471, %v468
      %v478 = vunpack.c.l.b16 %v474
      %v479 = vunpack.c.h.b16 %v474
      %v480 = vunpack.c.l.b16 %v475
      %v481 = vunpack.c.h.b16 %v475
      %v482 = vpack.c.b16 %v478, %v478
      %v483 = vpack.c.b16 %v479, %v479
      %v484 = vpack.c.b16 %v480, %v480
      %v485 = vpack.c.b16 %v481, %v481
      %vm490 = vcmask 125952
      %491 = vst.msk [vmem:[%s282] sm:$0xf] %vm490, %v482
      %492 = vst.msk [vmem:[%s282 + $0x4] sm:$0xf] %vm490, %v483
      %493 = vst.msk [vmem:[%s282 + $0x8] sm:$0xf] %vm490, %v484
      %494 = vst.msk [vmem:[%s282 + $0xc] sm:$0xf] %vm490, %v485
      %s495 = smul.u32 4, %s20
      %p496 = scmp.lt.s32.totalorder %s21, 11
      %s497 = scalar_select %p496, %s21, 11
      %p498 = scmp.lt.s32.totalorder %s495, 3
      %s499 = scalar_select %p498, %s495, 3
      %s500 = smul.addr %s497, 4
      %s501 = sadd.s32 %s499, %s500
      %s502 = smul.addr %s501, 4
      %s503 = scalar_lea.vmem %s5, %s502
      // Predicated region
      $region45: #{vit_forward.14} parent=39 // pred_check
        %p504 = pneg %p168
      $region46: #{vit_forward.14} parent=39 // pred_check_branch
        %506 = sbr.rel (%p504) target = $region48
      $region47: #{vit_forward.14} parent=39 // pred_region
        %s507 = smul.u32 4, %s20
      $region48: #{vit_forward.14} parent=39 // pred_fallthru
        _
    $region40: #{vit_forward.14} parent=5 // pred_fallthru
      _
    %p508 = scmp.le.s32.totalorder 2, %s11
    // Predicated region
    $region49: #{vit_forward.14} parent=5 // pred_check
      %p509 = pneg %p508
    $region50: #{vit_forward.14} parent=5 // pred_check_branch
      %511 = sbr.rel (%p509) target = $region52
    $region51: #{vit_forward.14} parent=5 // pred_region
      %s512 = ssub.s32 %s11, 2
      // Predicated region
      $region53: #{vit_forward.14} parent=51 // pred_check
        %p513 = pneg %p174
      $region54: #{vit_forward.14} parent=51 // pred_check_branch
        %515 = sbr.rel (%p513) target = $region56
      $region55: #{vit_forward.14} parent=51 // pred_region
        %s516 = smul.u32 4, %s22
        %p517 = scmp.lt.s32.totalorder %s23, 11
        %s518 = scalar_select %p517, %s23, 11
        %p519 = scmp.lt.s32.totalorder %s516, 3
        %s520 = scalar_select %p519, %s516, 3
        %s521 = smul.addr %s518, 4
        %s522 = sadd.s32 %s520, %s521
        %s523 = smul.addr %s522, 4
        %s524 = scalar_lea.vmem %s5, %s523
      $region56: #{vit_forward.14} parent=51 // pred_fallthru
        _
    $region52: #{vit_forward.14} parent=5 // pred_fallthru
      _
  $region6: #{vit_forward.14} parent=0 // loop_footer
    %s15 = sadd.s32 1, %s11
  $region7: #{vit_forward.14} parent=0 // loop_footer_branch
    %10 = sbr.rel target = $region3
  $region8: #{vit_forward.14} parent=0 // loop_exit
    _

// kernel: vit_forward.16
$region0: #{vit_forward.16}
  #allocation0 [shape = 'u32[]', space=smem, size = 0x4, offset = 0x4, fixed_abs, tag = 'smem constant byte address 0x4 - core index']
  #allocation1 [shape = 'u32[144,128]{1,0:T(1,128)}', space=vmem, size = 0x12000, scoped, tag = 'internal scratch']
  #allocation2 [shape = 'f32[32,64]{1,0:T(8,128)}', space=vmem, size = 0x4000, scoped, tag = 'scratch operand']
  %s0 = inlined_call_operand.vmem [shape: bf16[4,32,16], index: 0, kind: input, shape index: {}]
  %s1 = inlined_call_operand.vmem [shape: bf16[4,16,64], index: 1, kind: input, shape index: {}]
  %s2 = inlined_call_operand.vmem [shape: f32[1,64], index: 2, kind: input, shape index: {}]
  %s3 = inlined_call_operand.vmem [shape: bf16[32,64], index: 3, kind: input, shape index: {}]
  %s4 = inlined_call_operand.vmem [shape: bf16[32,64], index: 4, kind: output, shape index: {}]
  %s5 = sld [smem:[#allocation0]]
  $region57: #{vit_forward.16} parent=0
    _
  %s7 = ssub.s32 1, %s5
  %s8 = scalar_select 0, %s7, %s5
  loop: start=0, step=1, limit=6
  $region2: #{vit_forward.16} parent=0 // loop_pre_header
    _
  $region3: #{vit_forward.16} parent=0 // loop_header
    %s10 = sphi 0, %s14
    %p11 = scmp.ge.s32.totalorder %s10, 6
    %s17 = sphi 0, %s36
    %s18 = sphi 0, %s32
    %s19 = sphi 0, %s28
    %s20 = sphi 0, %s17
    %s21 = sphi 0, %s18
    %s22 = sphi 0, %s19
    %s23 = sphi 0, %s20
    %s24 = sphi 0, %s21
    %s25 = sphi 0, %s22
    %s41 = sphi 0, %s43
    %s44 = sphi 0, %s41
    %s45 = sphi 0, %s44
    %s61 = sphi 0, %s45
    %s69 = sphi 0, %s71
    %s72 = sphi 0, %s69
    %s73 = sphi 0, %s72
    %s89 = sphi 0, %s73
    %s95 = sphi 0, %s97
    %s98 = sphi 0, %s95
    %s99 = sphi 0, %s98
    %s115 = sphi 0, %s99
    %s123 = sphi 0, %s125
    %s126 = sphi 0, %s123
    %s127 = sphi 0, %s126
    %s143 = sphi 0, %s127
    %s151 = sphi 0, %s153
    %s154 = sphi 0, %s151
    %s155 = sphi 0, %s154
    %s171 = sphi 0, %s155
  $region4: #{vit_forward.16} parent=0 // loop_header_branch
    %13 = sbr.rel (%p11) target = $region8
  $region5: #{vit_forward.16} parent=0 // loop_body
    %s15 = ssub.s32 %s10, 1
    %s16 = ssub.s32 %s10, 2
    %s26 = sadd.s32 1, %s19
    %p27 = scmp.ge.s32.totalorder %s26, 4
    %s28 = scalar_select %p27, 0, %s26
    %s29 = sadd.s32 1, %s18
    %s30 = scalar_select %p27, %s29, %s18
    %p31 = scmp.ge.s32.totalorder %s30, 1
    %s32 = scalar_select %p31, 0, %s30
    %s33 = sadd.s32 1, %s17
    %s34 = scalar_select %p31, %s33, %s17
    %p35 = scmp.ge.s32.totalorder %s34, 1
    %s36 = scalar_select %p35, 0, %s34
    %s37 = ssub.s32 %s19, %s28
    %s38 = ssub.s32 %s17, %s36
    %s39 = sor.u32 %s37, %s38
    %p40 = scmp.eq.s32.totalorder %s39, 0
    %s42 = sadd.s32 %s41, 1
    %s43 = scalar_select %p40, %s41, %s42
    %p46 = pneg %p40
    %p47 = scmp.eq.s32.totalorder %s10, 3
    %p48 = por %p46, %p47
    %p49 = scmp.ne.s32.totalorder %s41, %s44
    %p50 = scmp.eq.s32.totalorder %s10, 0
    %p51 = por %p49, %p50
    %p52 = scmp.ne.s32.totalorder %s41, %s44
    %p53 = scmp.eq.s32.totalorder %s15, 3
    %p54 = por %p52, %p53
    %p55 = scmp.ne.s32.totalorder %s44, %s45
    %p56 = scmp.eq.s32.totalorder %s15, 0
    %p57 = por %p55, %p56
    %p58 = scmp.ne.s32.totalorder %s44, %s45
    %p59 = scmp.eq.s32.totalorder %s16, 3
    %p60 = por %p58, %p59
    %p62 = scmp.ne.s32.totalorder %s45, %s61
    %p63 = scmp.eq.s32.totalorder %s16, 0
    %p64 = por %p62, %p63
    %s65 = ssub.s32 %s19, %s28
    %s66 = ssub.s32 %s18, %s32
    %s67 = sor.u32 %s65, %s66
    %p68 = scmp.eq.s32.totalorder %s67, 0
    %s70 = sadd.s32 %s69, 1
    %s71 = scalar_select %p68, %s69, %s70
    %p74 = pneg %p68
    %p75 = scmp.eq.s32.totalorder %s10, 3
    %p76 = por %p74, %p75
    %p77 = scmp.ne.s32.totalorder %s69, %s72
    %p78 = scmp.eq.s32.totalorder %s10, 0
    %p79 = por %p77, %p78
    %p80 = scmp.ne.s32.totalorder %s69, %s72
    %p81 = scmp.eq.s32.totalorder %s15, 3
    %p82 = por %p80, %p81
    %p83 = scmp.ne.s32.totalorder %s72, %s73
    %p84 = scmp.eq.s32.totalorder %s15, 0
    %p85 = por %p83, %p84
    %p86 = scmp.ne.s32.totalorder %s72, %s73
    %p87 = scmp.eq.s32.totalorder %s16, 3
    %p88 = por %p86, %p87
    %p90 = scmp.ne.s32.totalorder %s73, %s89
    %p91 = scmp.eq.s32.totalorder %s16, 0
    %p92 = por %p90, %p91
    %s93 = ssub.s32 %s18, %s32
    %p94 = scmp.eq.s32.totalorder %s93, 0
    %s96 = sadd.s32 %s95, 1
    %s97 = scalar_select %p94, %s95, %s96
    %p100 = pneg %p94
    %p101 = scmp.eq.s32.totalorder %s10, 3
    %p102 = por %p100, %p101
    %p103 = scmp.ne.s32.totalorder %s95, %s98
    %p104 = scmp.eq.s32.totalorder %s10, 0
    %p105 = por %p103, %p104
    %p106 = scmp.ne.s32.totalorder %s95, %s98
    %p107 = scmp.eq.s32.totalorder %s15, 3
    %p108 = por %p106, %p107
    %p109 = scmp.ne.s32.totalorder %s98, %s99
    %p110 = scmp.eq.s32.totalorder %s15, 0
    %p111 = por %p109, %p110
    %p112 = scmp.ne.s32.totalorder %s98, %s99
    %p113 = scmp.eq.s32.totalorder %s16, 3
    %p114 = por %p112, %p113
    %p116 = scmp.ne.s32.totalorder %s99, %s115
    %p117 = scmp.eq.s32.totalorder %s16, 0
    %p118 = por %p116, %p117
    %s119 = ssub.s32 %s17, %s36
    %s120 = ssub.s32 %s18, %s32
    %s121 = sor.u32 %s119, %s120
    %p122 = scmp.eq.s32.totalorder %s121, 0
    %s124 = sadd.s32 %s123, 1
    %s125 = scalar_select %p122, %s123, %s124
    %p128 = pneg %p122
    %p129 = scmp.eq.s32.totalorder %s10, 3
    %p130 = por %p128, %p129
    %p131 = scmp.ne.s32.totalorder %s123, %s126
    %p132 = scmp.eq.s32.totalorder %s10, 0
    %p133 = por %p131, %p132
    %p134 = scmp.ne.s32.totalorder %s123, %s126
    %p135 = scmp.eq.s32.totalorder %s15, 3
    %p136 = por %p134, %p135
    %p137 = scmp.ne.s32.totalorder %s126, %s127
    %p138 = scmp.eq.s32.totalorder %s15, 0
    %p139 = por %p137, %p138
    %p140 = scmp.ne.s32.totalorder %s126, %s127
    %p141 = scmp.eq.s32.totalorder %s16, 3
    %p142 = por %p140, %p141
    %p144 = scmp.ne.s32.totalorder %s127, %s143
    %p145 = scmp.eq.s32.totalorder %s16, 0
    %p146 = por %p144, %p145
    %s147 = ssub.s32 %s17, %s36
    %s148 = ssub.s32 %s18, %s32
    %s149 = sor.u32 %s147, %s148
    %p150 = scmp.eq.s32.totalorder %s149, 0
    %s152 = sadd.s32 %s151, 1
    %s153 = scalar_select %p150, %s151, %s152
    %p156 = pneg %p150
    %p157 = scmp.eq.s32.totalorder %s10, 3
    %p158 = por %p156, %p157
    %p159 = scmp.ne.s32.totalorder %s151, %s154
    %p160 = scmp.eq.s32.totalorder %s10, 0
    %p161 = por %p159, %p160
    %p162 = scmp.ne.s32.totalorder %s151, %s154
    %p163 = scmp.eq.s32.totalorder %s15, 3
    %p164 = por %p162, %p163
    %p165 = scmp.ne.s32.totalorder %s154, %s155
    %p166 = scmp.eq.s32.totalorder %s15, 0
    %p167 = por %p165, %p166
    %p168 = scmp.ne.s32.totalorder %s154, %s155
    %p169 = scmp.eq.s32.totalorder %s16, 3
    %p170 = por %p168, %p169
    %p172 = scmp.ne.s32.totalorder %s155, %s171
    %p173 = scmp.eq.s32.totalorder %s16, 0
    %p174 = por %p172, %p173
    %p175 = scmp.le.s32.totalorder 1, %s10
    %p176 = scmp.lt.s32.totalorder %s10, 5
    %p177 = pnand %p175, %p176
    %p178 = pneg %p177
    // Predicated region
    $region9: #{vit_forward.16} parent=5 // pred_check
      _
    $region10: #{vit_forward.16} parent=5 // pred_check_branch
      %180 = sbr.rel (%p177) target = $region12
    $region11: #{vit_forward.16} parent=5 // pred_region
      %s181 = ssub.s32 %s10, 1
      // Predicated region
      $region13: #{vit_forward.16} parent=11 // pred_check
        %p182 = pneg %p111
      $region14: #{vit_forward.16} parent=11 // pred_check_branch
        %184 = sbr.rel (%p182) target = $region16
      $region15: #{vit_forward.16} parent=11 // pred_region
        %p185 = scmp.lt.s32.totalorder %s21, 0
        %s186 = scalar_select %p185, %s21, 0
        %s187 = scalar_lea.vmem %s2, %s186
      $region16: #{vit_forward.16} parent=11 // pred_fallthru
        _
      // Predicated region
      $region17: #{vit_forward.16} parent=11 // pred_check
        %p188 = pneg %p139
      $region18: #{vit_forward.16} parent=11 // pred_check_branch
        %190 = sbr.rel (%p188) target = $region20
      $region19: #{vit_forward.16} parent=11 // pred_region
        %s191 = smul.u32 4, %s20
        %p192 = scmp.lt.s32.totalorder %s191, 3
        %s193 = scalar_select %p192, %s191, 3
        %p194 = scmp.lt.s32.totalorder %s21, 0
        %s195 = scalar_select %p194, %s21, 0
        %s196 = sadd.s32 %s195, %s193
        %s197 = smul.addr %s196, 4
        %s198 = scalar_lea.vmem %s3, %s197
        %s199 = smul.u32 4, %s20
      $region20: #{vit_forward.16} parent=11 // pred_fallthru
        _
    $region12: #{vit_forward.16} parent=5 // pred_fallthru
      _
    %p200 = scmp.lt.s32.totalorder %s10, 4
    // Predicated region
    $region21: #{vit_forward.16} parent=5 // pred_check
      %p201 = pneg %p200
    $region22: #{vit_forward.16} parent=5 // pred_check_branch
      %203 = sbr.rel (%p201) target = $region24
    $region23: #{vit_forward.16} parent=5 // pred_region
      // Predicated region
      $region25: #{vit_forward.16} parent=23 // pred_check
        %p204 = pneg %p51
      $region26: #{vit_forward.16} parent=23 // pred_check_branch
        %206 = sbr.rel (%p204) target = $region28
      $region27: #{vit_forward.16} parent=23 // pred_region
        %s207 = smul.u32 4, %s17
        %p208 = scmp.lt.s32.totalorder %s19, 3
        %s209 = scalar_select %p208, %s19, 3
        %p210 = scmp.lt.s32.totalorder %s207, 3
        %s211 = scalar_select %p210, %s207, 3
        %s212 = smul.addr %s209, 4
        %s213 = sadd.s32 %s211, %s212
        %s214 = smul.addr %s213, 4
        %s215 = scalar_lea.vmem %s0, %s214
        %s216 = smul.u32 4, %s17
      $region28: #{vit_forward.16} parent=23 // pred_fallthru
        _
      // Predicated region
      $region29: #{vit_forward.16} parent=23 // pred_check
        %p217 = pneg %p79
      $region30: #{vit_forward.16} parent=23 // pred_check_branch
        %219 = sbr.rel (%p217) target = $region32
      $region31: #{vit_forward.16} parent=23 // pred_region
        %p220 = scmp.lt.s32.totalorder %s19, 3
        %s221 = scalar_select %p220, %s19, 3
        %p222 = scmp.lt.s32.totalorder %s18, 0
        %s223 = scalar_select %p222, %s18, 0
        %s224 = smul.addr %s221, 2
        %s225 = sadd.s32 %s223, %s224
        %s226 = smul.addr %s225, 4
        %s227 = scalar_lea.vmem %s1, %s226
      $region32: #{vit_forward.16} parent=23 // pred_fallthru
        _
    $region24: #{vit_forward.16} parent=5 // pred_fallthru
      _
    %p228 = scmp.le.s32.totalorder 1, %s10
    %p229 = scmp.lt.s32.totalorder %s10, 5
    %p230 = pnand %p228, %p229
    %p231 = pneg %p230
    // Predicated region
    $region33: #{vit_forward.16} parent=5 // pred_check
      _
    $region34: #{vit_forward.16} parent=5 // pred_check_branch
      %233 = sbr.rel (%p230) target = $region36
    $region35: #{vit_forward.16} parent=5 // pred_region
      %s234 = ssub.s32 %s10, 1
      %s235 = smul.u32 4, %s20
      %p236 = scmp.lt.s32.totalorder %s22, 3
      %s237 = scalar_select %p236, %s22, 3
      %p238 = scmp.lt.s32.totalorder %s235, 3
      %s239 = scalar_select %p238, %s235, 3
      %s240 = smul.addr %s237, 4
      %s241 = sadd.s32 %s239, %s240
      %s242 = smul.addr %s241, 4
      %s243 = scalar_lea.vmem %s0, %s242
      %p244 = pneg %p57
      %p245 = pneg %p54
      %p246 = scmp.lt.s32.totalorder %s22, 3
      %s247 = scalar_select %p246, %s22, 3
      %p248 = scmp.lt.s32.totalorder %s21, 0
      %s249 = scalar_select %p248, %s21, 0
      %s250 = smul.addr %s247, 2
      %s251 = sadd.s32 %s249, %s250
      %s252 = smul.addr %s251, 4
      %s253 = scalar_lea.vmem %s1, %s252
      %p254 = pneg %p85
      %p255 = pneg %p82
      %p256 = scmp.lt.s32.totalorder %s21, 0
      %s257 = scalar_select %p256, %s21, 0
      %s258 = scalar_lea.vmem %s2, %s257
      %p259 = pneg %p111
      %p260 = pneg %p108
      %s261 = smul.u32 4, %s20
      %p262 = scmp.lt.s32.totalorder %s261, 3
      %s263 = scalar_select %p262, %s261, 3
      %p264 = scmp.lt.s32.totalorder %s21, 0
      %s265 = scalar_select %p264, %s21, 0
      %s266 = sadd.s32 %s265, %s263
      %s267 = smul.addr %s266, 4
      %s268 = scalar_lea.vmem %s3, %s267
      %p269 = pneg %p139
      %p270 = pneg %p136
      %p271 = pneg %p167
      %p272 = pneg %p164
      %s273 = smul.u32 4, %s20
      %p274 = scmp.lt.s32.totalorder %s273, 3
      %s275 = scalar_select %p274, %s273, 3
      %p276 = scmp.lt.s32.totalorder %s21, 0
      %s277 = scalar_select %p276, %s21, 0
      %s278 = sadd.s32 %s277, %s275
      %s279 = smul.addr %s278, 4
      %s280 = scalar_lea.vmem %s4, %s279
      %s281 = smul.u32 4, %s20
      %p282 = scmp.lt.s32.totalorder %s22, 3
      %s283 = scalar_select %p282, %s22, 3
      %p284 = scmp.lt.s32.totalorder %s281, 3
      %s285 = scalar_select %p284, %s281, 3
      %s286 = smul.addr %s283, 4
      %s287 = sadd.s32 %s285, %s286
      %s288 = smul.addr %s287, 4
      %s289 = scalar_lea.vmem %s0, %s288
      %s290 = smul.u32 4, %s20
      %p291 = scmp.lt.s32.totalorder %s22, 3
      %s292 = scalar_select %p291, %s22, 3
      %p293 = scmp.lt.s32.totalorder %s21, 0
      %s294 = scalar_select %p293, %s21, 0
      %s295 = smul.addr %s292, 2
      %s296 = sadd.s32 %s294, %s295
      %s297 = smul.addr %s296, 4
      %s298 = scalar_lea.vmem %s1, %s297
      %p299 = scmp.lt.s32.totalorder %s21, 0
      %s300 = scalar_select %p299, %s21, 0
      %s301 = scalar_lea.vmem %s2, %s300
      %s302 = smul.u32 4, %s20
      %p303 = scmp.lt.s32.totalorder %s302, 3
      %s304 = scalar_select %p303, %s302, 3
      %p305 = scmp.lt.s32.totalorder %s21, 0
      %s306 = scalar_select %p305, %s21, 0
      %s307 = sadd.s32 %s306, %s304
      %s308 = smul.addr %s307, 4
      %s309 = scalar_lea.vmem %s3, %s308
      %s310 = smul.u32 4, %s20
      %s311 = smul.u32 4, %s20
      %p312 = scmp.lt.s32.totalorder %s311, 3
      %s313 = scalar_select %p312, %s311, 3
      %p314 = scmp.lt.s32.totalorder %s21, 0
      %s315 = scalar_select %p314, %s21, 0
      %s316 = sadd.s32 %s315, %s313
      %s317 = smul.addr %s316, 4
      %s318 = scalar_lea.vmem %s4, %s317
      %s319 = smul.u32 4, %s20
      %p321 = scmp.eq.s32.totalorder %s22, 0
      // Predicated region
      $region37: #{vit_forward.16} parent=35 // pred_check
        %p322 = pneg %p321
      $region38: #{vit_forward.16} parent=35 // pred_check_branch
        %324 = sbr.rel (%p322) target = $region40
      $region39: #{vit_forward.16} parent=35 // pred_region
        %vm325 = vcmask 523264
        %326 = vst.msk [vmem:[#allocation2] sm:$0xff] %vm325, 0.0
        %327 = vst.msk [vmem:[#allocation2 + $0x8] sm:$0xff] %vm325, 0.0
        %328 = vst.msk [vmem:[#allocation2 + $0x10] sm:$0xff] %vm325, 0.0
        %329 = vst.msk [vmem:[#allocation2 + $0x18] sm:$0xff] %vm325, 0.0
      $region40: #{vit_forward.16} parent=35 // pred_fallthru
        _
      %v330 = vld [vmem:[#allocation2] sm:$0xff]
      %v331 = vld [vmem:[#allocation2 + $0x8] sm:$0xff]
      %v332 = vld [vmem:[#allocation2 + $0x10] sm:$0xff]
      %v333 = vld [vmem:[#allocation2 + $0x18] sm:$0xff]
      %v334 = vld [vmem:[%s289] sm:$0xf]
      %v335 = vld [vmem:[%s289 + $0x4] sm:$0xf]
      %v336 = vld [vmem:[%s289 + $0x8] sm:$0xf]
      %v337 = vld [vmem:[%s289 + $0xc] sm:$0xf]
      %v338 = vld [vmem:[%s298] sm:$0xf]
      %v339 = vld [vmem:[%s298 + $0x4] sm:$0xf]
      %v344 = vunpack.c.l.b16 %v334
      %v345 = vunpack.c.l.b16 %v335
      %v346 = vunpack.c.l.b16 %v336
      %v347 = vunpack.c.l.b16 %v337
      %v348 = vpack.c.b16 %v345, %v344
      %v349 = vpack.c.b16 %v347, %v346
      %v352 = vunpack.c.l.b16 %v338
      %v353 = vunpack.c.l.b16 %v339
      %v354 = vpack.c.b16 %v353, %v352
      %vm356 = vcmask 130048
      %v358 = vsel %vm356, %v348, 0
      %v361 = vsel %vm356, %v349, 0
      %363 = vmatprep.subr.bf16.mxu0 0
      %364 = vmatpush1.bf16.msra.mxu0 %v354
      %365 = vmatprep.subr.bf16.mxu0 0
      %366 = vmatpush1.bf16.msra.mxu0 0
      %367 = vmatprep.subr.bf16.mxu0 0
      %368 = vmatpush1.bf16.msra.mxu0 0
      %369 = vmatprep.subr.bf16.mxu0 0
      %370 = vmatpush1.bf16.msra.mxu0 0
      %371 = vmatprep.subr.bf16.mxu0 0
      %372 = vmatpush1.bf16.msra.mxu0 0
      %373 = vmatprep.subr.bf16.mxu0 0
      %374 = vmatpush1.bf16.msra.mxu0 0
      %375 = vmatprep.subr.bf16.mxu0 0
      %376 = vmatpush1.bf16.msra.mxu0 0
      %377 = vmatprep.subr.bf16.mxu0 0
      %378 = vmatpush1.bf16.msra.mxu0 0
      %379 = vmatprep.subr.bf16.mxu0 0
      %380 = vmatpush1.bf16.msra.mxu0 0
      %381 = vmatprep.subr.bf16.mxu0 0
      %382 = vmatpush1.bf16.msra.mxu0 0
      %383 = vmatprep.subr.bf16.mxu0 0
      %384 = vmatpush1.bf16.msra.mxu0 0
      %385 = vmatprep.subr.bf16.mxu0 0
      %386 = vmatpush1.bf16.msra.mxu0 0
      %387 = vmatprep.subr.bf16.mxu0 0
      %388 = vmatpush1.bf16.msra.mxu0 0
      %389 = vmatprep.subr.bf16.mxu0 0
      %390 = vmatpush1.bf16.msra.mxu0 0
      %391 = vmatprep.subr.bf16.mxu0 0
      %392 = vmatpush1.bf16.msra.mxu0 0
      %393 = vmatprep.subr.bf16.mxu0 0
      %394 = vmatpush1.bf16.msra.mxu0 0
      %395 = vmatprep.mubr.bf16.mxu0 0
      %396 = vmatmul.mubr.bf16.gmra.mrb[0].mxu0 %v358
      %v397 = vpop.f32.mrb[0].mxu0
      %v398 = vadd.f32 0.0, %v397
      %v399 = vpop.f32.mrb[0].mxu0
      %v400 = vpop.f32.mrb[0].mxu0
      %v401 = vadd.f32 0.0, %v400
      %v402 = vpop.f32.mrb[0].mxu0
      %403 = vmatprep.mubr.bf16.mxu0 0
      %404 = vmatmul.mubr.bf16.gmra.mrb[0].mxu0 %v361
      %v405 = vpop.f32.mrb[0].mxu0
      %v406 = vadd.f32 0.0, %v405
      %v407 = vpop.f32.mrb[0].mxu0
      %v408 = vpop.f32.mrb[0].mxu0
      %v409 = vadd.f32 0.0, %v408
      %v410 = vpop.f32.mrb[0].mxu0
      %411 = vdwg.mxu0
      %v412 = vadd.f32 %v330, %v398
      %v413 = vadd.f32 %v331, %v401
      %v414 = vadd.f32 %v332, %v406
      %v415 = vadd.f32 %v333, %v409
      %vm416 = vcmask 523264
      %417 = vst.msk [vmem:[#allocation2] sm:$0xff] %vm416, %v412
      %418 = vst.msk [vmem:[#allocation2 + $0x8] sm:$0xff] %vm416, %v413
      %419 = vst.msk [vmem:[#allocation2 + $0x10] sm:$0xff] %vm416, %v414
      %420 = vst.msk [vmem:[#allocation2 + $0x18] sm:$0xff] %vm416, %v415
      %p421 = scmp.eq.s32.totalorder %s22, 3
      // Predicated region
      $region41: #{vit_forward.16} parent=35 // pred_check
        %p422 = pneg %p421
      $region42: #{vit_forward.16} parent=35 // pred_check_branch
        %424 = sbr.rel (%p422) target = $region44
      $region43: #{vit_forward.16} parent=35 // pred_region
        %v425 = vld [vmem:[#allocation2] sm:$0xff]
        %v426 = vld [vmem:[#allocation2 + $0x8] sm:$0xff]
        %v427 = vld [vmem:[#allocation2 + $0x10] sm:$0xff]
        %v428 = vld [vmem:[#allocation2 + $0x18] sm:$0xff]
        %v429 = vld [vmem:[%s301] sm:$0x1]
        %v431 = vlaneseq
        %v432 = vshrl.u32 %v431, 7
        %v433 = vsub.s32 0, %v432
        %v434 = vrot.slane %v429, %v433
        %v436 = vadd.f32 %v425, %v434
        %v437 = vadd.f32 %v426, %v434
        %v438 = vadd.f32 %v427, %v434
        %v439 = vadd.f32 %v428, %v434
        %v440 = vld [vmem:[%s309] sm:$0xf]
        %v441 = vld [vmem:[%s309 + $0x4] sm:$0xf]
        %v442 = vld [vmem:[%s309 + $0x8] sm:$0xf]
        %v443 = vld [vmem:[%s309 + $0xc] sm:$0xf]
        %v444 = vunpack.c.l.bf16 %v440
        %v445 = vunpack.c.l.bf16 %v441
        %v446 = vunpack.c.l.bf16 %v442
        %v447 = vunpack.c.l.bf16 %v443
        %v448 = vadd.f32 %v436, %v444
        %v449 = vadd.f32 %v437, %v445
        %v450 = vadd.f32 %v438, %v446
        %v451 = vadd.f32 %v439, %v447
        %v452 = vpack.c.bf16 %v449, %v448
        %v453 = vpack.c.bf16 %v451, %v450
        %v456 = vunpack.c.l.b16 %v452
        %v457 = vunpack.c.h.b16 %v452
        %v458 = vunpack.c.l.b16 %v453
        %v459 = vunpack.c.h.b16 %v453
        %v460 = vpack.c.b16 %v456, %v456
        %v461 = vpack.c.b16 %v457, %v457
        %v462 = vpack.c.b16 %v458, %v458
        %v463 = vpack.c.b16 %v459, %v459
        %vm468 = vcmask 519168
        %469 = vst.msk [vmem:[%s318] sm:$0xf] %vm468, %v460
        %470 = vst.msk [vmem:[%s318 + $0x4] sm:$0xf] %vm468, %v461
        %471 = vst.msk [vmem:[%s318 + $0x8] sm:$0xf] %vm468, %v462
        %472 = vst.msk [vmem:[%s318 + $0xc] sm:$0xf] %vm468, %v463
      $region44: #{vit_forward.16} parent=35 // pred_fallthru
        _
      %s473 = smul.u32 4, %s20
      %p474 = scmp.lt.s32.totalorder %s473, 3
      %s475 = scalar_select %p474, %s473, 3
      %p476 = scmp.lt.s32.totalorder %s21, 0
      %s477 = scalar_select %p476, %s21, 0
      %s478 = sadd.s32 %s477, %s475
      %s479 = smul.addr %s478, 4
      %s480 = scalar_lea.vmem %s4, %s479
      // Predicated region
      $region45: #{vit_forward.16} parent=35 // pred_check
        %p481 = pneg %p164
      $region46: #{vit_forward.16} parent=35 // pred_check_branch
        %483 = sbr.rel (%p481) target = $region48
      $region47: #{vit_forward.16} parent=35 // pred_region
        %s484 = smul.u32 4, %s20
      $region48: #{vit_forward.16} parent=35 // pred_fallthru
        _
      // Predicated region
      $region49: #{vit_forward.16} parent=35 // pred_check
        %p485 = pneg %p164
      $region50: #{vit_forward.16} parent=35 // pred_check_branch
        %487 = sbr.rel (%p485) target = $region52
      $region51: #{vit_forward.16} parent=35 // pred_region
        %s488 = smul.u32 4, %s20
        %p489 = scmp.lt.s32.totalorder %s488, 3
        %s490 = scalar_select %p489, %s488, 3
        %p491 = scmp.lt.s32.totalorder %s21, 0
        %s492 = scalar_select %p491, %s21, 0
        %s493 = sadd.s32 %s492, %s490
        %s494 = smul.addr %s493, 4
        %s495 = scalar_lea.vmem %s4, %s494
      $region52: #{vit_forward.16} parent=35 // pred_fallthru
        _
    $region36: #{vit_forward.16} parent=5 // pred_fallthru
      _
    %p496 = scmp.le.s32.totalorder 2, %s10
    // Predicated region
    $region53: #{vit_forward.16} parent=5 // pred_check
      %p497 = pneg %p496
    $region54: #{vit_forward.16} parent=5 // pred_check_branch
      %499 = sbr.rel (%p497) target = $region56
    $region55: #{vit_forward.16} parent=5 // pred_region
      %s500 = ssub.s32 %s10, 2
    $region56: #{vit_forward.16} parent=5 // pred_fallthru
      _
  $region6: #{vit_forward.16} parent=0 // loop_footer
    %s14 = sadd.s32 1, %s10
  $region7: #{vit_forward.16} parent=0 // loop_footer_branch
    %9 = sbr.rel target = $region3
  $region8: #{vit_forward.16} parent=0 // loop_exit
    _

// kernel: vit_forward.18
$region0: #{vit_forward.18}
  #allocation0 [shape = 'u32[]', space=smem, size = 0x4, offset = 0x4, fixed_abs, tag = 'smem constant byte address 0x4 - core index']
  #allocation1 [shape = 'u32[144,128]{1,0:T(1,128)}', space=vmem, size = 0x12000, scoped, tag = 'internal scratch']
  %s0 = inlined_call_operand.vmem [shape: bf16[32,256], index: 0, kind: input, shape index: {}]
  %s1 = inlined_call_operand.vmem [shape: bf16[256,64], index: 1, kind: input, shape index: {}]
  %s2 = inlined_call_operand.vmem [shape: f32[1,64], index: 2, kind: input, shape index: {}]
  %s3 = inlined_call_operand.vmem [shape: bf16[32,64], index: 3, kind: input, shape index: {}]
  %s4 = inlined_call_operand.vmem [shape: bf16[32,64], index: 4, kind: output, shape index: {}]
  %s5 = sld [smem:[#allocation0]]
  $region26: #{vit_forward.18} parent=0
    _
  %s7 = ssub.s32 1, %s5
  %s8 = scalar_select 0, %s7, %s5
  // Predicated region
  $region2: #{vit_forward.18} parent=0 // pred_check
    _
  $region3: #{vit_forward.18} parent=0 // pred_check_branch
    %10 = sbr.rel (0) target = $region5
  $region4: #{vit_forward.18} parent=0 // pred_region
    _
  $region5: #{vit_forward.18} parent=0 // pred_fallthru
    _
  // Predicated region
  $region6: #{vit_forward.18} parent=0 // pred_check
    _
  $region7: #{vit_forward.18} parent=0 // pred_check_branch
    %12 = sbr.rel (0) target = $region9
  $region8: #{vit_forward.18} parent=0 // pred_region
    _
  $region9: #{vit_forward.18} parent=0 // pred_fallthru
    _
  // Predicated region
  $region10: #{vit_forward.18} parent=0 // pred_check
    _
  $region11: #{vit_forward.18} parent=0 // pred_check_branch
    %14 = sbr.rel (0) target = $region13
  $region12: #{vit_forward.18} parent=0 // pred_region
    _
  $region13: #{vit_forward.18} parent=0 // pred_fallthru
    _
  // Predicated region
  $region14: #{vit_forward.18} parent=0 // pred_check
    _
  $region15: #{vit_forward.18} parent=0 // pred_check_branch
    %16 = sbr.rel (0) target = $region17
  $region16: #{vit_forward.18} parent=0 // pred_region
    _
  $region17: #{vit_forward.18} parent=0 // pred_fallthru
    _
  %v18 = vld [vmem:[%s0] sm:$0xff]
  %v19 = vld [vmem:[%s0 + $0x8] sm:$0xff]
  %v20 = vld [vmem:[%s0 + $0x10] sm:$0xff]
  %v21 = vld [vmem:[%s0 + $0x18] sm:$0xff]
  %v22 = vld [vmem:[%s1] sm:$0xf]
  %v23 = vld [vmem:[%s1 + $0x4] sm:$0xf]
  %v24 = vld [vmem:[%s1 + $0x8] sm:$0xf]
  %v25 = vld [vmem:[%s1 + $0xc] sm:$0xf]
  %v26 = vld [vmem:[%s1 + $0x10] sm:$0xf]
  %v27 = vld [vmem:[%s1 + $0x14] sm:$0xf]
  %v28 = vld [vmem:[%s1 + $0x18] sm:$0xf]
  %v29 = vld [vmem:[%s1 + $0x1c] sm:$0xf]
  %v30 = vld [vmem:[%s1 + $0x20] sm:$0xf]
  %v31 = vld [vmem:[%s1 + $0x24] sm:$0xf]
  %v32 = vld [vmem:[%s1 + $0x28] sm:$0xf]
  %v33 = vld [vmem:[%s1 + $0x2c] sm:$0xf]
  %v34 = vld [vmem:[%s1 + $0x30] sm:$0xf]
  %v35 = vld [vmem:[%s1 + $0x34] sm:$0xf]
  %v36 = vld [vmem:[%s1 + $0x38] sm:$0xf]
  %v37 = vld [vmem:[%s1 + $0x3c] sm:$0xf]
  %v38 = vld [vmem:[%s1 + $0x40] sm:$0xf]
  %v39 = vld [vmem:[%s1 + $0x44] sm:$0xf]
  %v40 = vld [vmem:[%s1 + $0x48] sm:$0xf]
  %v41 = vld [vmem:[%s1 + $0x4c] sm:$0xf]
  %v42 = vld [vmem:[%s1 + $0x50] sm:$0xf]
  %v43 = vld [vmem:[%s1 + $0x54] sm:$0xf]
  %v44 = vld [vmem:[%s1 + $0x58] sm:$0xf]
  %v45 = vld [vmem:[%s1 + $0x5c] sm:$0xf]
  %v46 = vld [vmem:[%s1 + $0x60] sm:$0xf]
  %v47 = vld [vmem:[%s1 + $0x64] sm:$0xf]
  %v48 = vld [vmem:[%s1 + $0x68] sm:$0xf]
  %v49 = vld [vmem:[%s1 + $0x6c] sm:$0xf]
  %v50 = vld [vmem:[%s1 + $0x70] sm:$0xf]
  %v51 = vld [vmem:[%s1 + $0x74] sm:$0xf]
  %v52 = vld [vmem:[%s1 + $0x78] sm:$0xf]
  %v53 = vld [vmem:[%s1 + $0x7c] sm:$0xf]
  %v54 = vld [vmem:[%s2] sm:$0x1]
  %v56 = vlaneseq
  %v57 = vshrl.u32 %v56, 7
  %v58 = vsub.s32 0, %v57
  %v59 = vrot.slane %v54, %v58
  %v65 = vunpack.c.l.b16 %v18
  %v66 = vunpack.c.h.b16 %v18
  %v67 = vunpack.c.l.b16 %v19
  %v68 = vunpack.c.h.b16 %v19
  %v69 = vunpack.c.l.b16 %v20
  %v70 = vunpack.c.h.b16 %v20
  %v71 = vunpack.c.l.b16 %v21
  %v72 = vunpack.c.h.b16 %v21
  %v73 = vpack.c.b16 %v67, %v65
  %v74 = vpack.c.b16 %v68, %v66
  %v75 = vpack.c.b16 %v71, %v69
  %v76 = vpack.c.b16 %v72, %v70
  %v113 = vunpack.c.l.b16 %v22
  %v114 = vunpack.c.l.b16 %v23
  %v115 = vunpack.c.l.b16 %v24
  %v116 = vunpack.c.l.b16 %v25
  %v117 = vunpack.c.l.b16 %v26
  %v118 = vunpack.c.l.b16 %v27
  %v119 = vunpack.c.l.b16 %v28
  %v120 = vunpack.c.l.b16 %v29
  %v121 = vunpack.c.l.b16 %v30
  %v122 = vunpack.c.l.b16 %v31
  %v123 = vunpack.c.l.b16 %v32
  %v124 = vunpack.c.l.b16 %v33
  %v125 = vunpack.c.l.b16 %v34
  %v126 = vunpack.c.l.b16 %v35
  %v127 = vunpack.c.l.b16 %v36
  %v128 = vunpack.c.l.b16 %v37
  %v129 = vunpack.c.l.b16 %v38
  %v130 = vunpack.c.l.b16 %v39
  %v131 = vunpack.c.l.b16 %v40
  %v132 = vunpack.c.l.b16 %v41
  %v133 = vunpack.c.l.b16 %v42
  %v134 = vunpack.c.l.b16 %v43
  %v135 = vunpack.c.l.b16 %v44
  %v136 = vunpack.c.l.b16 %v45
  %v137 = vunpack.c.l.b16 %v46
  %v138 = vunpack.c.l.b16 %v47
  %v139 = vunpack.c.l.b16 %v48
  %v140 = vunpack.c.l.b16 %v49
  %v141 = vunpack.c.l.b16 %v50
  %v142 = vunpack.c.l.b16 %v51
  %v143 = vunpack.c.l.b16 %v52
  %v144 = vunpack.c.l.b16 %v53
  %v145 = vpack.c.b16 %v114, %v113
  %v146 = vpack.c.b16 %v116, %v115
  %v147 = vpack.c.b16 %v118, %v117
  %v148 = vpack.c.b16 %v120, %v119
  %v149 = vpack.c.b16 %v122, %v121
  %v150 = vpack.c.b16 %v124, %v123
  %v151 = vpack.c.b16 %v126, %v125
  %v152 = vpack.c.b16 %v128, %v127
  %v153 = vpack.c.b16 %v130, %v129
  %v154 = vpack.c.b16 %v132, %v131
  %v155 = vpack.c.b16 %v134, %v133
  %v156 = vpack.c.b16 %v136, %v135
  %v157 = vpack.c.b16 %v138, %v137
  %v158 = vpack.c.b16 %v140, %v139
  %v159 = vpack.c.b16 %v142, %v141
  %v160 = vpack.c.b16 %v144, %v143
  %177 = vmatprep.subr.bf16.mxu0 0
  %178 = vmatpush1.bf16.msra.mxu0 %v145
  %179 = vmatprep.subr.bf16.mxu0 0
  %180 = vmatpush1.bf16.msra.mxu0 %v146
  %181 = vmatprep.subr.bf16.mxu0 0
  %182 = vmatpush1.bf16.msra.mxu0 %v147
  %183 = vmatprep.subr.bf16.mxu0 0
  %184 = vmatpush1.bf16.msra.mxu0 %v148
  %185 = vmatprep.subr.bf16.mxu0 0
  %186 = vmatpush1.bf16.msra.mxu0 %v149
  %187 = vmatprep.subr.bf16.mxu0 0
  %188 = vmatpush1.bf16.msra.mxu0 %v150
  %189 = vmatprep.subr.bf16.mxu0 0
  %190 = vmatpush1.bf16.msra.mxu0 %v151
  %191 = vmatprep.subr.bf16.mxu0 0
  %192 = vmatpush1.bf16.msra.mxu0 %v152
  %193 = vmatprep.subr.bf16.mxu0 0
  %194 = vmatpush1.bf16.msra.mxu0 %v153
  %195 = vmatprep.subr.bf16.mxu0 0
  %196 = vmatpush1.bf16.msra.mxu0 %v154
  %197 = vmatprep.subr.bf16.mxu0 0
  %198 = vmatpush1.bf16.msra.mxu0 %v155
  %199 = vmatprep.subr.bf16.mxu0 0
  %200 = vmatpush1.bf16.msra.mxu0 %v156
  %201 = vmatprep.subr.bf16.mxu0 0
  %202 = vmatpush1.bf16.msra.mxu0 %v157
  %203 = vmatprep.subr.bf16.mxu0 0
  %204 = vmatpush1.bf16.msra.mxu0 %v158
  %205 = vmatprep.subr.bf16.mxu0 0
  %206 = vmatpush1.bf16.msra.mxu0 %v159
  %207 = vmatprep.subr.bf16.mxu0 0
  %208 = vmatpush1.bf16.msra.mxu0 %v160
  %209 = vmatprep.mubr.bf16.mxu0 %v74
  %210 = vmatmul.mubr.bf16.gmra.mrb[0].mxu0 %v73
  %v211 = vpop.f32.mrb[0].mxu0
  %v212 = vadd.f32 %v59, %v211
  %v213 = vpop.f32.mrb[0].mxu0
  %v214 = vpop.f32.mrb[0].mxu0
  %v215 = vadd.f32 %v59, %v214
  %v216 = vpop.f32.mrb[0].mxu0
  %217 = vmatprep.mubr.bf16.mxu0 %v76
  %218 = vmatmul.mubr.bf16.gmra.mrb[0].mxu0 %v75
  %v219 = vpop.f32.mrb[0].mxu0
  %v220 = vadd.f32 %v59, %v219
  %v221 = vpop.f32.mrb[0].mxu0
  %v222 = vpop.f32.mrb[0].mxu0
  %v223 = vadd.f32 %v59, %v222
  %v224 = vpop.f32.mrb[0].mxu0
  %225 = vdwg.mxu0
  %v226 = vld [vmem:[%s3] sm:$0xf]
  %v227 = vld [vmem:[%s3 + $0x4] sm:$0xf]
  %v228 = vld [vmem:[%s3 + $0x8] sm:$0xf]
  %v229 = vld [vmem:[%s3 + $0xc] sm:$0xf]
  %v230 = vunpack.c.l.bf16 %v226
  %v231 = vunpack.c.l.bf16 %v227
  %v232 = vunpack.c.l.bf16 %v228
  %v233 = vunpack.c.l.bf16 %v229
  %v234 = vadd.f32 %v212, %v230
  %v235 = vadd.f32 %v215, %v231
  %v236 = vadd.f32 %v220, %v232
  %v237 = vadd.f32 %v223, %v233
  %v238 = vpack.c.bf16 %v235, %v234
  %v239 = vpack.c.bf16 %v237, %v236
  %v242 = vunpack.c.l.b16 %v238
  %v243 = vunpack.c.h.b16 %v238
  %v244 = vunpack.c.l.b16 %v239
  %v245 = vunpack.c.h.b16 %v239
  %v246 = vpack.c.b16 %v242, %v242
  %v247 = vpack.c.b16 %v243, %v243
  %v248 = vpack.c.b16 %v244, %v244
  %v249 = vpack.c.b16 %v245, %v245
  %vm254 = vcmask 519168
  %255 = vst.msk [vmem:[%s4] sm:$0xf] %vm254, %v246
  %256 = vst.msk [vmem:[%s4 + $0x4] sm:$0xf] %vm254, %v247
  %257 = vst.msk [vmem:[%s4 + $0x8] sm:$0xf] %vm254, %v248
  %258 = vst.msk [vmem:[%s4 + $0xc] sm:$0xf] %vm254, %v249
  // Predicated region
  $region18: #{vit_forward.18} parent=0 // pred_check
    _
  $region19: #{vit_forward.18} parent=0 // pred_check_branch
    %260 = sbr.rel (0) target = $region21
  $region20: #{vit_forward.18} parent=0 // pred_region
    _
  $region21: #{vit_forward.18} parent=0 // pred_fallthru
    _
  // Predicated region
  $region22: #{vit_forward.18} parent=0 // pred_check
    _
  $region23: #{vit_forward.18} parent=0 // pred_check_branch
    %262 = sbr.rel (0) target = $region25
  $region24: #{vit_forward.18} parent=0 // pred_region
    _
  $region25: #{vit_forward.18} parent=0 // pred_fallthru
    _

// kernel: vit_forward.17
$region0: #{vit_forward.17}
  #allocation0 [shape = 'u32[]', space=smem, size = 0x4, offset = 0x4, fixed_abs, tag = 'smem constant byte address 0x4 - core index']
  #allocation1 [shape = 'u32[144,128]{1,0:T(1,128)}', space=vmem, size = 0x12000, scoped, tag = 'internal scratch']
  %s0 = inlined_call_operand.vmem [shape: bf16[32,64], index: 0, kind: input, shape index: {}]
  %s1 = inlined_call_operand.vmem [shape: bf16[64,256], index: 1, kind: input, shape index: {}]
  %s2 = inlined_call_operand.vmem [shape: f32[1,256], index: 2, kind: input, shape index: {}]
  %s3 = inlined_call_operand.vmem [shape: f32[1,64], index: 3, kind: input, shape index: {}]
  %s4 = inlined_call_operand.vmem [shape: f32[1,64], index: 4, kind: input, shape index: {}]
  %s5 = inlined_call_operand.vmem [shape: bf16[32,256], index: 5, kind: output, shape index: {}]
  %s6 = sld [smem:[#allocation0]]
  $region30: #{vit_forward.17} parent=0
    _
  %s8 = ssub.s32 1, %s6
  %s9 = scalar_select 0, %s8, %s6
  // Predicated region
  $region2: #{vit_forward.17} parent=0 // pred_check
    _
  $region3: #{vit_forward.17} parent=0 // pred_check_branch
    %11 = sbr.rel (0) target = $region5
  $region4: #{vit_forward.17} parent=0 // pred_region
    _
  $region5: #{vit_forward.17} parent=0 // pred_fallthru
    _
  // Predicated region
  $region6: #{vit_forward.17} parent=0 // pred_check
    _
  $region7: #{vit_forward.17} parent=0 // pred_check_branch
    %13 = sbr.rel (0) target = $region9
  $region8: #{vit_forward.17} parent=0 // pred_region
    _
  $region9: #{vit_forward.17} parent=0 // pred_fallthru
    _
  // Predicated region
  $region10: #{vit_forward.17} parent=0 // pred_check
    _
  $region11: #{vit_forward.17} parent=0 // pred_check_branch
    %15 = sbr.rel (0) target = $region13
  $region12: #{vit_forward.17} parent=0 // pred_region
    _
  $region13: #{vit_forward.17} parent=0 // pred_fallthru
    _
  // Predicated region
  $region14: #{vit_forward.17} parent=0 // pred_check
    _
  $region15: #{vit_forward.17} parent=0 // pred_check_branch
    %17 = sbr.rel (0) target = $region17
  $region16: #{vit_forward.17} parent=0 // pred_region
    _
  $region17: #{vit_forward.17} parent=0 // pred_fallthru
    _
  // Predicated region
  $region18: #{vit_forward.17} parent=0 // pred_check
    _
  $region19: #{vit_forward.17} parent=0 // pred_check_branch
    %19 = sbr.rel (0) target = $region21
  $region20: #{vit_forward.17} parent=0 // pred_region
    _
  $region21: #{vit_forward.17} parent=0 // pred_fallthru
    _
  %v21 = vld [vmem:[%s0] sm:$0xf]
  %v22 = vld [vmem:[%s0 + $0x4] sm:$0xf]
  %v23 = vld [vmem:[%s0 + $0x8] sm:$0xf]
  %v24 = vld [vmem:[%s0 + $0xc] sm:$0xf]
  %v25 = vunpack.c.l.bf16 %v21
  %v26 = vunpack.c.l.bf16 %v22
  %v27 = vunpack.c.l.bf16 %v23
  %v28 = vunpack.c.l.bf16 %v24
  %vm29 = vcmask 523264
  %v30 = vsel %vm29, %v25, 0.0
  %31 = vadd.xlane.f32.xlu0 %v30
  %v32 = vpop.xlane.xlu0 %31
  %v33 = vsel %vm29, %v26, 0.0
  %34 = vadd.xlane.f32.xlu0 %v33
  %v35 = vpop.xlane.xlu0 %34
  %v36 = vsel %vm29, %v27, 0.0
  %37 = vadd.xlane.f32.xlu0 %v36
  %v38 = vpop.xlane.xlu0 %37
  %v39 = vsel %vm29, %v28, 0.0
  %40 = vadd.xlane.f32.xlu0 %v39
  %v41 = vpop.xlane.xlu0 %40
  %v42 = vrcp.pop 64.0
  %v43 = vmul.f32 %v32, %v42
  %v44 = vmul.f32 %v35, %v42
  %v45 = vmul.f32 %v38, %v42
  %v46 = vmul.f32 %v41, %v42
  %v47 = vsub.f32 %v25, %v43
  %v48 = vsub.f32 %v26, %v44
  %v49 = vsub.f32 %v27, %v45
  %v50 = vsub.f32 %v28, %v46
  %v51 = vmul.f32 %v47, %v47
  %v52 = vmul.f32 %v48, %v48
  %v53 = vmul.f32 %v49, %v49
  %v54 = vmul.f32 %v50, %v50
  %v55 = vsel %vm29, %v51, 0.0
  %56 = vadd.xlane.f32.xlu0 %v55
  %v57 = vpop.xlane.xlu0 %56
  %v58 = vsel %vm29, %v52, 0.0
  %59 = vadd.xlane.f32.xlu0 %v58
  %v60 = vpop.xlane.xlu0 %59
  %v61 = vsel %vm29, %v53, 0.0
  %62 = vadd.xlane.f32.xlu0 %v61
  %v63 = vpop.xlane.xlu0 %62
  %v64 = vsel %vm29, %v54, 0.0
  %65 = vadd.xlane.f32.xlu0 %v64
  %v66 = vpop.xlane.xlu0 %65
  %v67 = vmul.f32 %v57, %v42
  %v68 = vmul.f32 %v60, %v42
  %v69 = vmul.f32 %v63, %v42
  %v70 = vmul.f32 %v66, %v42
  %v71 = vadd.f32 %v67, 1e-06
  %v72 = vadd.f32 %v68, 1e-06
  %v73 = vadd.f32 %v69, 1e-06
  %v74 = vadd.f32 %v70, 1e-06
  %v75 = vrsqrt.pop %v71
  %v76 = vrsqrt.pop %v72
  %v77 = vrsqrt.pop %v73
  %v78 = vrsqrt.pop %v74
  %v79 = vmul.f32 %v47, %v75
  %v80 = vmul.f32 %v48, %v76
  %v81 = vmul.f32 %v49, %v77
  %v82 = vmul.f32 %v50, %v78
  %v83 = vld [vmem:[%s3] sm:$0x1]
  %v85 = vlaneseq
  %v86 = vshrl.u32 %v85, 7
  %v87 = vsub.s32 0, %v86
  %v88 = vrot.slane %v83, %v87
  %v90 = vmul.f32 %v79, %v88
  %v91 = vmul.f32 %v80, %v88
  %v92 = vmul.f32 %v81, %v88
  %v93 = vmul.f32 %v82, %v88
  %v94 = vld [vmem:[%s4] sm:$0x1]
  %v96 = vlaneseq
  %v97 = vshrl.u32 %v96, 7
  %v98 = vsub.s32 0, %v97
  %v99 = vrot.slane %v94, %v98
  %v101 = vadd.f32 %v90, %v99
  %v102 = vadd.f32 %v91, %v99
  %v103 = vadd.f32 %v92, %v99
  %v104 = vadd.f32 %v93, %v99
  %v105 = vpack.c.bf16 %v102, %v101
  %v106 = vpack.c.bf16 %v104, %v103
  %v107 = vld [vmem:[%s1] sm:$0xff]
  %v108 = vld [vmem:[%s1 + $0x8] sm:$0xff]
  %v109 = vld [vmem:[%s1 + $0x10] sm:$0xff]
  %v110 = vld [vmem:[%s1 + $0x18] sm:$0xff]
  %v111 = vld [vmem:[%s1 + $0x20] sm:$0xff]
  %v112 = vld [vmem:[%s1 + $0x28] sm:$0xff]
  %v113 = vld [vmem:[%s1 + $0x30] sm:$0xff]
  %v114 = vld [vmem:[%s1 + $0x38] sm:$0xff]
  %v115 = vld [vmem:[%s2] sm:$0x3]
  %v117 = vlaneseq
  %v118 = vshrl.u32 %v117, 7
  %v119 = vsub.s32 0, %v118
  %v120 = vrot.slane %v115, %v119
  %v121 = vlaneseq
  %v122 = vshrl.u32 %v121, 7
  %v123 = vsub.s32 1, %v122
  %v124 = vrot.slane %v115, %v123
  %v135 = vunpack.c.l.b16 %v107
  %v136 = vunpack.c.h.b16 %v107
  %v137 = vunpack.c.l.b16 %v108
  %v138 = vunpack.c.h.b16 %v108
  %v139 = vunpack.c.l.b16 %v109
  %v140 = vunpack.c.h.b16 %v109
  %v141 = vunpack.c.l.b16 %v110
  %v142 = vunpack.c.h.b16 %v110
  %v143 = vunpack.c.l.b16 %v111
  %v144 = vunpack.c.h.b16 %v111
  %v145 = vunpack.c.l.b16 %v112
  %v146 = vunpack.c.h.b16 %v112
  %v147 = vunpack.c.l.b16 %v113
  %v148 = vunpack.c.h.b16 %v113
  %v149 = vunpack.c.l.b16 %v114
  %v150 = vunpack.c.h.b16 %v114
  %v151 = vpack.c.b16 %v137, %v135
  %v152 = vpack.c.b16 %v138, %v136
  %v153 = vpack.c.b16 %v141, %v139
  %v154 = vpack.c.b16 %v142, %v140
  %v155 = vpack.c.b16 %v145, %v143
  %v156 = vpack.c.b16 %v146, %v144
  %v157 = vpack.c.b16 %v149, %v147
  %v158 = vpack.c.b16 %v150, %v148
  %v168 = vsel %vm29, %v105, 0
  %v171 = vsel %vm29, %v106, 0
  %173 = vmatprep.subr.bf16.mxu0 %v152
  %174 = vmatpush1.bf16.msra.mxu0 %v151
  %175 = vmatprep.subr.bf16.mxu0 %v154
  %176 = vmatpush1.bf16.msra.mxu0 %v153
  %177 = vmatprep.subr.bf16.mxu0 %v156
  %178 = vmatpush1.bf16.msra.mxu0 %v155
  %179 = vmatprep.subr.bf16.mxu0 %v158
  %180 = vmatpush1.bf16.msra.mxu0 %v157
  %181 = vmatprep.subr.bf16.mxu0 0
  %182 = vmatpush1.bf16.msra.mxu0 0
  %183 = vmatprep.subr.bf16.mxu0 0
  %184 = vmatpush1.bf16.msra.mxu0 0
  %185 = vmatprep.subr.bf16.mxu0 0
  %186 = vmatpush1.bf16.msra.mxu0 0
  %187 = vmatprep.subr.bf16.mxu0 0
  %188 = vmatpush1.bf16.msra.mxu0 0
  %189 = vmatprep.subr.bf16.mxu0 0
  %190 = vmatpush1.bf16.msra.mxu0 0
  %191 = vmatprep.subr.bf16.mxu0 0
  %192 = vmatpush1.bf16.msra.mxu0 0
  %193 = vmatprep.subr.bf16.mxu0 0
  %194 = vmatpush1.bf16.msra.mxu0 0
  %195 = vmatprep.subr.bf16.mxu0 0
  %196 = vmatpush1.bf16.msra.mxu0 0
  %197 = vmatprep.subr.bf16.mxu0 0
  %198 = vmatpush1.bf16.msra.mxu0 0
  %199 = vmatprep.subr.bf16.mxu0 0
  %200 = vmatpush1.bf16.msra.mxu0 0
  %201 = vmatprep.subr.bf16.mxu0 0
  %202 = vmatpush1.bf16.msra.mxu0 0
  %203 = vmatprep.subr.bf16.mxu0 0
  %204 = vmatpush1.bf16.msra.mxu0 0
  %205 = vmatprep.mubr.bf16.mxu0 0
  %206 = vmatmul.mubr.bf16.gmra.mrb[0].mxu0 %v168
  %v207 = vpop.f32.mrb[0].mxu0
  %v208 = vadd.f32 %v120, %v207
  %v209 = vpop.f32.mrb[0].mxu0
  %v210 = vadd.f32 %v124, %v209
  %v211 = vpop.f32.mrb[0].mxu0
  %v212 = vadd.f32 %v120, %v211
  %v213 = vpop.f32.mrb[0].mxu0
  %v214 = vadd.f32 %v124, %v213
  %215 = vmatprep.mubr.bf16.mxu0 0
  %216 = vmatmul.mubr.bf16.gmra.mrb[0].mxu0 %v171
  %v217 = vpop.f32.mrb[0].mxu0
  %v218 = vadd.f32 %v120, %v217
  %v219 = vpop.f32.mrb[0].mxu0
  %v220 = vadd.f32 %v124, %v219
  %v221 = vpop.f32.mrb[0].mxu0
  %v222 = vadd.f32 %v120, %v221
  %v223 = vpop.f32.mrb[0].mxu0
  %v224 = vadd.f32 %v124, %v223
  %225 = vdwg.mxu0
  %v226 = vmul.f32 %v208, 0.5
  %v227 = vmul.f32 %v210, 0.5
  %v228 = vmul.f32 %v212, 0.5
  %v229 = vmul.f32 %v214, 0.5
  %v230 = vmul.f32 %v218, 0.5
  %v231 = vmul.f32 %v220, 0.5
  %v232 = vmul.f32 %v222, 0.5
  %v233 = vmul.f32 %v224, 0.5
  %v234 = vmul.f32 %v208, 0.70710677
  %v235 = vmul.f32 %v210, 0.70710677
  %v236 = vmul.f32 %v212, 0.70710677
  %v237 = vmul.f32 %v214, 0.70710677
  %v238 = vmul.f32 %v218, 0.70710677
  %v239 = vmul.f32 %v220, 0.70710677
  %v240 = vmul.f32 %v222, 0.70710677
  %v241 = vmul.f32 %v224, 0.70710677
  %v242 = verf.f32.pop %v234
  %v243 = verf.f32.pop %v235
  %v244 = verf.f32.pop %v236
  %v245 = verf.f32.pop %v237
  %v246 = verf.f32.pop %v238
  %v247 = verf.f32.pop %v239
  %v248 = verf.f32.pop %v240
  %v249 = verf.f32.pop %v241
  %v250 = vadd.f32 %v242, 1.0
  %v251 = vadd.f32 %v243, 1.0
  %v252 = vadd.f32 %v244, 1.0
  %v253 = vadd.f32 %v245, 1.0
  %v254 = vadd.f32 %v246, 1.0
  %v255 = vadd.f32 %v247, 1.0
  %v256 = vadd.f32 %v248, 1.0
  %v257 = vadd.f32 %v249, 1.0
  %v258 = vmul.f32 %v226, %v250
  %v259 = vmul.f32 %v227, %v251
  %v260 = vmul.f32 %v228, %v252
  %v261 = vmul.f32 %v229, %v253
  %v262 = vmul.f32 %v230, %v254
  %v263 = vmul.f32 %v231, %v255
  %v264 = vmul.f32 %v232, %v256
  %v265 = vmul.f32 %v233, %v257
  %v266 = vpack.c.bf16 %v260, %v258
  %v267 = vpack.c.bf16 %v261, %v259
  %v268 = vpack.c.bf16 %v264, %v262
  %v269 = vpack.c.bf16 %v265, %v263
  %v274 = vunpack.c.l.b16 %v266
  %v275 = vunpack.c.l.b16 %v267
  %v276 = vunpack.c.h.b16 %v266
  %v277 = vunpack.c.h.b16 %v267
  %v278 = vunpack.c.l.b16 %v268
  %v279 = vunpack.c.l.b16 %v269
  %v280 = vunpack.c.h.b16 %v268
  %v281 = vunpack.c.h.b16 %v269
  %v282 = vpack.c.b16 %v275, %v274
  %v283 = vpack.c.b16 %v277, %v276
  %v284 = vpack.c.b16 %v279, %v278
  %v285 = vpack.c.b16 %v281, %v280
  %290 = vst [vmem:[%s5] sm:$0xff] %v282
  %291 = vst [vmem:[%s5 + $0x8] sm:$0xff] %v283
  %292 = vst [vmem:[%s5 + $0x10] sm:$0xff] %v284
  %293 = vst [vmem:[%s5 + $0x18] sm:$0xff] %v285
  // Predicated region
  $region22: #{vit_forward.17} parent=0 // pred_check
    _
  $region23: #{vit_forward.17} parent=0 // pred_check_branch
    %295 = sbr.rel (0) target = $region25
  $region24: #{vit_forward.17} parent=0 // pred_region
    _
  $region25: #{vit_forward.17} parent=0 // pred_fallthru
    _
  // Predicated region
  $region26: #{vit_forward.17} parent=0 // pred_check
    _
  $region27: #{vit_forward.17} parent=0 // pred_check_branch
    %297 = sbr.rel (0) target = $region29
  $region28: #{vit_forward.17} parent=0 // pred_region
    _
  $region29: #{vit_forward.17} parent=0 // pred_fallthru
    _

// kernel: vit_forward.24
$region0: #{vit_forward.24}
  #allocation0 [shape = 'u32[]', space=smem, size = 0x4, offset = 0x4, fixed_abs, tag = 'smem constant byte address 0x4 - core index']
  #allocation1 [shape = 'u32[144,128]{1,0:T(1,128)}', space=vmem, size = 0x12000, scoped, tag = 'internal scratch']
  %s0 = inlined_call_operand.vmem [shape: bf16[2,64], index: 0, kind: input, shape index: {}]
  %s1 = inlined_call_operand.vmem [shape: f32[1,64], index: 1, kind: input, shape index: {}]
  %s2 = inlined_call_operand.vmem [shape: f32[1,64], index: 2, kind: input, shape index: {}]
  %s3 = inlined_call_operand.vmem [shape: f32[2,64], index: 3, kind: output, shape index: {}]
  %s4 = sld [smem:[#allocation0]]
  $region22: #{vit_forward.24} parent=0
    _
  %s6 = ssub.s32 1, %s4
  %s7 = scalar_select 0, %s6, %s4
  // Predicated region
  $region2: #{vit_forward.24} parent=0 // pred_check
    _
  $region3: #{vit_forward.24} parent=0 // pred_check_branch
    %9 = sbr.rel (0) target = $region5
  $region4: #{vit_forward.24} parent=0 // pred_region
    _
  $region5: #{vit_forward.24} parent=0 // pred_fallthru
    _
  // Predicated region
  $region6: #{vit_forward.24} parent=0 // pred_check
    _
  $region7: #{vit_forward.24} parent=0 // pred_check_branch
    %11 = sbr.rel (0) target = $region9
  $region8: #{vit_forward.24} parent=0 // pred_region
    _
  $region9: #{vit_forward.24} parent=0 // pred_fallthru
    _
  // Predicated region
  $region10: #{vit_forward.24} parent=0 // pred_check
    _
  $region11: #{vit_forward.24} parent=0 // pred_check_branch
    %13 = sbr.rel (0) target = $region13
  $region12: #{vit_forward.24} parent=0 // pred_region
    _
  $region13: #{vit_forward.24} parent=0 // pred_fallthru
    _
  %v14 = vld [vmem:[%s0] sm:$0x1]
  %v15 = vunpack.c.l.bf16 %v14
  %vm16 = vcmask 517120
  %v17 = vsel %vm16, %v15, 0.0
  %18 = vadd.xlane.f32.xlu0 %v17
  %v19 = vpop.xlane.xlu0 %18
  %v20 = vrcp.pop 64.0
  %v21 = vmul.f32 %v19, %v20
  %v22 = vsub.f32 %v15, %v21
  %v23 = vmul.f32 %v22, %v22
  %v24 = vsel %vm16, %v23, 0.0
  %25 = vadd.xlane.f32.xlu0 %v24
  %v26 = vpop.xlane.xlu0 %25
  %v27 = vmul.f32 %v26, %v20
  %v28 = vadd.f32 %v27, 1e-06
  %v29 = vrsqrt.pop %v28
  %v30 = vmul.f32 %v22, %v29
  %v31 = vld [vmem:[%s1] sm:$0x1]
  %v33 = vlaneseq
  %v34 = vshrl.u32 %v33, 7
  %v35 = vsub.s32 0, %v34
  %v36 = vrot.slane %v31, %v35
  %v38 = vmul.f32 %v30, %v36
  %v39 = vld [vmem:[%s2] sm:$0x1]
  %v41 = vlaneseq
  %v42 = vshrl.u32 %v41, 7
  %v43 = vsub.s32 0, %v42
  %v44 = vrot.slane %v39, %v43
  %v46 = vadd.f32 %v38, %v44
  %47 = vst.msk [vmem:[%s3] sm:$0x3] %vm16, %v46
  // Predicated region
  $region14: #{vit_forward.24} parent=0 // pred_check
    _
  $region15: #{vit_forward.24} parent=0 // pred_check_branch
    %49 = sbr.rel (0) target = $region17
  $region16: #{vit_forward.24} parent=0 // pred_region
    _
  $region17: #{vit_forward.24} parent=0 // pred_fallthru
    _
  // Predicated region
  $region18: #{vit_forward.24} parent=0 // pred_check
    _
  $region19: #{vit_forward.24} parent=0 // pred_check_branch
    %51 = sbr.rel (0) target = $region21
  $region20: #{vit_forward.24} parent=0 // pred_region
    _
  $region21: #{vit_forward.24} parent=0 // pred_fallthru
    _

// kernel: vit_forward.25
$region0: #{vit_forward.25}
  #allocation0 [shape = 'u32[]', space=smem, size = 0x4, offset = 0x4, fixed_abs, tag = 'smem constant byte address 0x4 - core index']
  #allocation1 [shape = 'u32[144,128]{1,0:T(1,128)}', space=vmem, size = 0x12000, scoped, tag = 'internal scratch']
  %s0 = inlined_call_operand.vmem [shape: bf16[2,64], index: 0, kind: input, shape index: {}]
  %s1 = inlined_call_operand.vmem [shape: bf16[64,128], index: 1, kind: input, shape index: {}]
  %s2 = inlined_call_operand.vmem [shape: f32[1,128], index: 2, kind: input, shape index: {}]
  %s3 = inlined_call_operand.hbm [shape: f32[2,128], index: 3, kind: output, shape index: {}]
  %s4 = sld [smem:[#allocation0]]
  $region22: #{vit_forward.25} parent=0
    _
  %s6 = ssub.s32 1, %s4
  %s7 = scalar_select 0, %s6, %s4
  $region1: #{vit_forward.25} parent=0
    #allocation2 [shape = 'u8[1024]{0}', space=vmem, size = 0x400, scoped, tag = 'output window, operand 0, single buffered']
    #allocation3 [shape = 's32[1]{0}', space=sflag, size = 0x4, scoped, tag = 'scoped memory for vit_forward.25']
    %8 = vsyncpa [#allocation3], 0
    // Predicated region
    $region2: #{vit_forward.25} parent=1 // pred_check
      _
    $region3: #{vit_forward.25} parent=1 // pred_check_branch
      %10 = sbr.rel (0) target = $region5
    $region4: #{vit_forward.25} parent=1 // pred_region
      _
    $region5: #{vit_forward.25} parent=1 // pred_fallthru
      _
    // Predicated region
    $region6: #{vit_forward.25} parent=1 // pred_check
      _
    $region7: #{vit_forward.25} parent=1 // pred_check_branch
      %12 = sbr.rel (0) target = $region9
    $region8: #{vit_forward.25} parent=1 // pred_region
      _
    $region9: #{vit_forward.25} parent=1 // pred_fallthru
      _
    // Predicated region
    $region10: #{vit_forward.25} parent=1 // pred_check
      _
    $region11: #{vit_forward.25} parent=1 // pred_check_branch
      %14 = sbr.rel (0) target = $region13
    $region12: #{vit_forward.25} parent=1 // pred_region
      _
    $region13: #{vit_forward.25} parent=1 // pred_fallthru
      _
    %v16 = vld [vmem:[%s0] sm:$0x1]
    %v17 = vld [vmem:[%s1] sm:$0xf]
    %v18 = vld [vmem:[%s1 + $0x4] sm:$0xf]
    %v19 = vld [vmem:[%s1 + $0x8] sm:$0xf]
    %v20 = vld [vmem:[%s1 + $0xc] sm:$0xf]
    %v21 = vld [vmem:[%s1 + $0x10] sm:$0xf]
    %v22 = vld [vmem:[%s1 + $0x14] sm:$0xf]
    %v23 = vld [vmem:[%s1 + $0x18] sm:$0xf]
    %v24 = vld [vmem:[%s1 + $0x1c] sm:$0xf]
    %v25 = vld [vmem:[%s2] sm:$0x1]
    %v27 = vlaneseq
    %v28 = vshrl.u32 %v27, 7
    %v29 = vsub.s32 0, %v28
    %v30 = vrot.slane %v25, %v29
    %v40 = vunpack.c.l.b16 %v17
    %v41 = vunpack.c.l.b16 %v18
    %v42 = vunpack.c.l.b16 %v19
    %v43 = vunpack.c.l.b16 %v20
    %v44 = vunpack.c.l.b16 %v21
    %v45 = vunpack.c.l.b16 %v22
    %v46 = vunpack.c.l.b16 %v23
    %v47 = vunpack.c.l.b16 %v24
    %v48 = vpack.c.b16 %v41, %v40
    %v49 = vpack.c.b16 %v43, %v42
    %v50 = vpack.c.b16 %v45, %v44
    %v51 = vpack.c.b16 %v47, %v46
    %vm56 = vcmask 523264
    %v58 = vsel %vm56, %v16, 0
    %60 = vmatprep.subr.bf16.mxu0 0
    %61 = vmatpush1.bf16.msra.mxu0 %v48
    %62 = vmatprep.subr.bf16.mxu0 0
    %63 = vmatpush1.bf16.msra.mxu0 %v49
    %64 = vmatprep.subr.bf16.mxu0 0
    %65 = vmatpush1.bf16.msra.mxu0 %v50
    %66 = vmatprep.subr.bf16.mxu0 0
    %67 = vmatpush1.bf16.msra.mxu0 %v51
    %68 = vmatprep.subr.bf16.mxu0 0
    %69 = vmatpush1.bf16.msra.mxu0 0
    %70 = vmatprep.subr.bf16.mxu0 0
    %71 = vmatpush1.bf16.msra.mxu0 0
    %72 = vmatprep.subr.bf16.mxu0 0
    %73 = vmatpush1.bf16.msra.mxu0 0
    %74 = vmatprep.subr.bf16.mxu0 0
    %75 = vmatpush1.bf16.msra.mxu0 0
    %76 = vmatprep.subr.bf16.mxu0 0
    %77 = vmatpush1.bf16.msra.mxu0 0
    %78 = vmatprep.subr.bf16.mxu0 0
    %79 = vmatpush1.bf16.msra.mxu0 0
    %80 = vmatprep.subr.bf16.mxu0 0
    %81 = vmatpush1.bf16.msra.mxu0 0
    %82 = vmatprep.subr.bf16.mxu0 0
    %83 = vmatpush1.bf16.msra.mxu0 0
    %84 = vmatprep.subr.bf16.mxu0 0
    %85 = vmatpush1.bf16.msra.mxu0 0
    %86 = vmatprep.subr.bf16.mxu0 0
    %87 = vmatpush1.bf16.msra.mxu0 0
    %88 = vmatprep.subr.bf16.mxu0 0
    %89 = vmatpush1.bf16.msra.mxu0 0
    %90 = vmatprep.subr.bf16.mxu0 0
    %91 = vmatpush1.bf16.msra.mxu0 0
    %92 = vmatprep.mubr.bf16.mxu0 0
    %93 = vmatmul.mubr.bf16.gmra.mrb[0].mxu0 %v58
    %v94 = vpop.f32.mrb[0].mxu0
    %v95 = vadd.f32 %v30, %v94
    %v96 = vpop.f32.mrb[0].mxu0
    %v97 = vpop.f32.mrb[0].mxu0
    %v98 = vpop.f32.mrb[0].mxu0
    %99 = vdwg.mxu0
    %100 = vst [vmem:[#allocation2] sm:$0x3] %v95
    // Predicated region
    $region14: #{vit_forward.25} parent=1 // pred_check
      _
    $region15: #{vit_forward.25} parent=1 // pred_check_branch
      %102 = sbr.rel (0) target = $region17
    $region16: #{vit_forward.25} parent=1 // pred_region
      %s104 = ssub.s32 32, 32
      %105 = vsyncadd [#allocation3], %s104
      %s107 = sshll.u32 [#allocation2], 4
      %s108 = int_to_ptr.vmem [resolvable:$true] %s107
      %110 = dma.vmem_to_hbm [thread:$0]  %s108, 32, %s3, [#allocation3]
    $region17: #{vit_forward.25} parent=1 // pred_fallthru
      _
    // Predicated region
    $region18: #{vit_forward.25} parent=1 // pred_check
      _
    $region19: #{vit_forward.25} parent=1 // pred_check_branch
      %112 = sbr.rel (0) target = $region21
    $region20: #{vit_forward.25} parent=1 // pred_region
      %113 = dma.done [#allocation3], 32
    $region21: #{vit_forward.25} parent=1 // pred_fallthru
      _
    %114 = vsyncpa [#allocation3], 1

</llo_original>
